<compile_context>
chip_gen: v6e
topology: v6e:2x2x1
jax: 0.10.0
libtpu: 0.0.40
codegen_flags: <defaults>
</compile_context>

<pallas_src>
import functools
import math

import jax
import jax.numpy as jnp
from jax.experimental import pallas as pl
from jax.experimental.pallas import tpu as pltpu


# ----------------------------- Pallas kernels -------------------------------

def _linear_kernel(x_ref, w_ref, b_ref, o_ref):
    """Generic [tm, K] x [K, N] + bias. Operands cast to bf16, f32 accumulate."""
    y = jnp.dot(x_ref[...].astype(jnp.bfloat16), w_ref[...],
                preferred_element_type=jnp.float32) + b_ref[...]
    o_ref[...] = y.astype(o_ref.dtype)


def linear_rows(x, w_bf16, b, tm=256):
    """x: [M, K] f32, w: [K, N] bf16, b: [N] f32 -> [M, N] f32, row-tiled grid.
    TODO(synk): at the real config (K=2048 vis_proj) add a K grid axis with a
    VMEM accumulator; at this small scale K fits a single block."""
    M, K = x.shape
    N = w_bf16.shape[1]
    tm = M if M < tm else tm
    return pl.pallas_call(
        _linear_kernel,
        grid=(pl.cdiv(M, tm),),
        in_specs=[
            pl.BlockSpec((tm, K), lambda i: (i, 0)),
            pl.BlockSpec((K, N), lambda i: (0, 0)),
            pl.BlockSpec((1, N), lambda i: (0, 0)),
        ],
        out_specs=pl.BlockSpec((tm, N), lambda i: (i, 0)),
        out_shape=jax.ShapeDtypeStruct((M, N), jnp.float32),
        compiler_params=pltpu.CompilerParams(dimension_semantics=("parallel",)),
    )(x, w_bf16, b.reshape(1, N))


def _layernorm_kernel(x_ref, g_ref, b_ref, o_ref, *, eps):
    x = x_ref[...]
    mu = jnp.mean(x, axis=-1, keepdims=True)
    var = jnp.mean((x - mu) ** 2, axis=-1, keepdims=True)
    y = (x - mu) * jax.lax.rsqrt(var + eps)
    o_ref[...] = (y * g_ref[...] + b_ref[...]).astype(o_ref.dtype)


def layernorm_rows(x, gamma, beta, eps=1e-12, tm=256):
    """x: [M, H] f32, per-row layernorm over H (BERT eps=1e-12), row-tiled."""
    M, H = x.shape
    tm = M if M < tm else tm
    return pl.pallas_call(
        functools.partial(_layernorm_kernel, eps=eps),
        grid=(pl.cdiv(M, tm),),
        in_specs=[
            pl.BlockSpec((tm, H), lambda i: (i, 0)),
            pl.BlockSpec((1, H), lambda i: (0, 0)),
            pl.BlockSpec((1, H), lambda i: (0, 0)),
        ],
        out_specs=pl.BlockSpec((tm, H), lambda i: (i, 0)),
        out_shape=jax.ShapeDtypeStruct((M, H), jnp.float32),
        compiler_params=pltpu.CompilerParams(dimension_semantics=("parallel",)),
    )(x, gamma.reshape(1, H), beta.reshape(1, H))


def _attn_layer_kernel(x_ref, m_ref, wqkv_ref, bqkv_ref, wo_ref, bo_ref,
                       g_ref, b_ref, o_ref, *, nh, eps):
    """Fused: QKV proj + MHA + output proj + residual + LN1, one batch element.

    x_ref:    (1, S, H) f32        wqkv_ref: (H, 3H) bf16 (q scaled by 1/sqrt(dh))
    m_ref:    (1, 1, S) additive   wo_ref:   (H, H) bf16
    """
    x = x_ref[0]                                   # (S, H) f32
    S, H = x.shape
    dh = H // nh
    mask = m_ref[0]                                # (1, S) additive mask

    qkv = jnp.dot(x.astype(jnp.bfloat16), wqkv_ref[...],
                  preferred_element_type=jnp.float32) + bqkv_ref[...]  # (S, 3H) f32

    ctx_heads = []
    for h in range(nh):                            # static unroll; head split in-VMEM
        qh = qkv[:, h * dh:(h + 1) * dh].astype(jnp.bfloat16)          # (S, dh)
        kh = qkv[:, H + h * dh:H + (h + 1) * dh].astype(jnp.bfloat16)  # (S, dh)
        vh = qkv[:, 2 * H + h * dh:2 * H + (h + 1) * dh].astype(jnp.bfloat16)
        # scores: contract dh of q with dh of k (no explicit transpose needed)
        s = jax.lax.dot_general(qh, kh, (((1,), (1,)), ((), ())),
                                preferred_element_type=jnp.float32)    # (S, S)
        s = s + mask                                                    # key mask
        s = s - jnp.max(s, axis=-1, keepdims=True)
        p = jnp.exp(s)
        p = p * pl.reciprocal(jnp.sum(p, axis=-1, keepdims=True), approx=True)
        ctx_heads.append(jnp.dot(p.astype(jnp.bfloat16), vh,
                                 preferred_element_type=jnp.float32))  # (S, dh)
    ctx = jnp.concatenate(ctx_heads, axis=-1)      # (S, H) f32

    attn = jnp.dot(ctx.astype(jnp.bfloat16), wo_ref[...],
                   preferred_element_type=jnp.float32) + bo_ref[...]

    # residual + layernorm fused
    y = attn + x
    mu = jnp.mean(y, axis=-1, keepdims=True)
    var = jnp.mean((y - mu) ** 2, axis=-1, keepdims=True)
    y = (y - mu) * jax.lax.rsqrt(var + eps)
    o_ref[0] = (y * g_ref[...] + b_ref[...]).astype(o_ref.dtype)


def attn_layer(x, add_mask, wqkv, bqkv, wo, bo, g, b, *, nh, eps=1e-12):
    """x: [B, S, H]; add_mask: [B, 1, S] additive -> [B, S, H]."""
    B, S, H = x.shape
    return pl.pallas_call(
        functools.partial(_attn_layer_kernel, nh=nh, eps=eps),
        grid=(B,),
        in_specs=[
            pl.BlockSpec((1, S, H), lambda i: (i, 0, 0)),
            pl.BlockSpec((1, 1, S), lambda i: (i, 0, 0)),
            pl.BlockSpec((H, 3 * H), lambda i: (0, 0)),
            pl.BlockSpec((1, 3 * H), lambda i: (0, 0)),
            pl.BlockSpec((H, H), lambda i: (0, 0)),
            pl.BlockSpec((1, H), lambda i: (0, 0)),
            pl.BlockSpec((1, H), lambda i: (0, 0)),
            pl.BlockSpec((1, H), lambda i: (0, 0)),
        ],
        out_specs=pl.BlockSpec((1, S, H), lambda i: (i, 0, 0)),
        out_shape=jax.ShapeDtypeStruct((B, S, H), jnp.float32),
        compiler_params=pltpu.CompilerParams(dimension_semantics=("parallel",)),
    )(x, add_mask, wqkv, bqkv.reshape(1, 3 * H), wo, bo.reshape(1, H),
      g.reshape(1, H), b.reshape(1, H))


def _ffn_kernel(x_ref, wi_ref, bi_ref, wo_ref, bo_ref, g_ref, b_ref, o_ref, *, eps):
    """Fused: intermediate GELU + output proj + residual + LN2 on a row tile."""
    x = x_ref[...]                                 # (tm, H) f32
    h = jnp.dot(x.astype(jnp.bfloat16), wi_ref[...],
                preferred_element_type=jnp.float32) + bi_ref[...]
    # TODO(synk): HF BERT uses exact erf-GELU; tanh approximation used here.
    c = 0.7978845608028654  # sqrt(2/pi)
    h = 0.5 * h * (1.0 + jnp.tanh(c * (h + 0.044715 * h * h * h)))
    y = jnp.dot(h.astype(jnp.bfloat16), wo_ref[...],
                preferred_element_type=jnp.float32) + bo_ref[...]
    y = y + x                                      # fused residual
    mu = jnp.mean(y, axis=-1, keepdims=True)
    var = jnp.mean((y - mu) ** 2, axis=-1, keepdims=True)
    y = (y - mu) * jax.lax.rsqrt(var + eps)
    o_ref[...] = (y * g_ref[...] + b_ref[...]).astype(o_ref.dtype)


def ffn_layer(x, wi, bi, wo, bo, g, b, eps=1e-12, tm=256):
    """x: [M, H] f32 -> [M, H] f32, row-tiled grid over M."""
    M, H = x.shape
    I = wi.shape[1]
    tm = M if M < tm else tm
    return pl.pallas_call(
        functools.partial(_ffn_kernel, eps=eps),
        grid=(pl.cdiv(M, tm),),
        in_specs=[
            pl.BlockSpec((tm, H), lambda i: (i, 0)),
            pl.BlockSpec((H, I), lambda i: (0, 0)),
            pl.BlockSpec((1, I), lambda i: (0, 0)),
            pl.BlockSpec((I, H), lambda i: (0, 0)),
            pl.BlockSpec((1, H), lambda i: (0, 0)),
            pl.BlockSpec((1, H), lambda i: (0, 0)),
            pl.BlockSpec((1, H), lambda i: (0, 0)),
        ],
        out_specs=pl.BlockSpec((tm, H), lambda i: (i, 0)),
        out_shape=jax.ShapeDtypeStruct((M, H), jnp.float32),
        compiler_params=pltpu.CompilerParams(dimension_semantics=("parallel",)),
    )(x, wi, bi.reshape(1, I), wo, bo.reshape(1, H), g.reshape(1, H), b.reshape(1, H))


def _head_kernel(x_ref, wp_ref, bp_ref, w1_ref, b1_ref, w2_ref, b2_ref,
                 w3_ref, b3_ref, o_ref):
    """Fused pooler(tanh) + clf1 + clf2 + clf3 (output padded to 128 lanes)."""
    pooled = jnp.tanh(jnp.dot(x_ref[...].astype(jnp.bfloat16), wp_ref[...],
                              preferred_element_type=jnp.float32) + bp_ref[...])
    h = jnp.dot(pooled.astype(jnp.bfloat16), w1_ref[...],
                preferred_element_type=jnp.float32) + b1_ref[...]
    h = jnp.dot(h.astype(jnp.bfloat16), w2_ref[...],
                preferred_element_type=jnp.float32) + b2_ref[...]
    out = jnp.dot(h.astype(jnp.bfloat16), w3_ref[...],
                  preferred_element_type=jnp.float32) + b3_ref[...]
    o_ref[...] = out.astype(o_ref.dtype)


def head_forward(x, hp):
    """x: [B, H] first-token hidden -> [B, 128] lane-dense padded logits."""
    B, H = x.shape
    d1 = hp["w1"].shape[1]
    d2 = hp["w2"].shape[1]
    npad = hp["w3"].shape[1]
    return pl.pallas_call(
        _head_kernel,
        grid=(1,),
        in_specs=[
            pl.BlockSpec((B, H), lambda i: (0, 0)),
            pl.BlockSpec((H, H), lambda i: (0, 0)),
            pl.BlockSpec((1, H), lambda i: (0, 0)),
            pl.BlockSpec((H, d1), lambda i: (0, 0)),
            pl.BlockSpec((1, d1), lambda i: (0, 0)),
            pl.BlockSpec((d1, d2), lambda i: (0, 0)),
            pl.BlockSpec((1, d2), lambda i: (0, 0)),
            pl.BlockSpec((d2, npad), lambda i: (0, 0)),
            pl.BlockSpec((1, npad), lambda i: (0, 0)),
        ],
        out_specs=pl.BlockSpec((B, npad), lambda i: (0, 0)),
        out_shape=jax.ShapeDtypeStruct((B, npad), jnp.float32),
    )(x, hp["wp"], hp["bp"].reshape(1, H), hp["w1"], hp["b1"].reshape(1, d1),
      hp["w2"], hp["b2"].reshape(1, d2), hp["w3"], hp["b3"].reshape(1, npad))


# ------------------------------ Model (small) --------------------------------

class SmallCFG:
    # Scaled-down VisualBERT config (module CFG: text_dim=768, img_dim=2048, 12 layers)
    vocab_size = 100
    hidden = 32          # stands in for CFG.text_dim = 768
    heads = 4
    layers = 2
    intermediate = 64
    max_pos = 32
    type_vocab = 2
    img_dim = 64         # stands in for CFG.img_dim = 2048
    text_len = 8
    num_labels = 13      # len(labels)
    clf_dims = (512, 256)  # classifier head kept faithful: H -> 512 -> 256 -> 13
    logits_pad = 128     # lane-dense classifier output, sliced to num_labels


def init_params(key, cfg):
    ks = iter(jax.random.split(key, 64))

    def nrm(shape):
        return jax.random.normal(next(ks), shape, jnp.float32) * 0.02

    def dense(din, dout):
        return {"w": nrm((din, dout)), "b": jnp.zeros((dout,), jnp.float32)}

    p = {
        "word_emb": nrm((cfg.vocab_size, cfg.hidden)),
        "pos_emb": nrm((cfg.max_pos, cfg.hidden)),
        "type_emb": nrm((cfg.type_vocab, cfg.hidden)),
        "vis_pos_emb": nrm((cfg.max_pos, cfg.hidden)),
        "vis_type_emb": nrm((cfg.type_vocab, cfg.hidden)),
        "vis_proj": dense(cfg.img_dim, cfg.hidden),
        "emb_ln_g": jnp.ones((cfg.hidden,), jnp.float32),
        "emb_ln_b": jnp.zeros((cfg.hidden,), jnp.float32),
        "layers": [],
        "pooler": dense(cfg.hidden, cfg.hidden),
        "clf1": dense(cfg.hidden, cfg.clf_dims[0]),
        "clf2": dense(cfg.clf_dims[0], cfg.clf_dims[1]),
        "clf3": dense(cfg.clf_dims[1], cfg.num_labels),
    }
    for _ in range(cfg.layers):
        p["layers"].append({
            "q": dense(cfg.hidden, cfg.hidden),
            "k": dense(cfg.hidden, cfg.hidden),
            "v": dense(cfg.hidden, cfg.hidden),
            "o": dense(cfg.hidden, cfg.hidden),
            "ln1_g": jnp.ones((cfg.hidden,), jnp.float32),
            "ln1_b": jnp.zeros((cfg.hidden,), jnp.float32),
            "inter": dense(cfg.hidden, cfg.intermediate),
            "out": dense(cfg.intermediate, cfg.hidden),
            "ln2_g": jnp.ones((cfg.hidden,), jnp.float32),
            "ln2_b": jnp.zeros((cfg.hidden,), jnp.float32),
        })
    return p


def prepare_params(p, cfg):
    """Build fused / bf16 inference params (done once, outside the hot path)."""
    bf16 = jnp.bfloat16
    H, nh = cfg.hidden, cfg.heads
    dh = H // nh
    scale = 1.0 / math.sqrt(dh)       # folded into Q projection weights & bias

    fp = {
        "word_emb": p["word_emb"],
        "pos_emb": p["pos_emb"],
        "type_emb": p["type_emb"],
        "vis_pos_emb": p["vis_pos_emb"],
        "vis_type_emb": p["vis_type_emb"],
        "vis_proj_w": p["vis_proj"]["w"].astype(bf16),
        "vis_proj_b": p["vis_proj"]["b"],
        "emb_ln_g": p["emb_ln_g"],
        "emb_ln_b": p["emb_ln_b"],
        "layers": [],
    }
    for lp in p["layers"]:
        wqkv = jnp.concatenate(
            [lp["q"]["w"] * scale, lp["k"]["w"], lp["v"]["w"]], axis=1).astype(bf16)
        bqkv = jnp.concatenate(
            [lp["q"]["b"] * scale, lp["k"]["b"], lp["v"]["b"]], axis=0)
        fp["layers"].append({
            "wqkv": wqkv, "bqkv": bqkv,
            "wo": lp["o"]["w"].astype(bf16), "bo": lp["o"]["b"],
            "ln1_g": lp["ln1_g"], "ln1_b": lp["ln1_b"],
            "wi": lp["inter"]["w"].astype(bf16), "bi": lp["inter"]["b"],
            "wo2": lp["out"]["w"].astype(bf16), "bo2": lp["out"]["b"],
            "ln2_g": lp["ln2_g"], "ln2_b": lp["ln2_b"],
        })

    npad = cfg.logits_pad
    w3 = jnp.zeros((cfg.clf_dims[1], npad), jnp.float32)
    w3 = w3.at[:, :cfg.num_labels].set(p["clf3"]["w"])
    b3 = jnp.zeros((npad,), jnp.float32).at[:cfg.num_labels].set(p["clf3"]["b"])
    fp["head"] = {
        "wp": p["pooler"]["w"].astype(bf16), "bp": p["pooler"]["b"],
        "w1": p["clf1"]["w"].astype(bf16), "b1": p["clf1"]["b"],
        "w2": p["clf2"]["w"].astype(bf16), "b2": p["clf2"]["b"],
        "w3": w3.astype(bf16), "b3": b3,
    }
    return fp


def model_forward(fp, input_ids, token_type_ids, attention_mask, img, *, cfg):
    B, T = input_ids.shape
    H, nh = cfg.hidden, cfg.heads
    S = T + 1  # one visual token: img.unsqueeze(1)

    # --- VisualBertEmbeddings (gathers are glue; projection / LN in Pallas) ---
    we = fp["word_emb"][input_ids]                       # (B,T,H)
    pe = fp["pos_emb"][:T][None, :, :]                   # (1,T,H)
    te = fp["type_emb"][token_type_ids]                  # (B,T,H)
    text_emb = we + pe + te

    vis_proj = linear_rows(img, fp["vis_proj_w"], fp["vis_proj_b"])   # (B,H)
    vis_type = fp["vis_type_emb"][1][None, None, :]      # visual_token_type_ids = ones
    vis_pos = fp["vis_pos_emb"][0][None, None, :]        # visual position ids = zeros
    vis_emb = vis_proj[:, None, :] + vis_type + vis_pos  # (B,1,H)

    x = jnp.concatenate([text_emb, vis_emb], axis=1)     # (B,S,H)
    x = layernorm_rows(x.reshape(B * S, H), fp["emb_ln_g"], fp["emb_ln_b"])
    x = x.reshape(B, S, H)

    # --- extended attention mask (text mask ++ ones for visual tokens) ---
    mask = jnp.concatenate(
        [attention_mask.astype(jnp.float32), jnp.ones((B, 1), jnp.float32)], axis=1)
    add_mask = ((1.0 - mask) * jnp.finfo(jnp.float32).min)[:, None, :]  # (B,1,S)

    # --- BERT encoder: two fused Pallas calls per layer ---
    for lp in fp["layers"]:
        x = attn_layer(x, add_mask, lp["wqkv"], lp["bqkv"], lp["wo"], lp["bo"],
                       lp["ln1_g"], lp["ln1_b"], nh=nh)
        x = ffn_layer(x.reshape(B * S, H), lp["wi"], lp["bi"], lp["wo2"], lp["bo2"],
                      lp["ln2_g"], lp["ln2_b"]).reshape(B, S, H)

    # nn.Dropout(p=0.1) is identity at inference time.

    # --- fused pooler + clf head (lane-dense padded output, slice to 13) ---
    logits_pad = head_forward(x[:, 0, :], fp["head"])    # (B, 128)
    return logits_pad[:, :cfg.num_labels]                # (B, 13)


if __name__ == "__main__":
    cfg = SmallCFG()
    key = jax.random.PRNGKey(0)
    kp, kid, kimg = jax.random.split(key, 3)
    params = init_params(kp, cfg)
    fparams = prepare_params(params, cfg)

    B, T = 2, cfg.text_len
    input_ids = jax.random.randint(kid, (B, T), 0, cfg.vocab_size, dtype=jnp.int32)
    token_type_ids = jnp.zeros((B, T), jnp.int32)
    attention_mask = jnp.ones((B, T), jnp.float32).at[1, 6:].set(0.0)  # padding in row 1
    img = jax.random.normal(kimg, (B, cfg.img_dim), jnp.float32)

    fwd = jax.jit(functools.partial(model_forward, cfg=cfg))
    out = fwd(fparams, input_ids, token_type_ids, attention_mask, img)
    out = jax.block_until_ready(out)
    assert out.shape == (B, cfg.num_labels) and out.dtype == jnp.float32
    assert bool(jnp.all(jnp.isfinite(out)))
    print("KERNEL_OK")
</pallas_src>

<mosaic_0001>
module attributes {stable_mosaic.version = 11 : i64} {
  func.func @_linear_kernel(%arg0: i32, %arg1: memref<2x64xf32, #tpu.memory_space<vmem>>, %arg2: memref<64x32xbf16, #tpu.memory_space<vmem>>, %arg3: memref<1x32xf32, #tpu.memory_space<vmem>>, %arg4: memref<2x32xf32, #tpu.memory_space<vmem>>) attributes {dimension_semantics = [#tpu.dimension_semantics<parallel>], iteration_bounds = array<i64: 1>, scalar_prefetch = 0 : i64, scratch_operands = 0 : i64, tpu.core_type = #tpu.core_type<tc>, window_params = [{transform_indices = @transform_0, window_bounds = array<i64: 2, 64>}, {pipeline_mode = #tpu.pipeline_mode<synchronous>, transform_indices = @transform_1, window_bounds = array<i64: 64, 32>}, {pipeline_mode = #tpu.pipeline_mode<synchronous>, transform_indices = @transform_2, window_bounds = array<i64: 1, 32>}, {transform_indices = @transform_3, window_bounds = array<i64: 2, 32>}]} {
    %c0 = arith.constant 0 : index
    %c0_0 = arith.constant 0 : index
    %0 = vector.load %arg1[%c0, %c0_0] : memref<2x64xf32, #tpu.memory_space<vmem>>, vector<2x64xf32>
    %1 = arith.truncf %0 : vector<2x64xf32> to vector<2x64xbf16>
    %c0_1 = arith.constant 0 : index
    %c0_2 = arith.constant 0 : index
    %2 = vector.load %arg2[%c0_1, %c0_2] : memref<64x32xbf16, #tpu.memory_space<vmem>>, vector<64x32xbf16>
    %cst = arith.constant dense<0.000000e+00> : vector<2x32xf32>
    %3 = tpu.matmul %1, %2, %cst {dimension_numbers = #tpu.dot_dimension_numbers<[1], [0], [0], [1], [0, 0, 1, 1], [], []>} : vector<2x64xbf16>, vector<64x32xbf16>, vector<2x32xf32> -> vector<2x32xf32>
    %c0_3 = arith.constant 0 : index
    %c0_4 = arith.constant 0 : index
    %4 = vector.load %arg3[%c0_3, %c0_4] : memref<1x32xf32, #tpu.memory_space<vmem>>, vector<1x32xf32>
    %5 = vector.broadcast %4 : vector<1x32xf32> to vector<2x32xf32>
    %6 = arith.addf %3, %5 : vector<2x32xf32>
    %c0_5 = arith.constant 0 : index
    %c0_6 = arith.constant 0 : index
    %7 = vector.load %arg4[%c0_5, %c0_6] : memref<2x32xf32, #tpu.memory_space<vmem>>, vector<2x32xf32>
    tpu.vector_store %arg4[%c0_5, %c0_6], %6 {strides = array<i32>} : memref<2x32xf32, #tpu.memory_space<vmem>>, vector<2x32xf32>,
    return
  }
  func.func @transform_0(%arg0: i32) -> (i32, i32) {
    %c0_i32 = arith.constant 0 : i32
    %c0_i32_0 = arith.constant 0 : i32
    return %arg0, %c0_i32 : i32, i32
  }
  func.func @transform_1(%arg0: i32) -> (i32, i32) {
    %c0_i32 = arith.constant 0 : i32
    %c0_i32_0 = arith.constant 0 : i32
    %c0_i32_1 = arith.constant 0 : i32
    return %c0_i32, %c0_i32_0 : i32, i32
  }
  func.func @transform_2(%arg0: i32) -> (i32, i32) {
    %c0_i32 = arith.constant 0 : i32
    %c0_i32_0 = arith.constant 0 : i32
    %c0_i32_1 = arith.constant 0 : i32
    return %c0_i32, %c0_i32_0 : i32, i32
  }
  func.func @transform_3(%arg0: i32) -> (i32, i32) {
    %c0_i32 = arith.constant 0 : i32
    %c0_i32_0 = arith.constant 0 : i32
    return %arg0, %c0_i32 : i32, i32
  }
}

module attributes {stable_mosaic.version = 11 : i64} {
  func.func @_layernorm_kernel(%arg0: i32, %arg1: memref<18x32xf32, #tpu.memory_space<vmem>>, %arg2: memref<1x32xf32, #tpu.memory_space<vmem>>, %arg3: memref<1x32xf32, #tpu.memory_space<vmem>>, %arg4: memref<18x32xf32, #tpu.memory_space<vmem>>) attributes {dimension_semantics = [#tpu.dimension_semantics<parallel>], iteration_bounds = array<i64: 1>, scalar_prefetch = 0 : i64, scratch_operands = 0 : i64, tpu.core_type = #tpu.core_type<tc>, window_params = [{transform_indices = @transform_0, window_bounds = array<i64: 18, 32>}, {pipeline_mode = #tpu.pipeline_mode<synchronous>, transform_indices = @transform_1, window_bounds = array<i64: 1, 32>}, {pipeline_mode = #tpu.pipeline_mode<synchronous>, transform_indices = @transform_2, window_bounds = array<i64: 1, 32>}, {transform_indices = @transform_3, window_bounds = array<i64: 18, 32>}]} {
    %c0 = arith.constant 0 : index
    %c0_0 = arith.constant 0 : index
    %0 = vector.load %arg1[%c0, %c0_0] : memref<18x32xf32, #tpu.memory_space<vmem>>, vector<18x32xf32>
    %cst = arith.constant dense<0.000000e+00> : vector<18xf32>
    %1 = vector.multi_reduction <add>, %0, %cst [1] : vector<18x32xf32> to vector<18xf32>
    %2 = vector.shape_cast %1 : vector<18xf32> to vector<18x1xf32>
    %cst_1 = arith.constant 3.200000e+01 : f32
    %3 = vector.broadcast %cst_1 : f32 to vector<18x1xf32>
    %4 = arith.divf %2, %3 : vector<18x1xf32>
    %5 = vector.broadcast %4 : vector<18x1xf32> to vector<18x32xf32>
    %6 = arith.subf %0, %5 : vector<18x32xf32>
    %7 = arith.mulf %6, %6 : vector<18x32xf32>
    %cst_2 = arith.constant dense<0.000000e+00> : vector<18xf32>
    %8 = vector.multi_reduction <add>, %7, %cst_2 [1] : vector<18x32xf32> to vector<18xf32>
    %9 = vector.shape_cast %8 : vector<18xf32> to vector<18x1xf32>
    %cst_3 = arith.constant 3.200000e+01 : f32
    %10 = vector.broadcast %cst_3 : f32 to vector<18x1xf32>
    %11 = arith.divf %9, %10 : vector<18x1xf32>
    %12 = vector.broadcast %4 : vector<18x1xf32> to vector<18x32xf32>
    %13 = arith.subf %0, %12 : vector<18x32xf32>
    %cst_4 = arith.constant 9.99999996E-13 : f32
    %14 = vector.broadcast %cst_4 : f32 to vector<18x1xf32>
    %15 = arith.addf %11, %14 : vector<18x1xf32>
    %16 = math.rsqrt %15 : vector<18x1xf32>
    %17 = vector.broadcast %16 : vector<18x1xf32> to vector<18x32xf32>
    %18 = arith.mulf %13, %17 : vector<18x32xf32>
    %c0_5 = arith.constant 0 : index
    %c0_6 = arith.constant 0 : index
    %19 = vector.load %arg2[%c0_5, %c0_6] : memref<1x32xf32, #tpu.memory_space<vmem>>, vector<1x32xf32>
    %20 = vector.broadcast %19 : vector<1x32xf32> to vector<18x32xf32>
    %21 = arith.mulf %18, %20 : vector<18x32xf32>
    %c0_7 = arith.constant 0 : index
    %c0_8 = arith.constant 0 : index
    %22 = vector.load %arg3[%c0_7, %c0_8] : memref<1x32xf32, #tpu.memory_space<vmem>>, vector<1x32xf32>
    %23 = vector.broadcast %22 : vector<1x32xf32> to vector<18x32xf32>
    %24 = arith.addf %21, %23 : vector<18x32xf32>
    %c0_9 = arith.constant 0 : index
    %c0_10 = arith.constant 0 : index
    %25 = vector.load %arg4[%c0_9, %c0_10] : memref<18x32xf32, #tpu.memory_space<vmem>>, vector<18x32xf32>
    tpu.vector_store %arg4[%c0_9, %c0_10], %24 {strides = array<i32>} : memref<18x32xf32, #tpu.memory_space<vmem>>, vector<18x32xf32>,
    return
  }
  func.func @transform_0(%arg0: i32) -> (i32, i32) {
    %c0_i32 = arith.constant 0 : i32
    %c0_i32_0 = arith.constant 0 : i32
    return %arg0, %c0_i32 : i32, i32
  }
  func.func @transform_1(%arg0: i32) -> (i32, i32) {
    %c0_i32 = arith.constant 0 : i32
    %c0_i32_0 = arith.constant 0 : i32
    %c0_i32_1 = arith.constant 0 : i32
    return %c0_i32, %c0_i32_0 : i32, i32
  }
  func.func @transform_2(%arg0: i32) -> (i32, i32) {
    %c0_i32 = arith.constant 0 : i32
    %c0_i32_0 = arith.constant 0 : i32
    %c0_i32_1 = arith.constant 0 : i32
    return %c0_i32, %c0_i32_0 : i32, i32
  }
  func.func @transform_3(%arg0: i32) -> (i32, i32) {
    %c0_i32 = arith.constant 0 : i32
    %c0_i32_0 = arith.constant 0 : i32
    return %arg0, %c0_i32 : i32, i32
  }
}

module attributes {stable_mosaic.version = 11 : i64} {
  func.func @_ffn_kernel(%arg0: i32, %arg1: memref<18x32xf32, #tpu.memory_space<vmem>>, %arg2: memref<32x64xbf16, #tpu.memory_space<vmem>>, %arg3: memref<1x64xf32, #tpu.memory_space<vmem>>, %arg4: memref<64x32xbf16, #tpu.memory_space<vmem>>, %arg5: memref<1x32xf32, #tpu.memory_space<vmem>>, %arg6: memref<1x32xf32, #tpu.memory_space<vmem>>, %arg7: memref<1x32xf32, #tpu.memory_space<vmem>>, %arg8: memref<18x32xf32, #tpu.memory_space<vmem>>) attributes {dimension_semantics = [#tpu.dimension_semantics<parallel>], iteration_bounds = array<i64: 1>, scalar_prefetch = 0 : i64, scratch_operands = 0 : i64, tpu.core_type = #tpu.core_type<tc>, window_params = [{transform_indices = @transform_0, window_bounds = array<i64: 18, 32>}, {pipeline_mode = #tpu.pipeline_mode<synchronous>, transform_indices = @transform_1, window_bounds = array<i64: 32, 64>}, {pipeline_mode = #tpu.pipeline_mode<synchronous>, transform_indices = @transform_2, window_bounds = array<i64: 1, 64>}, {pipeline_mode = #tpu.pipeline_mode<synchronous>, transform_indices = @transform_3, window_bounds = array<i64: 64, 32>}, {pipeline_mode = #tpu.pipeline_mode<synchronous>, transform_indices = @transform_4, window_bounds = array<i64: 1, 32>}, {pipeline_mode = #tpu.pipeline_mode<synchronous>, transform_indices = @transform_5, window_bounds = array<i64: 1, 32>}, {pipeline_mode = #tpu.pipeline_mode<synchronous>, transform_indices = @transform_6, window_bounds = array<i64: 1, 32>}, {transform_indices = @transform_7, window_bounds = array<i64: 18, 32>}]} {
    %c0 = arith.constant 0 : index
    %c0_0 = arith.constant 0 : index
    %0 = vector.load %arg1[%c0, %c0_0] : memref<18x32xf32, #tpu.memory_space<vmem>>, vector<18x32xf32>
    %1 = arith.truncf %0 : vector<18x32xf32> to vector<18x32xbf16>
    %c0_1 = arith.constant 0 : index
    %c0_2 = arith.constant 0 : index
    %2 = vector.load %arg2[%c0_1, %c0_2] : memref<32x64xbf16, #tpu.memory_space<vmem>>, vector<32x64xbf16>
    %cst = arith.constant dense<0.000000e+00> : vector<18x64xf32>
    %3 = tpu.matmul %1, %2, %cst {dimension_numbers = #tpu.dot_dimension_numbers<[1], [0], [0], [1], [0, 0, 1, 1], [], []>} : vector<18x32xbf16>, vector<32x64xbf16>, vector<18x64xf32> -> vector<18x64xf32>
    %c0_3 = arith.constant 0 : index
    %c0_4 = arith.constant 0 : index
    %4 = vector.load %arg3[%c0_3, %c0_4] : memref<1x64xf32, #tpu.memory_space<vmem>>, vector<1x64xf32>
    %5 = vector.broadcast %4 : vector<1x64xf32> to vector<18x64xf32>
    %6 = arith.addf %3, %5 : vector<18x64xf32>
    %cst_5 = arith.constant 5.000000e-01 : f32
    %7 = vector.broadcast %cst_5 : f32 to vector<18x64xf32>
    %8 = arith.mulf %7, %6 : vector<18x64xf32>
    %cst_6 = arith.constant 4.471500e-02 : f32
    %9 = vector.broadcast %cst_6 : f32 to vector<18x64xf32>
    %10 = arith.mulf %9, %6 : vector<18x64xf32>
    %11 = arith.mulf %10, %6 : vector<18x64xf32>
    %12 = arith.mulf %11, %6 : vector<18x64xf32>
    %13 = arith.addf %6, %12 : vector<18x64xf32>
    %cst_7 = arith.constant 0.797884583 : f32
    %14 = vector.broadcast %cst_7 : f32 to vector<18x64xf32>
    %15 = arith.mulf %14, %13 : vector<18x64xf32>
    %16 = math.tanh %15 : vector<18x64xf32>
    %cst_8 = arith.constant 1.000000e+00 : f32
    %17 = vector.broadcast %cst_8 : f32 to vector<18x64xf32>
    %18 = arith.addf %17, %16 : vector<18x64xf32>
    %19 = arith.mulf %8, %18 : vector<18x64xf32>
    %20 = arith.truncf %19 : vector<18x64xf32> to vector<18x64xbf16>
    %c0_9 = arith.constant 0 : index
    %c0_10 = arith.constant 0 : index
    %21 = vector.load %arg4[%c0_9, %c0_10] : memref<64x32xbf16, #tpu.memory_space<vmem>>, vector<64x32xbf16>
    %cst_11 = arith.constant dense<0.000000e+00> : vector<18x32xf32>
    %22 = tpu.matmul %20, %21, %cst_11 {dimension_numbers = #tpu.dot_dimension_numbers<[1], [0], [0], [1], [0, 0, 1, 1], [], []>} : vector<18x64xbf16>, vector<64x32xbf16>, vector<18x32xf32> -> vector<18x32xf32>
    %c0_12 = arith.constant 0 : index
    %c0_13 = arith.constant 0 : index
    %23 = vector.load %arg5[%c0_12, %c0_13] : memref<1x32xf32, #tpu.memory_space<vmem>>, vector<1x32xf32>
    %24 = vector.broadcast %23 : vector<1x32xf32> to vector<18x32xf32>
    %25 = arith.addf %22, %24 : vector<18x32xf32>
    %26 = arith.addf %25, %0 : vector<18x32xf32>
    %cst_14 = arith.constant dense<0.000000e+00> : vector<18xf32>
    %27 = vector.multi_reduction <add>, %26, %cst_14 [1] : vector<18x32xf32> to vector<18xf32>
    %28 = vector.shape_cast %27 : vector<18xf32> to vector<18x1xf32>
    %cst_15 = arith.constant 3.200000e+01 : f32
    %29 = vector.broadcast %cst_15 : f32 to vector<18x1xf32>
    %30 = arith.divf %28, %29 : vector<18x1xf32>
    %31 = vector.broadcast %30 : vector<18x1xf32> to vector<18x32xf32>
    %32 = arith.subf %26, %31 : vector<18x32xf32>
    %33 = arith.mulf %32, %32 : vector<18x32xf32>
    %cst_16 = arith.constant dense<0.000000e+00> : vector<18xf32>
    %34 = vector.multi_reduction <add>, %33, %cst_16 [1] : vector<18x32xf32> to vector<18xf32>
    %35 = vector.shape_cast %34 : vector<18xf32> to vector<18x1xf32>
    %cst_17 = arith.constant 3.200000e+01 : f32
    %36 = vector.broadcast %cst_17 : f32 to vector<18x1xf32>
    %37 = arith.divf %35, %36 : vector<18x1xf32>
    %38 = vector.broadcast %30 : vector<18x1xf32> to vector<18x32xf32>
    %39 = arith.subf %26, %38 : vector<18x32xf32>
    %cst_18 = arith.constant 9.99999996E-13 : f32
    %40 = vector.broadcast %cst_18 : f32 to vector<18x1xf32>
    %41 = arith.addf %37, %40 : vector<18x1xf32>
    %42 = math.rsqrt %41 : vector<18x1xf32>
    %43 = vector.broadcast %42 : vector<18x1xf32> to vector<18x32xf32>
    %44 = arith.mulf %39, %43 : vector<18x32xf32>
    %c0_19 = arith.constant 0 : index
    %c0_20 = arith.constant 0 : index
    %45 = vector.load %arg6[%c0_19, %c0_20] : memref<1x32xf32, #tpu.memory_space<vmem>>, vector<1x32xf32>
    %46 = vector.broadcast %45 : vector<1x32xf32> to vector<18x32xf32>
    %47 = arith.mulf %44, %46 : vector<18x32xf32>
    %c0_21 = arith.constant 0 : index
    %c0_22 = arith.constant 0 : index
    %48 = vector.load %arg7[%c0_21, %c0_22] : memref<1x32xf32, #tpu.memory_space<vmem>>, vector<1x32xf32>
    %49 = vector.broadcast %48 : vector<1x32xf32> to vector<18x32xf32>
    %50 = arith.addf %47, %49 : vector<18x32xf32>
    %c0_23 = arith.constant 0 : index
    %c0_24 = arith.constant 0 : index
    %51 = vector.load %arg8[%c0_23, %c0_24] : memref<18x32xf32, #tpu.memory_space<vmem>>, vector<18x32xf32>
    tpu.vector_store %arg8[%c0_23, %c0_24], %50 {strides = array<i32>} : memref<18x32xf32, #tpu.memory_space<vmem>>, vector<18x32xf32>,
    return
  }
  func.func @transform_0(%arg0: i32) -> (i32, i32) {
    %c0_i32 = arith.constant 0 : i32
    %c0_i32_0 = arith.constant 0 : i32
    return %arg0, %c0_i32 : i32, i32
  }
  func.func @transform_1(%arg0: i32) -> (i32, i32) {
    %c0_i32 = arith.constant 0 : i32
    %c0_i32_0 = arith.constant 0 : i32
    %c0_i32_1 = arith.constant 0 : i32
    return %c0_i32, %c0_i32_0 : i32, i32
  }
  func.func @transform_2(%arg0: i32) -> (i32, i32) {
    %c0_i32 = arith.constant 0 : i32
    %c0_i32_0 = arith.constant 0 : i32
    %c0_i32_1 = arith.constant 0 : i32
    return %c0_i32, %c0_i32_0 : i32, i32
  }
  func.func @transform_3(%arg0: i32) -> (i32, i32) {
    %c0_i32 = arith.constant 0 : i32
    %c0_i32_0 = arith.constant 0 : i32
    %c0_i32_1 = arith.constant 0 : i32
    return %c0_i32, %c0_i32_0 : i32, i32
  }
  func.func @transform_4(%arg0: i32) -> (i32, i32) {
    %c0_i32 = arith.constant 0 : i32
    %c0_i32_0 = arith.constant 0 : i32
    %c0_i32_1 = arith.constant 0 : i32
    return %c0_i32, %c0_i32_0 : i32, i32
  }
  func.func @transform_5(%arg0: i32) -> (i32, i32) {
    %c0_i32 = arith.constant 0 : i32
    %c0_i32_0 = arith.constant 0 : i32
    %c0_i32_1 = arith.constant 0 : i32
    return %c0_i32, %c0_i32_0 : i32, i32
  }
  func.func @transform_6(%arg0: i32) -> (i32, i32) {
    %c0_i32 = arith.constant 0 : i32
    %c0_i32_0 = arith.constant 0 : i32
    %c0_i32_1 = arith.constant 0 : i32
    return %c0_i32, %c0_i32_0 : i32, i32
  }
  func.func @transform_7(%arg0: i32) -> (i32, i32) {
    %c0_i32 = arith.constant 0 : i32
    %c0_i32_0 = arith.constant 0 : i32
    return %arg0, %c0_i32 : i32, i32
  }
}

module attributes {stable_mosaic.version = 11 : i64} {
  func.func @_attn_layer_kernel(%arg0: i32, %arg1: memref<1x9x32xf32, #tpu.memory_space<vmem>>, %arg2: memref<1x1x9xf32, #tpu.memory_space<vmem>>, %arg3: memref<32x96xbf16, #tpu.memory_space<vmem>>, %arg4: memref<1x96xf32, #tpu.memory_space<vmem>>, %arg5: memref<32x32xbf16, #tpu.memory_space<vmem>>, %arg6: memref<1x32xf32, #tpu.memory_space<vmem>>, %arg7: memref<1x32xf32, #tpu.memory_space<vmem>>, %arg8: memref<1x32xf32, #tpu.memory_space<vmem>>, %arg9: memref<1x9x32xf32, #tpu.memory_space<vmem>>) attributes {dimension_semantics = [#tpu.dimension_semantics<parallel>], iteration_bounds = array<i64: 2>, scalar_prefetch = 0 : i64, scratch_operands = 0 : i64, tpu.core_type = #tpu.core_type<tc>, window_params = [{transform_indices = @transform_0, window_bounds = array<i64: 1, 9, 32>}, {transform_indices = @transform_1, window_bounds = array<i64: 1, 1, 9>}, {pipeline_mode = #tpu.pipeline_mode<synchronous>, transform_indices = @transform_2, window_bounds = array<i64: 32, 96>}, {pipeline_mode = #tpu.pipeline_mode<synchronous>, transform_indices = @transform_3, window_bounds = array<i64: 1, 96>}, {pipeline_mode = #tpu.pipeline_mode<synchronous>, transform_indices = @transform_4, window_bounds = array<i64: 32, 32>}, {pipeline_mode = #tpu.pipeline_mode<synchronous>, transform_indices = @transform_5, window_bounds = array<i64: 1, 32>}, {pipeline_mode = #tpu.pipeline_mode<synchronous>, transform_indices = @transform_6, window_bounds = array<i64: 1, 32>}, {pipeline_mode = #tpu.pipeline_mode<synchronous>, transform_indices = @transform_7, window_bounds = array<i64: 1, 32>}, {transform_indices = @transform_8, window_bounds = array<i64: 1, 9, 32>}]} {
    %c0 = arith.constant 0 : index
    %c0_0 = arith.constant 0 : index
    %c0_1 = arith.constant 0 : index
    %0 = vector.load %arg1[%c0, %c0_0, %c0_1] : memref<1x9x32xf32, #tpu.memory_space<vmem>>, vector<1x9x32xf32>
    %1 = vector.shape_cast %0 : vector<1x9x32xf32> to vector<9x32xf32>
    %c0_2 = arith.constant 0 : index
    %c0_3 = arith.constant 0 : index
    %c0_4 = arith.constant 0 : index
    %2 = vector.load %arg2[%c0_2, %c0_3, %c0_4] : memref<1x1x9xf32, #tpu.memory_space<vmem>>, vector<1x1x9xf32>
    %3 = vector.shape_cast %2 : vector<1x1x9xf32> to vector<1x9xf32>
    %4 = arith.truncf %1 : vector<9x32xf32> to vector<9x32xbf16>
    %c0_5 = arith.constant 0 : index
    %c0_6 = arith.constant 0 : index
    %5 = vector.load %arg3[%c0_5, %c0_6] : memref<32x96xbf16, #tpu.memory_space<vmem>>, vector<32x96xbf16>
    %cst = arith.constant dense<0.000000e+00> : vector<9x96xf32>
    %6 = tpu.matmul %4, %5, %cst {dimension_numbers = #tpu.dot_dimension_numbers<[1], [0], [0], [1], [0, 0, 1, 1], [], []>} : vector<9x32xbf16>, vector<32x96xbf16>, vector<9x96xf32> -> vector<9x96xf32>
    %c0_7 = arith.constant 0 : index
    %c0_8 = arith.constant 0 : index
    %7 = vector.load %arg4[%c0_7, %c0_8] : memref<1x96xf32, #tpu.memory_space<vmem>>, vector<1x96xf32>
    %8 = vector.broadcast %7 : vector<1x96xf32> to vector<9x96xf32>
    %9 = arith.addf %6, %8 : vector<9x96xf32>
    %10 = vector.extract_strided_slice %9 {offsets = [0, 0], sizes = [9, 8], strides = [1, 1]} : vector<9x96xf32> to vector<9x8xf32>
    %11 = arith.truncf %10 : vector<9x8xf32> to vector<9x8xbf16>
    %12 = vector.extract_strided_slice %9 {offsets = [0, 32], sizes = [9, 8], strides = [1, 1]} : vector<9x96xf32> to vector<9x8xf32>
    %13 = arith.truncf %12 : vector<9x8xf32> to vector<9x8xbf16>
    %14 = vector.extract_strided_slice %9 {offsets = [0, 64], sizes = [9, 8], strides = [1, 1]} : vector<9x96xf32> to vector<9x8xf32>
    %15 = arith.truncf %14 : vector<9x8xf32> to vector<9x8xbf16>
    %cst_9 = arith.constant dense<0.000000e+00> : vector<9x9xf32>
    %16 = tpu.matmul %11, %13, %cst_9 {dimension_numbers = #tpu.dot_dimension_numbers<[1], [1], [0], [0], [0, 0, 1, 0], [], []>} : vector<9x8xbf16>, vector<9x8xbf16>, vector<9x9xf32> -> vector<9x9xf32>
    %17 = vector.broadcast %3 : vector<1x9xf32> to vector<9x9xf32>
    %18 = arith.addf %16, %17 : vector<9x9xf32>
    %cst_10 = arith.constant dense<0xFF800000> : vector<9xf32>
    %19 = vector.multi_reduction <maximumf>, %18, %cst_10 [1] : vector<9x9xf32> to vector<9xf32>
    %20 = vector.shape_cast %19 : vector<9xf32> to vector<9x1xf32>
    %21 = vector.broadcast %20 : vector<9x1xf32> to vector<9x9xf32>
    %22 = arith.subf %18, %21 : vector<9x9xf32>
    %23 = math.exp %22 : vector<9x9xf32>
    %cst_11 = arith.constant dense<0.000000e+00> : vector<9xf32>
    %24 = vector.multi_reduction <add>, %23, %cst_11 [1] : vector<9x9xf32> to vector<9xf32>
    %25 = vector.shape_cast %24 : vector<9xf32> to vector<9x1xf32>
    %26 = tpu.reciprocal %25 {approx = true} : vector<9x1xf32> -> vector<9x1xf32>
    %27 = vector.broadcast %26 : vector<9x1xf32> to vector<9x9xf32>
    %28 = arith.mulf %23, %27 : vector<9x9xf32>
    %29 = arith.truncf %28 : vector<9x9xf32> to vector<9x9xbf16>
    %cst_12 = arith.constant dense<0.000000e+00> : vector<9x8xf32>
    %30 = tpu.matmul %29, %15, %cst_12 {dimension_numbers = #tpu.dot_dimension_numbers<[1], [0], [0], [1], [0, 0, 1, 1], [], []>} : vector<9x9xbf16>, vector<9x8xbf16>, vector<9x8xf32> -> vector<9x8xf32>
    %31 = vector.extract_strided_slice %9 {offsets = [0, 8], sizes = [9, 8], strides = [1, 1]} : vector<9x96xf32> to vector<9x8xf32>
    %32 = arith.truncf %31 : vector<9x8xf32> to vector<9x8xbf16>
    %33 = vector.extract_strided_slice %9 {offsets = [0, 40], sizes = [9, 8], strides = [1, 1]} : vector<9x96xf32> to vector<9x8xf32>
    %34 = arith.truncf %33 : vector<9x8xf32> to vector<9x8xbf16>
    %35 = vector.extract_strided_slice %9 {offsets = [0, 72], sizes = [9, 8], strides = [1, 1]} : vector<9x96xf32> to vector<9x8xf32>
    %36 = arith.truncf %35 : vector<9x8xf32> to vector<9x8xbf16>
    %cst_13 = arith.constant dense<0.000000e+00> : vector<9x9xf32>
    %37 = tpu.matmul %32, %34, %cst_13 {dimension_numbers = #tpu.dot_dimension_numbers<[1], [1], [0], [0], [0, 0, 1, 0], [], []>} : vector<9x8xbf16>, vector<9x8xbf16>, vector<9x9xf32> -> vector<9x9xf32>
    %38 = vector.broadcast %3 : vector<1x9xf32> to vector<9x9xf32>
    %39 = arith.addf %37, %38 : vector<9x9xf32>
    %cst_14 = arith.constant dense<0xFF800000> : vector<9xf32>
    %40 = vector.multi_reduction <maximumf>, %39, %cst_14 [1] : vector<9x9xf32> to vector<9xf32>
    %41 = vector.shape_cast %40 : vector<9xf32> to vector<9x1xf32>
    %42 = vector.broadcast %41 : vector<9x1xf32> to vector<9x9xf32>
    %43 = arith.subf %39, %42 : vector<9x9xf32>
    %44 = math.exp %43 : vector<9x9xf32>
    %cst_15 = arith.constant dense<0.000000e+00> : vector<9xf32>
    %45 = vector.multi_reduction <add>, %44, %cst_15 [1] : vector<9x9xf32> to vector<9xf32>
    %46 = vector.shape_cast %45 : vector<9xf32> to vector<9x1xf32>
    %47 = tpu.reciprocal %46 {approx = true} : vector<9x1xf32> -> vector<9x1xf32>
    %48 = vector.broadcast %47 : vector<9x1xf32> to vector<9x9xf32>
    %49 = arith.mulf %44, %48 : vector<9x9xf32>
    %50 = arith.truncf %49 : vector<9x9xf32> to vector<9x9xbf16>
    %cst_16 = arith.constant dense<0.000000e+00> : vector<9x8xf32>
    %51 = tpu.matmul %50, %36, %cst_16 {dimension_numbers = #tpu.dot_dimension_numbers<[1], [0], [0], [1], [0, 0, 1, 1], [], []>} : vector<9x9xbf16>, vector<9x8xbf16>, vector<9x8xf32> -> vector<9x8xf32>
    %52 = vector.extract_strided_slice %9 {offsets = [0, 16], sizes = [9, 8], strides = [1, 1]} : vector<9x96xf32> to vector<9x8xf32>
    %53 = arith.truncf %52 : vector<9x8xf32> to vector<9x8xbf16>
    %54 = vector.extract_strided_slice %9 {offsets = [0, 48], sizes = [9, 8], strides = [1, 1]} : vector<9x96xf32> to vector<9x8xf32>
    %55 = arith.truncf %54 : vector<9x8xf32> to vector<9x8xbf16>
    %56 = vector.extract_strided_slice %9 {offsets = [0, 80], sizes = [9, 8], strides = [1, 1]} : vector<9x96xf32> to vector<9x8xf32>
    %57 = arith.truncf %56 : vector<9x8xf32> to vector<9x8xbf16>
    %cst_17 = arith.constant dense<0.000000e+00> : vector<9x9xf32>
    %58 = tpu.matmul %53, %55, %cst_17 {dimension_numbers = #tpu.dot_dimension_numbers<[1], [1], [0], [0], [0, 0, 1, 0], [], []>} : vector<9x8xbf16>, vector<9x8xbf16>, vector<9x9xf32> -> vector<9x9xf32>
    %59 = vector.broadcast %3 : vector<1x9xf32> to vector<9x9xf32>
    %60 = arith.addf %58, %59 : vector<9x9xf32>
    %cst_18 = arith.constant dense<0xFF800000> : vector<9xf32>
    %61 = vector.multi_reduction <maximumf>, %60, %cst_18 [1] : vector<9x9xf32> to vector<9xf32>
    %62 = vector.shape_cast %61 : vector<9xf32> to vector<9x1xf32>
    %63 = vector.broadcast %62 : vector<9x1xf32> to vector<9x9xf32>
    %64 = arith.subf %60, %63 : vector<9x9xf32>
    %65 = math.exp %64 : vector<9x9xf32>
    %cst_19 = arith.constant dense<0.000000e+00> : vector<9xf32>
    %66 = vector.multi_reduction <add>, %65, %cst_19 [1] : vector<9x9xf32> to vector<9xf32>
    %67 = vector.shape_cast %66 : vector<9xf32> to vector<9x1xf32>
    %68 = tpu.reciprocal %67 {approx = true} : vector<9x1xf32> -> vector<9x1xf32>
    %69 = vector.broadcast %68 : vector<9x1xf32> to vector<9x9xf32>
    %70 = arith.mulf %65, %69 : vector<9x9xf32>
    %71 = arith.truncf %70 : vector<9x9xf32> to vector<9x9xbf16>
    %cst_20 = arith.constant dense<0.000000e+00> : vector<9x8xf32>
    %72 = tpu.matmul %71, %57, %cst_20 {dimension_numbers = #tpu.dot_dimension_numbers<[1], [0], [0], [1], [0, 0, 1, 1], [], []>} : vector<9x9xbf16>, vector<9x8xbf16>, vector<9x8xf32> -> vector<9x8xf32>
    %73 = vector.extract_strided_slice %9 {offsets = [0, 24], sizes = [9, 8], strides = [1, 1]} : vector<9x96xf32> to vector<9x8xf32>
    %74 = arith.truncf %73 : vector<9x8xf32> to vector<9x8xbf16>
    %75 = vector.extract_strided_slice %9 {offsets = [0, 56], sizes = [9, 8], strides = [1, 1]} : vector<9x96xf32> to vector<9x8xf32>
    %76 = arith.truncf %75 : vector<9x8xf32> to vector<9x8xbf16>
    %77 = vector.extract_strided_slice %9 {offsets = [0, 88], sizes = [9, 8], strides = [1, 1]} : vector<9x96xf32> to vector<9x8xf32>
    %78 = arith.truncf %77 : vector<9x8xf32> to vector<9x8xbf16>
    %cst_21 = arith.constant dense<0.000000e+00> : vector<9x9xf32>
    %79 = tpu.matmul %74, %76, %cst_21 {dimension_numbers = #tpu.dot_dimension_numbers<[1], [1], [0], [0], [0, 0, 1, 0], [], []>} : vector<9x8xbf16>, vector<9x8xbf16>, vector<9x9xf32> -> vector<9x9xf32>
    %80 = vector.broadcast %3 : vector<1x9xf32> to vector<9x9xf32>
    %81 = arith.addf %79, %80 : vector<9x9xf32>
    %cst_22 = arith.constant dense<0xFF800000> : vector<9xf32>
    %82 = vector.multi_reduction <maximumf>, %81, %cst_22 [1] : vector<9x9xf32> to vector<9xf32>
    %83 = vector.shape_cast %82 : vector<9xf32> to vector<9x1xf32>
    %84 = vector.broadcast %83 : vector<9x1xf32> to vector<9x9xf32>
    %85 = arith.subf %81, %84 : vector<9x9xf32>
    %86 = math.exp %85 : vector<9x9xf32>
    %cst_23 = arith.constant dense<0.000000e+00> : vector<9xf32>
    %87 = vector.multi_reduction <add>, %86, %cst_23 [1] : vector<9x9xf32> to vector<9xf32>
    %88 = vector.shape_cast %87 : vector<9xf32> to vector<9x1xf32>
    %89 = tpu.reciprocal %88 {approx = true} : vector<9x1xf32> -> vector<9x1xf32>
    %90 = vector.broadcast %89 : vector<9x1xf32> to vector<9x9xf32>
    %91 = arith.mulf %86, %90 : vector<9x9xf32>
    %92 = arith.truncf %91 : vector<9x9xf32> to vector<9x9xbf16>
    %cst_24 = arith.constant dense<0.000000e+00> : vector<9x8xf32>
    %93 = tpu.matmul %92, %78, %cst_24 {dimension_numbers = #tpu.dot_dimension_numbers<[1], [0], [0], [1], [0, 0, 1, 1], [], []>} : vector<9x9xbf16>, vector<9x8xbf16>, vector<9x8xf32> -> vector<9x8xf32>
    %94 = tpu.concatenate %30, %51, %72, %93 in 1 : vector<9x8xf32>, vector<9x8xf32>, vector<9x8xf32>, vector<9x8xf32> -> vector<9x32xf32>
    %95 = arith.truncf %94 : vector<9x32xf32> to vector<9x32xbf16>
    %c0_25 = arith.constant 0 : index
    %c0_26 = arith.constant 0 : index
    %96 = vector.load %arg5[%c0_25, %c0_26] : memref<32x32xbf16, #tpu.memory_space<vmem>>, vector<32x32xbf16>
    %cst_27 = arith.constant dense<0.000000e+00> : vector<9x32xf32>
    %97 = tpu.matmul %95, %96, %cst_27 {dimension_numbers = #tpu.dot_dimension_numbers<[1], [0], [0], [1], [0, 0, 1, 1], [], []>} : vector<9x32xbf16>, vector<32x32xbf16>, vector<9x32xf32> -> vector<9x32xf32>
    %c0_28 = arith.constant 0 : index
    %c0_29 = arith.constant 0 : index
    %98 = vector.load %arg6[%c0_28, %c0_29] : memref<1x32xf32, #tpu.memory_space<vmem>>, vector<1x32xf32>
    %99 = vector.broadcast %98 : vector<1x32xf32> to vector<9x32xf32>
    %100 = arith.addf %97, %99 : vector<9x32xf32>
    %101 = arith.addf %100, %1 : vector<9x32xf32>
    %cst_30 = arith.constant dense<0.000000e+00> : vector<9xf32>
    %102 = vector.multi_reduction <add>, %101, %cst_30 [1] : vector<9x32xf32> to vector<9xf32>
    %103 = vector.shape_cast %102 : vector<9xf32> to vector<9x1xf32>
    %cst_31 = arith.constant 3.200000e+01 : f32
    %104 = vector.broadcast %cst_31 : f32 to vector<9x1xf32>
    %105 = arith.divf %103, %104 : vector<9x1xf32>
    %106 = vector.broadcast %105 : vector<9x1xf32> to vector<9x32xf32>
    %107 = arith.subf %101, %106 : vector<9x32xf32>
    %108 = arith.mulf %107, %107 : vector<9x32xf32>
    %cst_32 = arith.constant dense<0.000000e+00> : vector<9xf32>
    %109 = vector.multi_reduction <add>, %108, %cst_32 [1] : vector<9x32xf32> to vector<9xf32>
    %110 = vector.shape_cast %109 : vector<9xf32> to vector<9x1xf32>
    %cst_33 = arith.constant 3.200000e+01 : f32
    %111 = vector.broadcast %cst_33 : f32 to vector<9x1xf32>
    %112 = arith.divf %110, %111 : vector<9x1xf32>
    %113 = vector.broadcast %105 : vector<9x1xf32> to vector<9x32xf32>
    %114 = arith.subf %101, %113 : vector<9x32xf32>
    %cst_34 = arith.constant 9.99999996E-13 : f32
    %115 = vector.broadcast %cst_34 : f32 to vector<9x1xf32>
    %116 = arith.addf %112, %115 : vector<9x1xf32>
    %117 = math.rsqrt %116 : vector<9x1xf32>
    %118 = vector.broadcast %117 : vector<9x1xf32> to vector<9x32xf32>
    %119 = arith.mulf %114, %118 : vector<9x32xf32>
    %c0_35 = arith.constant 0 : index
    %c0_36 = arith.constant 0 : index
    %120 = vector.load %arg7[%c0_35, %c0_36] : memref<1x32xf32, #tpu.memory_space<vmem>>, vector<1x32xf32>
    %121 = vector.broadcast %120 : vector<1x32xf32> to vector<9x32xf32>
    %122 = arith.mulf %119, %121 : vector<9x32xf32>
    %c0_37 = arith.constant 0 : index
    %c0_38 = arith.constant 0 : index
    %123 = vector.load %arg8[%c0_37, %c0_38] : memref<1x32xf32, #tpu.memory_space<vmem>>, vector<1x32xf32>
    %124 = vector.broadcast %123 : vector<1x32xf32> to vector<9x32xf32>
    %125 = arith.addf %122, %124 : vector<9x32xf32>
    %c0_39 = arith.constant 0 : index
    %c0_40 = arith.constant 0 : index
    %c0_41 = arith.constant 0 : index
    %126 = vector.load %arg9[%c0_39, %c0_40, %c0_41] : memref<1x9x32xf32, #tpu.memory_space<vmem>>, vector<1x9x32xf32>
    %127 = vector.shape_cast %126 : vector<1x9x32xf32> to vector<9x32xf32>
    %128 = vector.shape_cast %125 : vector<9x32xf32> to vector<1x9x32xf32>
    tpu.vector_store %arg9[%c0_39, %c0_40, %c0_41], %128 {strides = array<i32>} : memref<1x9x32xf32, #tpu.memory_space<vmem>>, vector<1x9x32xf32>,
    return
  }
  func.func @transform_0(%arg0: i32) -> (i32, i32, i32) {
    %c0_i32 = arith.constant 0 : i32
    %c0_i32_0 = arith.constant 0 : i32
    %c0_i32_1 = arith.constant 0 : i32
    return %arg0, %c0_i32, %c0_i32_0 : i32, i32, i32
  }
  func.func @transform_1(%arg0: i32) -> (i32, i32, i32) {
    %c0_i32 = arith.constant 0 : i32
    %c0_i32_0 = arith.constant 0 : i32
    %c0_i32_1 = arith.constant 0 : i32
    return %arg0, %c0_i32, %c0_i32_0 : i32, i32, i32
  }
  func.func @transform_2(%arg0: i32) -> (i32, i32) {
    %c0_i32 = arith.constant 0 : i32
    %c0_i32_0 = arith.constant 0 : i32
    %c0_i32_1 = arith.constant 0 : i32
    return %c0_i32, %c0_i32_0 : i32, i32
  }
  func.func @transform_3(%arg0: i32) -> (i32, i32) {
    %c0_i32 = arith.constant 0 : i32
    %c0_i32_0 = arith.constant 0 : i32
    %c0_i32_1 = arith.constant 0 : i32
    return %c0_i32, %c0_i32_0 : i32, i32
  }
  func.func @transform_4(%arg0: i32) -> (i32, i32) {
    %c0_i32 = arith.constant 0 : i32
    %c0_i32_0 = arith.constant 0 : i32
    %c0_i32_1 = arith.constant 0 : i32
    return %c0_i32, %c0_i32_0 : i32, i32
  }
  func.func @transform_5(%arg0: i32) -> (i32, i32) {
    %c0_i32 = arith.constant 0 : i32
    %c0_i32_0 = arith.constant 0 : i32
    %c0_i32_1 = arith.constant 0 : i32
    return %c0_i32, %c0_i32_0 : i32, i32
  }
  func.func @transform_6(%arg0: i32) -> (i32, i32) {
    %c0_i32 = arith.constant 0 : i32
    %c0_i32_0 = arith.constant 0 : i32
    %c0_i32_1 = arith.constant 0 : i32
    return %c0_i32, %c0_i32_0 : i32, i32
  }
  func.func @transform_7(%arg0: i32) -> (i32, i32) {
    %c0_i32 = arith.constant 0 : i32
    %c0_i32_0 = arith.constant 0 : i32
    %c0_i32_1 = arith.constant 0 : i32
    return %c0_i32, %c0_i32_0 : i32, i32
  }
  func.func @transform_8(%arg0: i32) -> (i32, i32, i32) {
    %c0_i32 = arith.constant 0 : i32
    %c0_i32_0 = arith.constant 0 : i32
    %c0_i32_1 = arith.constant 0 : i32
    return %arg0, %c0_i32, %c0_i32_0 : i32, i32, i32
  }
}

module attributes {stable_mosaic.version = 11 : i64} {
  func.func @_head_kernel(%arg0: i32, %arg1: memref<2x32xf32, #tpu.memory_space<vmem>>, %arg2: memref<32x32xbf16, #tpu.memory_space<vmem>>, %arg3: memref<1x32xf32, #tpu.memory_space<vmem>>, %arg4: memref<32x512xbf16, #tpu.memory_space<vmem>>, %arg5: memref<1x512xf32, #tpu.memory_space<vmem>>, %arg6: memref<512x256xbf16, #tpu.memory_space<vmem>>, %arg7: memref<1x256xf32, #tpu.memory_space<vmem>>, %arg8: memref<256x128xbf16, #tpu.memory_space<vmem>>, %arg9: memref<1x128xf32, #tpu.memory_space<vmem>>, %arg10: memref<2x128xf32, #tpu.memory_space<vmem>>) attributes {dimension_semantics = [#tpu.dimension_semantics<arbitrary>], iteration_bounds = array<i64: 1>, scalar_prefetch = 0 : i64, scratch_operands = 0 : i64, tpu.core_type = #tpu.core_type<tc>, window_params = [{pipeline_mode = #tpu.pipeline_mode<synchronous>, transform_indices = @transform_0, window_bounds = array<i64: 2, 32>}, {pipeline_mode = #tpu.pipeline_mode<synchronous>, transform_indices = @transform_1, window_bounds = array<i64: 32, 32>}, {pipeline_mode = #tpu.pipeline_mode<synchronous>, transform_indices = @transform_2, window_bounds = array<i64: 1, 32>}, {pipeline_mode = #tpu.pipeline_mode<synchronous>, transform_indices = @transform_3, window_bounds = array<i64: 32, 512>}, {pipeline_mode = #tpu.pipeline_mode<synchronous>, transform_indices = @transform_4, window_bounds = array<i64: 1, 512>}, {pipeline_mode = #tpu.pipeline_mode<synchronous>, transform_indices = @transform_5, window_bounds = array<i64: 512, 256>}, {pipeline_mode = #tpu.pipeline_mode<synchronous>, transform_indices = @transform_6, window_bounds = array<i64: 1, 256>}, {pipeline_mode = #tpu.pipeline_mode<synchronous>, transform_indices = @transform_7, window_bounds = array<i64: 256, 128>}, {pipeline_mode = #tpu.pipeline_mode<synchronous>, transform_indices = @transform_8, window_bounds = array<i64: 1, 128>}, {pipeline_mode = #tpu.pipeline_mode<synchronous>, transform_indices = @transform_9, window_bounds = array<i64: 2, 128>}]} {
    %c0 = arith.constant 0 : index
    %c0_0 = arith.constant 0 : index
    %0 = vector.load %arg1[%c0, %c0_0] : memref<2x32xf32, #tpu.memory_space<vmem>>, vector<2x32xf32>
    %1 = arith.truncf %0 : vector<2x32xf32> to vector<2x32xbf16>
    %c0_1 = arith.constant 0 : index
    %c0_2 = arith.constant 0 : index
    %2 = vector.load %arg2[%c0_1, %c0_2] : memref<32x32xbf16, #tpu.memory_space<vmem>>, vector<32x32xbf16>
    %cst = arith.constant dense<0.000000e+00> : vector<2x32xf32>
    %3 = tpu.matmul %1, %2, %cst {dimension_numbers = #tpu.dot_dimension_numbers<[1], [0], [0], [1], [0, 0, 1, 1], [], []>} : vector<2x32xbf16>, vector<32x32xbf16>, vector<2x32xf32> -> vector<2x32xf32>
    %c0_3 = arith.constant 0 : index
    %c0_4 = arith.constant 0 : index
    %4 = vector.load %arg3[%c0_3, %c0_4] : memref<1x32xf32, #tpu.memory_space<vmem>>, vector<1x32xf32>
    %5 = vector.broadcast %4 : vector<1x32xf32> to vector<2x32xf32>
    %6 = arith.addf %3, %5 : vector<2x32xf32>
    %7 = math.tanh %6 : vector<2x32xf32>
    %8 = arith.truncf %7 : vector<2x32xf32> to vector<2x32xbf16>
    %c0_5 = arith.constant 0 : index
    %c0_6 = arith.constant 0 : index
    %9 = vector.load %arg4[%c0_5, %c0_6] : memref<32x512xbf16, #tpu.memory_space<vmem>>, vector<32x512xbf16>
    %cst_7 = arith.constant dense<0.000000e+00> : vector<2x512xf32>
    %10 = tpu.matmul %8, %9, %cst_7 {dimension_numbers = #tpu.dot_dimension_numbers<[1], [0], [0], [1], [0, 0, 1, 1], [], []>} : vector<2x32xbf16>, vector<32x512xbf16>, vector<2x512xf32> -> vector<2x512xf32>
    %c0_8 = arith.constant 0 : index
    %c0_9 = arith.constant 0 : index
    %11 = vector.load %arg5[%c0_8, %c0_9] : memref<1x512xf32, #tpu.memory_space<vmem>>, vector<1x512xf32>
    %12 = vector.broadcast %11 : vector<1x512xf32> to vector<2x512xf32>
    %13 = arith.addf %10, %12 : vector<2x512xf32>
    %14 = arith.truncf %13 : vector<2x512xf32> to vector<2x512xbf16>
    %c0_10 = arith.constant 0 : index
    %c0_11 = arith.constant 0 : index
    %15 = vector.load %arg6[%c0_10, %c0_11] : memref<512x256xbf16, #tpu.memory_space<vmem>>, vector<512x256xbf16>
    %cst_12 = arith.constant dense<0.000000e+00> : vector<2x256xf32>
    %16 = tpu.matmul %14, %15, %cst_12 {dimension_numbers = #tpu.dot_dimension_numbers<[1], [0], [0], [1], [0, 0, 1, 1], [], []>} : vector<2x512xbf16>, vector<512x256xbf16>, vector<2x256xf32> -> vector<2x256xf32>
    %c0_13 = arith.constant 0 : index
    %c0_14 = arith.constant 0 : index
    %17 = vector.load %arg7[%c0_13, %c0_14] : memref<1x256xf32, #tpu.memory_space<vmem>>, vector<1x256xf32>
    %18 = vector.broadcast %17 : vector<1x256xf32> to vector<2x256xf32>
    %19 = arith.addf %16, %18 : vector<2x256xf32>
    %20 = arith.truncf %19 : vector<2x256xf32> to vector<2x256xbf16>
    %c0_15 = arith.constant 0 : index
    %c0_16 = arith.constant 0 : index
    %21 = vector.load %arg8[%c0_15, %c0_16] : memref<256x128xbf16, #tpu.memory_space<vmem>>, vector<256x128xbf16>
    %cst_17 = arith.constant dense<0.000000e+00> : vector<2x128xf32>
    %22 = tpu.matmul %20, %21, %cst_17 {dimension_numbers = #tpu.dot_dimension_numbers<[1], [0], [0], [1], [0, 0, 1, 1], [], []>} : vector<2x256xbf16>, vector<256x128xbf16>, vector<2x128xf32> -> vector<2x128xf32>
    %c0_18 = arith.constant 0 : index
    %c0_19 = arith.constant 0 : index
    %23 = vector.load %arg9[%c0_18, %c0_19] : memref<1x128xf32, #tpu.memory_space<vmem>>, vector<1x128xf32>
    %24 = vector.broadcast %23 : vector<1x128xf32> to vector<2x128xf32>
    %25 = arith.addf %22, %24 : vector<2x128xf32>
    %c0_20 = arith.constant 0 : index
    %c0_21 = arith.constant 0 : index
    %26 = vector.load %arg10[%c0_20, %c0_21] : memref<2x128xf32, #tpu.memory_space<vmem>>, vector<2x128xf32>
    tpu.vector_store %arg10[%c0_20, %c0_21], %25 {strides = array<i32>} : memref<2x128xf32, #tpu.memory_space<vmem>>, vector<2x128xf32>,
    return
  }
  func.func @transform_0(%arg0: i32) -> (i32, i32) {
    %c0_i32 = arith.constant 0 : i32
    %c0_i32_0 = arith.constant 0 : i32
    %c0_i32_1 = arith.constant 0 : i32
    return %c0_i32, %c0_i32_0 : i32, i32
  }
  func.func @transform_1(%arg0: i32) -> (i32, i32) {
    %c0_i32 = arith.constant 0 : i32
    %c0_i32_0 = arith.constant 0 : i32
    %c0_i32_1 = arith.constant 0 : i32
    return %c0_i32, %c0_i32_0 : i32, i32
  }
  func.func @transform_2(%arg0: i32) -> (i32, i32) {
    %c0_i32 = arith.constant 0 : i32
    %c0_i32_0 = arith.constant 0 : i32
    %c0_i32_1 = arith.constant 0 : i32
    return %c0_i32, %c0_i32_0 : i32, i32
  }
  func.func @transform_3(%arg0: i32) -> (i32, i32) {
    %c0_i32 = arith.constant 0 : i32
    %c0_i32_0 = arith.constant 0 : i32
    %c0_i32_1 = arith.constant 0 : i32
    return %c0_i32, %c0_i32_0 : i32, i32
  }
  func.func @transform_4(%arg0: i32) -> (i32, i32) {
    %c0_i32 = arith.constant 0 : i32
    %c0_i32_0 = arith.constant 0 : i32
    %c0_i32_1 = arith.constant 0 : i32
    return %c0_i32, %c0_i32_0 : i32, i32
  }
  func.func @transform_5(%arg0: i32) -> (i32, i32) {
    %c0_i32 = arith.constant 0 : i32
    %c0_i32_0 = arith.constant 0 : i32
    %c0_i32_1 = arith.constant 0 : i32
    return %c0_i32, %c0_i32_0 : i32, i32
  }
  func.func @transform_6(%arg0: i32) -> (i32, i32) {
    %c0_i32 = arith.constant 0 : i32
    %c0_i32_0 = arith.constant 0 : i32
    %c0_i32_1 = arith.constant 0 : i32
    return %c0_i32, %c0_i32_0 : i32, i32
  }
  func.func @transform_7(%arg0: i32) -> (i32, i32) {
    %c0_i32 = arith.constant 0 : i32
    %c0_i32_0 = arith.constant 0 : i32
    %c0_i32_1 = arith.constant 0 : i32
    return %c0_i32, %c0_i32_0 : i32, i32
  }
  func.func @transform_8(%arg0: i32) -> (i32, i32) {
    %c0_i32 = arith.constant 0 : i32
    %c0_i32_0 = arith.constant 0 : i32
    %c0_i32_1 = arith.constant 0 : i32
    return %c0_i32, %c0_i32_0 : i32, i32
  }
  func.func @transform_9(%arg0: i32) -> (i32, i32) {
    %c0_i32 = arith.constant 0 : i32
    %c0_i32_0 = arith.constant 0 : i32
    %c0_i32_1 = arith.constant 0 : i32
    return %c0_i32, %c0_i32_0 : i32, i32
  }
}

</mosaic_0001>

<llo_original>
// kernel: model_forward.7
$region0: #{model_forward.7}
  #allocation0 [shape = 'u32[]', space=smem, size = 0x4, offset = 0x4, fixed_abs, tag = 'smem constant byte address 0x4 - core index']
  #allocation1 [shape = 'u32[144,128]{1,0:T(1,128)}', space=vmem, size = 0x12000, scoped, tag = 'internal scratch']
  %s0 = inlined_call_operand.vmem [shape: f32[2,64], index: 0, kind: input, shape index: {}]
  %s1 = inlined_call_operand.vmem [shape: bf16[64,32], index: 1, kind: input, shape index: {}]
  %s2 = inlined_call_operand.vmem [shape: f32[1,32], index: 2, kind: input, shape index: {}]
  %s3 = inlined_call_operand.vmem [shape: f32[2,32], index: 3, kind: output, shape index: {}]
  %s4 = sld [smem:[#allocation0]]
  $region22: #{model_forward.7} parent=0
    _
  %s6 = ssub.s32 1, %s4
  %s7 = scalar_select 0, %s6, %s4
  // Predicated region
  $region2: #{model_forward.7} parent=0 // pred_check
    _
  $region3: #{model_forward.7} parent=0 // pred_check_branch
    %9 = sbr.rel (0) target = $region5
  $region4: #{model_forward.7} parent=0 // pred_region
    _
  $region5: #{model_forward.7} parent=0 // pred_fallthru
    _
  // Predicated region
  $region6: #{model_forward.7} parent=0 // pred_check
    _
  $region7: #{model_forward.7} parent=0 // pred_check_branch
    %11 = sbr.rel (0) target = $region9
  $region8: #{model_forward.7} parent=0 // pred_region
    _
  $region9: #{model_forward.7} parent=0 // pred_fallthru
    _
  // Predicated region
  $region10: #{model_forward.7} parent=0 // pred_check
    _
  $region11: #{model_forward.7} parent=0 // pred_check_branch
    %13 = sbr.rel (0) target = $region13
  $region12: #{model_forward.7} parent=0 // pred_region
    _
  $region13: #{model_forward.7} parent=0 // pred_fallthru
    _
  %v15 = vld [vmem:[%s0] sm:$0x3]
  %v16 = vpack.c.bf16 %v15, %v15
  %v17 = vld [vmem:[%s1] sm:$0xf]
  %v18 = vld [vmem:[%s1 + $0x4] sm:$0xf]
  %v19 = vld [vmem:[%s1 + $0x8] sm:$0xf]
  %v20 = vld [vmem:[%s1 + $0xc] sm:$0xf]
  %v21 = vld [vmem:[%s1 + $0x10] sm:$0xf]
  %v22 = vld [vmem:[%s1 + $0x14] sm:$0xf]
  %v23 = vld [vmem:[%s1 + $0x18] sm:$0xf]
  %v24 = vld [vmem:[%s1 + $0x1c] sm:$0xf]
  %v25 = vld [vmem:[%s2] sm:$0x1]
  %v27 = vlaneseq
  %v28 = vshrl.u32 %v27, 7
  %v29 = vsub.s32 0, %v28
  %v30 = vrot.slane %v25, %v29
  %v40 = vunpack.c.l.b16 %v17
  %v41 = vunpack.c.l.b16 %v18
  %v42 = vunpack.c.l.b16 %v19
  %v43 = vunpack.c.l.b16 %v20
  %v44 = vunpack.c.l.b16 %v21
  %v45 = vunpack.c.l.b16 %v22
  %v46 = vunpack.c.l.b16 %v23
  %v47 = vunpack.c.l.b16 %v24
  %v48 = vpack.c.b16 %v41, %v40
  %v49 = vpack.c.b16 %v43, %v42
  %v50 = vpack.c.b16 %v45, %v44
  %v51 = vpack.c.b16 %v47, %v46
  %vm56 = vcmask 523264
  %v58 = vsel %vm56, %v16, 0
  %60 = vmatprep.subr.bf16.mxu0 0
  %61 = vmatpush1.bf16.msra.mxu0 0
  %62 = vmatprep.subr.bf16.mxu0 0
  %63 = vmatpush1.bf16.msra.mxu0 0
  %64 = vmatprep.subr.bf16.mxu0 0
  %65 = vmatpush1.bf16.msra.mxu0 0
  %66 = vmatprep.subr.bf16.mxu0 0
  %67 = vmatpush1.bf16.msra.mxu0 0
  %68 = vmatprep.subr.bf16.mxu0 0
  %69 = vmatpush1.bf16.msra.mxu0 %v51
  %70 = vmatprep.subr.bf16.mxu0 0
  %71 = vmatpush1.bf16.msra.mxu0 %v50
  %72 = vmatprep.subr.bf16.mxu0 0
  %73 = vmatpush1.bf16.msra.mxu0 %v49
  %74 = vmatprep.subr.bf16.mxu0 0
  %75 = vmatpush1.bf16.msra.mxu0 %v48
  %76 = vmatprep.subr.bf16.mxu0 0
  %77 = vmatpush2.bf16.msra.mxu0 0
  %78 = vmatprep.subr.bf16.mxu0 0
  %79 = vmatpush2.bf16.msra.mxu0 0
  %80 = vmatprep.subr.bf16.mxu0 0
  %81 = vmatpush2.bf16.msra.mxu0 0
  %82 = vmatprep.subr.bf16.mxu0 0
  %83 = vmatpush2.bf16.msra.mxu0 0
  %84 = vmatprep.subr.bf16.mxu0 0
  %85 = vmatpush2.bf16.msra.mxu0 0
  %86 = vmatprep.subr.bf16.mxu0 0
  %87 = vmatpush2.bf16.msra.mxu0 0
  %88 = vmatprep.subr.bf16.mxu0 0
  %89 = vmatpush2.bf16.msra.mxu0 0
  %90 = vmatprep.subr.bf16.mxu0 0
  %91 = vmatpush2.bf16.msra.mxu0 0
  %92 = vmatprep.mubr.bf16.mxu0 0
  %93 = vmatmul.mubr.bf16.gmra.mxu0 %v58
  %v94 = vpop.f32.mrf.mxu0
  %v95 = vadd.f32 %v30, %v94
  %v96 = vpop.f32.mrf.mxu0
  %v97 = vpop.f32.mrf.mxu0
  %v98 = vpop.f32.mrf.mxu0
  %99 = vdwg.mxu0
  %vm100 = vcmask 254976
  %101 = vst.msk [vmem:[%s3] sm:$0x3] %vm100, %v95
  // Predicated region
  $region14: #{model_forward.7} parent=0 // pred_check
    _
  $region15: #{model_forward.7} parent=0 // pred_check_branch
    %103 = sbr.rel (0) target = $region17
  $region16: #{model_forward.7} parent=0 // pred_region
    _
  $region17: #{model_forward.7} parent=0 // pred_fallthru
    _
  // Predicated region
  $region18: #{model_forward.7} parent=0 // pred_check
    _
  $region19: #{model_forward.7} parent=0 // pred_check_branch
    %105 = sbr.rel (0) target = $region21
  $region20: #{model_forward.7} parent=0 // pred_region
    _
  $region21: #{model_forward.7} parent=0 // pred_fallthru
    _

// kernel: model_forward.8
$region0: #{model_forward.8}
  #allocation0 [shape = 'u32[]', space=smem, size = 0x4, offset = 0x4, fixed_abs, tag = 'smem constant byte address 0x4 - core index']
  #allocation1 [shape = 'u32[144,128]{1,0:T(1,128)}', space=vmem, size = 0x12000, scoped, tag = 'internal scratch']
  %s0 = inlined_call_operand.vmem [shape: f32[18,32], index: 0, kind: input, shape index: {}]
  %s1 = inlined_call_operand.vmem [shape: f32[1,32], index: 1, kind: input, shape index: {}]
  %s2 = inlined_call_operand.vmem [shape: f32[1,32], index: 2, kind: input, shape index: {}]
  %s3 = inlined_call_operand.vmem [shape: f32[18,32], index: 3, kind: output, shape index: {}]
  %s4 = sld [smem:[#allocation0]]
  $region22: #{model_forward.8} parent=0
    _
  %s6 = ssub.s32 1, %s4
  %s7 = scalar_select 0, %s6, %s4
  // Predicated region
  $region2: #{model_forward.8} parent=0 // pred_check
    _
  $region3: #{model_forward.8} parent=0 // pred_check_branch
    %9 = sbr.rel (0) target = $region5
  $region4: #{model_forward.8} parent=0 // pred_region
    _
  $region5: #{model_forward.8} parent=0 // pred_fallthru
    _
  // Predicated region
  $region6: #{model_forward.8} parent=0 // pred_check
    _
  $region7: #{model_forward.8} parent=0 // pred_check_branch
    %11 = sbr.rel (0) target = $region9
  $region8: #{model_forward.8} parent=0 // pred_region
    _
  $region9: #{model_forward.8} parent=0 // pred_fallthru
    _
  // Predicated region
  $region10: #{model_forward.8} parent=0 // pred_check
    _
  $region11: #{model_forward.8} parent=0 // pred_check_branch
    %13 = sbr.rel (0) target = $region13
  $region12: #{model_forward.8} parent=0 // pred_region
    _
  $region13: #{model_forward.8} parent=0 // pred_fallthru
    _
  %v14 = vld [vmem:[%s0] sm:$0xff]
  %v15 = vld [vmem:[%s0 + $0x8] sm:$0xff]
  %v16 = vld [vmem:[%s0 + $0x10] sm:$0x3]
  %vm17 = vcmask 261120
  %v18 = vsel %vm17, %v14, 0.0
  %19 = vadd.xlane.f32.xlu0 %v18
  %v20 = vpop.xlane.xlu0 %19
  %v21 = vsel %vm17, %v15, 0.0
  %22 = vadd.xlane.f32.xlu0 %v21
  %v23 = vpop.xlane.xlu0 %22
  %vm24 = vcmask 254976
  %v25 = vsel %vm24, %v16, 0.0
  %26 = vadd.xlane.f32.xlu0 %v25
  %v27 = vpop.xlane.xlu0 %26
  %v28 = vrcp.pop 32.0
  %v29 = vmul.f32 %v20, %v28
  %v30 = vmul.f32 %v23, %v28
  %v31 = vmul.f32 %v27, %v28
  %v32 = vsub.f32 %v14, %v29
  %v33 = vsub.f32 %v15, %v30
  %v34 = vsub.f32 %v16, %v31
  %v35 = vmul.f32 %v32, %v32
  %v36 = vmul.f32 %v33, %v33
  %v37 = vmul.f32 %v34, %v34
  %v38 = vsel %vm17, %v35, 0.0
  %39 = vadd.xlane.f32.xlu0 %v38
  %v40 = vpop.xlane.xlu0 %39
  %v41 = vsel %vm17, %v36, 0.0
  %42 = vadd.xlane.f32.xlu0 %v41
  %v43 = vpop.xlane.xlu0 %42
  %v44 = vsel %vm24, %v37, 0.0
  %45 = vadd.xlane.f32.xlu0 %v44
  %v46 = vpop.xlane.xlu0 %45
  %v47 = vmul.f32 %v40, %v28
  %v48 = vmul.f32 %v43, %v28
  %v49 = vmul.f32 %v46, %v28
  %v50 = vadd.f32 %v47, 1e-12
  %v51 = vadd.f32 %v48, 1e-12
  %v52 = vadd.f32 %v49, 1e-12
  %v53 = vrsqrt.pop %v50
  %v54 = vrsqrt.pop %v51
  %v55 = vrsqrt.pop %v52
  %v56 = vmul.f32 %v32, %v53
  %v57 = vmul.f32 %v33, %v54
  %v58 = vmul.f32 %v34, %v55
  %v59 = vld [vmem:[%s1] sm:$0x1]
  %v61 = vlaneseq
  %v62 = vshrl.u32 %v61, 7
  %v63 = vsub.s32 0, %v62
  %v64 = vrot.slane %v59, %v63
  %v66 = vmul.f32 %v56, %v64
  %v67 = vmul.f32 %v57, %v64
  %v68 = vmul.f32 %v58, %v64
  %v69 = vld [vmem:[%s2] sm:$0x1]
  %v71 = vlaneseq
  %v72 = vshrl.u32 %v71, 7
  %v73 = vsub.s32 0, %v72
  %v74 = vrot.slane %v69, %v73
  %v76 = vadd.f32 %v66, %v74
  %v77 = vadd.f32 %v67, %v74
  %v78 = vadd.f32 %v68, %v74
  %79 = vst.msk [vmem:[%s3] sm:$0xff] %vm17, %v76
  %80 = vst.msk [vmem:[%s3 + $0x8] sm:$0xff] %vm17, %v77
  %81 = vst.msk [vmem:[%s3 + $0x10] sm:$0x3] %vm24, %v78
  // Predicated region
  $region14: #{model_forward.8} parent=0 // pred_check
    _
  $region15: #{model_forward.8} parent=0 // pred_check_branch
    %83 = sbr.rel (0) target = $region17
  $region16: #{model_forward.8} parent=0 // pred_region
    _
  $region17: #{model_forward.8} parent=0 // pred_fallthru
    _
  // Predicated region
  $region18: #{model_forward.8} parent=0 // pred_check
    _
  $region19: #{model_forward.8} parent=0 // pred_check_branch
    %85 = sbr.rel (0) target = $region21
  $region20: #{model_forward.8} parent=0 // pred_region
    _
  $region21: #{model_forward.8} parent=0 // pred_fallthru
    _

// kernel: model_forward.10
$region0: #{model_forward.10}
  #allocation0 [shape = 'u32[]', space=smem, size = 0x4, offset = 0x4, fixed_abs, tag = 'smem constant byte address 0x4 - core index']
  #allocation1 [shape = 'u32[144,128]{1,0:T(1,128)}', space=vmem, size = 0x12000, scoped, tag = 'internal scratch']
  %s0 = inlined_call_operand.vmem [shape: f32[18,32], index: 0, kind: input, shape index: {}]
  %s1 = inlined_call_operand.vmem [shape: bf16[32,64], index: 1, kind: input, shape index: {}]
  %s2 = inlined_call_operand.vmem [shape: f32[1,64], index: 2, kind: input, shape index: {}]
  %s3 = inlined_call_operand.vmem [shape: bf16[64,32], index: 3, kind: input, shape index: {}]
  %s4 = inlined_call_operand.vmem [shape: f32[1,32], index: 4, kind: input, shape index: {}]
  %s5 = inlined_call_operand.vmem [shape: f32[1,32], index: 5, kind: input, shape index: {}]
  %s6 = inlined_call_operand.vmem [shape: f32[1,32], index: 6, kind: input, shape index: {}]
  %s7 = inlined_call_operand.vmem [shape: f32[18,32], index: 7, kind: output, shape index: {}]
  %s8 = sld [smem:[#allocation0]]
  $region38: #{model_forward.10} parent=0
    _
  %s10 = ssub.s32 1, %s8
  %s11 = scalar_select 0, %s10, %s8
  // Predicated region
  $region2: #{model_forward.10} parent=0 // pred_check
    _
  $region3: #{model_forward.10} parent=0 // pred_check_branch
    %13 = sbr.rel (0) target = $region5
  $region4: #{model_forward.10} parent=0 // pred_region
    _
  $region5: #{model_forward.10} parent=0 // pred_fallthru
    _
  // Predicated region
  $region6: #{model_forward.10} parent=0 // pred_check
    _
  $region7: #{model_forward.10} parent=0 // pred_check_branch
    %15 = sbr.rel (0) target = $region9
  $region8: #{model_forward.10} parent=0 // pred_region
    _
  $region9: #{model_forward.10} parent=0 // pred_fallthru
    _
  // Predicated region
  $region10: #{model_forward.10} parent=0 // pred_check
    _
  $region11: #{model_forward.10} parent=0 // pred_check_branch
    %17 = sbr.rel (0) target = $region13
  $region12: #{model_forward.10} parent=0 // pred_region
    _
  $region13: #{model_forward.10} parent=0 // pred_fallthru
    _
  // Predicated region
  $region14: #{model_forward.10} parent=0 // pred_check
    _
  $region15: #{model_forward.10} parent=0 // pred_check_branch
    %19 = sbr.rel (0) target = $region17
  $region16: #{model_forward.10} parent=0 // pred_region
    _
  $region17: #{model_forward.10} parent=0 // pred_fallthru
    _
  // Predicated region
  $region18: #{model_forward.10} parent=0 // pred_check
    _
  $region19: #{model_forward.10} parent=0 // pred_check_branch
    %21 = sbr.rel (0) target = $region21
  $region20: #{model_forward.10} parent=0 // pred_region
    _
  $region21: #{model_forward.10} parent=0 // pred_fallthru
    _
  // Predicated region
  $region22: #{model_forward.10} parent=0 // pred_check
    _
  $region23: #{model_forward.10} parent=0 // pred_check_branch
    %23 = sbr.rel (0) target = $region25
  $region24: #{model_forward.10} parent=0 // pred_region
    _
  $region25: #{model_forward.10} parent=0 // pred_fallthru
    _
  // Predicated region
  $region26: #{model_forward.10} parent=0 // pred_check
    _
  $region27: #{model_forward.10} parent=0 // pred_check_branch
    %25 = sbr.rel (0) target = $region29
  $region28: #{model_forward.10} parent=0 // pred_region
    _
  $region29: #{model_forward.10} parent=0 // pred_fallthru
    _
  %v27 = vld [vmem:[%s0] sm:$0xff]
  %v28 = vld [vmem:[%s0 + $0x8] sm:$0xff]
  %v29 = vld [vmem:[%s0 + $0x10] sm:$0x3]
  %v30 = vpack.c.bf16 %v28, %v27
  %v31 = vpack.c.bf16 %v29, %v29
  %v32 = vld [vmem:[%s1] sm:$0xf]
  %v33 = vld [vmem:[%s1 + $0x4] sm:$0xf]
  %v34 = vld [vmem:[%s1 + $0x8] sm:$0xf]
  %v35 = vld [vmem:[%s1 + $0xc] sm:$0xf]
  %v36 = vld [vmem:[%s2] sm:$0x1]
  %v38 = vlaneseq
  %v39 = vshrl.u32 %v38, 7
  %v40 = vsub.s32 0, %v39
  %v41 = vrot.slane %v36, %v40
  %v47 = vunpack.c.l.b16 %v32
  %v48 = vunpack.c.l.b16 %v33
  %v49 = vunpack.c.l.b16 %v34
  %v50 = vunpack.c.l.b16 %v35
  %v51 = vpack.c.b16 %v48, %v47
  %v52 = vpack.c.b16 %v50, %v49
  %vm55 = vcmask 261120
  %v57 = vsel %vm55, %v30, 0
  %v60 = vsel %vm55, %v31, 0
  %62 = vmatprep.subr.bf16.mxu0 0
  %63 = vmatpush1.bf16.msra.mxu0 0
  %64 = vmatprep.subr.bf16.mxu0 0
  %65 = vmatpush1.bf16.msra.mxu0 0
  %66 = vmatprep.subr.bf16.mxu0 0
  %67 = vmatpush1.bf16.msra.mxu0 0
  %68 = vmatprep.subr.bf16.mxu0 0
  %69 = vmatpush1.bf16.msra.mxu0 0
  %70 = vmatprep.subr.bf16.mxu0 0
  %71 = vmatpush1.bf16.msra.mxu0 0
  %72 = vmatprep.subr.bf16.mxu0 0
  %73 = vmatpush1.bf16.msra.mxu0 0
  %74 = vmatprep.subr.bf16.mxu0 0
  %75 = vmatpush1.bf16.msra.mxu0 %v52
  %76 = vmatprep.subr.bf16.mxu0 0
  %77 = vmatpush1.bf16.msra.mxu0 %v51
  %78 = vmatprep.subr.bf16.mxu0 0
  %79 = vmatpush2.bf16.msra.mxu0 0
  %80 = vmatprep.subr.bf16.mxu0 0
  %81 = vmatpush2.bf16.msra.mxu0 0
  %82 = vmatprep.subr.bf16.mxu0 0
  %83 = vmatpush2.bf16.msra.mxu0 0
  %84 = vmatprep.subr.bf16.mxu0 0
  %85 = vmatpush2.bf16.msra.mxu0 0
  %86 = vmatprep.subr.bf16.mxu0 0
  %87 = vmatpush2.bf16.msra.mxu0 0
  %88 = vmatprep.subr.bf16.mxu0 0
  %89 = vmatpush2.bf16.msra.mxu0 0
  %90 = vmatprep.subr.bf16.mxu0 0
  %91 = vmatpush2.bf16.msra.mxu0 0
  %92 = vmatprep.subr.bf16.mxu0 0
  %93 = vmatpush2.bf16.msra.mxu0 0
  %94 = vmatprep.mubr.bf16.mxu0 0
  %95 = vmatmul.mubr.bf16.gmra.mxu0 %v57
  %v96 = vpop.f32.mrf.mxu0
  %v97 = vadd.f32 %v41, %v96
  %v98 = vpop.f32.mrf.mxu0
  %v99 = vpop.f32.mrf.mxu0
  %v100 = vadd.f32 %v41, %v99
  %v101 = vpop.f32.mrf.mxu0
  %102 = vmatprep.mubr.bf16.mxu0 0
  %103 = vmatmul.mubr.bf16.gmra.mxu0 %v60
  %v104 = vpop.f32.mrf.mxu0
  %v105 = vadd.f32 %v41, %v104
  %v106 = vpop.f32.mrf.mxu0
  %v107 = vpop.f32.mrf.mxu0
  %v108 = vpop.f32.mrf.mxu0
  %109 = vdwg.mxu0
  %v110 = vmul.f32 %v97, 0.5
  %v111 = vmul.f32 %v100, 0.5
  %v112 = vmul.f32 %v105, 0.5
  %v113 = vmul.f32 %v97, 0.044715
  %v114 = vmul.f32 %v100, 0.044715
  %v115 = vmul.f32 %v105, 0.044715
  %v116 = vmul.f32 %v113, %v97
  %v117 = vmul.f32 %v114, %v100
  %v118 = vmul.f32 %v115, %v105
  %v119 = vmul.f32 %v116, %v97
  %v120 = vmul.f32 %v117, %v100
  %v121 = vmul.f32 %v118, %v105
  %v122 = vadd.f32 %v97, %v119
  %v123 = vadd.f32 %v100, %v120
  %v124 = vadd.f32 %v105, %v121
  %v125 = vmul.f32 %v122, 0.7978846
  %v126 = vmul.f32 %v123, 0.7978846
  %v127 = vmul.f32 %v124, 0.7978846
  %v128 = vtanh.pop %v125
  %v129 = vtanh.pop %v126
  %v130 = vtanh.pop %v127
  %v131 = vadd.f32 %v128, 1.0
  %v132 = vadd.f32 %v129, 1.0
  %v133 = vadd.f32 %v130, 1.0
  %v134 = vmul.f32 %v110, %v131
  %v135 = vmul.f32 %v111, %v132
  %v136 = vmul.f32 %v112, %v133
  %v137 = vpack.c.bf16 %v135, %v134
  %v138 = vpack.c.bf16 %v136, %v136
  %v139 = vld [vmem:[%s3] sm:$0xf]
  %v140 = vld [vmem:[%s3 + $0x4] sm:$0xf]
  %v141 = vld [vmem:[%s3 + $0x8] sm:$0xf]
  %v142 = vld [vmem:[%s3 + $0xc] sm:$0xf]
  %v143 = vld [vmem:[%s3 + $0x10] sm:$0xf]
  %v144 = vld [vmem:[%s3 + $0x14] sm:$0xf]
  %v145 = vld [vmem:[%s3 + $0x18] sm:$0xf]
  %v146 = vld [vmem:[%s3 + $0x1c] sm:$0xf]
  %v147 = vld [vmem:[%s4] sm:$0x1]
  %v149 = vlaneseq
  %v150 = vshrl.u32 %v149, 7
  %v151 = vsub.s32 0, %v150
  %v152 = vrot.slane %v147, %v151
  %v162 = vunpack.c.l.b16 %v139
  %v163 = vunpack.c.l.b16 %v140
  %v164 = vunpack.c.l.b16 %v141
  %v165 = vunpack.c.l.b16 %v142
  %v166 = vunpack.c.l.b16 %v143
  %v167 = vunpack.c.l.b16 %v144
  %v168 = vunpack.c.l.b16 %v145
  %v169 = vunpack.c.l.b16 %v146
  %v170 = vpack.c.b16 %v163, %v162
  %v171 = vpack.c.b16 %v165, %v164
  %v172 = vpack.c.b16 %v167, %v166
  %v173 = vpack.c.b16 %v169, %v168
  %vm178 = vcmask 523264
  %v180 = vsel %vm178, %v137, 0
  %v183 = vsel %vm178, %v138, 0
  %185 = vmatprep.subr.bf16.mxu0 0
  %186 = vmatpush1.bf16.msra.mxu0 0
  %187 = vmatprep.subr.bf16.mxu0 0
  %188 = vmatpush1.bf16.msra.mxu0 0
  %189 = vmatprep.subr.bf16.mxu0 0
  %190 = vmatpush1.bf16.msra.mxu0 0
  %191 = vmatprep.subr.bf16.mxu0 0
  %192 = vmatpush1.bf16.msra.mxu0 0
  %193 = vmatprep.subr.bf16.mxu0 0
  %194 = vmatpush1.bf16.msra.mxu0 %v173
  %195 = vmatprep.subr.bf16.mxu0 0
  %196 = vmatpush1.bf16.msra.mxu0 %v172
  %197 = vmatprep.subr.bf16.mxu0 0
  %198 = vmatpush1.bf16.msra.mxu0 %v171
  %199 = vmatprep.subr.bf16.mxu0 0
  %200 = vmatpush1.bf16.msra.mxu0 %v170
  %201 = vmatprep.subr.bf16.mxu0 0
  %202 = vmatpush2.bf16.msra.mxu0 0
  %203 = vmatprep.subr.bf16.mxu0 0
  %204 = vmatpush2.bf16.msra.mxu0 0
  %205 = vmatprep.subr.bf16.mxu0 0
  %206 = vmatpush2.bf16.msra.mxu0 0
  %207 = vmatprep.subr.bf16.mxu0 0
  %208 = vmatpush2.bf16.msra.mxu0 0
  %209 = vmatprep.subr.bf16.mxu0 0
  %210 = vmatpush2.bf16.msra.mxu0 0
  %211 = vmatprep.subr.bf16.mxu0 0
  %212 = vmatpush2.bf16.msra.mxu0 0
  %213 = vmatprep.subr.bf16.mxu0 0
  %214 = vmatpush2.bf16.msra.mxu0 0
  %215 = vmatprep.subr.bf16.mxu0 0
  %216 = vmatpush2.bf16.msra.mxu0 0
  %217 = vmatprep.mubr.bf16.mxu0 0
  %218 = vmatmul.mubr.bf16.gmra.mxu0 %v180
  %v219 = vpop.f32.mrf.mxu0
  %v220 = vadd.f32 %v152, %v219
  %v221 = vpop.f32.mrf.mxu0
  %v222 = vpop.f32.mrf.mxu0
  %v223 = vadd.f32 %v152, %v222
  %v224 = vpop.f32.mrf.mxu0
  %225 = vmatprep.mubr.bf16.mxu0 0
  %226 = vmatmul.mubr.bf16.gmra.mxu0 %v183
  %v227 = vpop.f32.mrf.mxu0
  %v228 = vadd.f32 %v152, %v227
  %v229 = vpop.f32.mrf.mxu0
  %v230 = vpop.f32.mrf.mxu0
  %v231 = vpop.f32.mrf.mxu0
  %232 = vdwg.mxu0
  %v233 = vadd.f32 %v220, %v27
  %v234 = vadd.f32 %v223, %v28
  %v235 = vadd.f32 %v228, %v29
  %v236 = vsel %vm55, %v233, 0.0
  %237 = vadd.xlane.f32.xlu0 %v236
  %v238 = vpop.xlane.xlu0 %237
  %v239 = vsel %vm55, %v234, 0.0
  %240 = vadd.xlane.f32.xlu0 %v239
  %v241 = vpop.xlane.xlu0 %240
  %vm242 = vcmask 254976
  %v243 = vsel %vm242, %v235, 0.0
  %244 = vadd.xlane.f32.xlu0 %v243
  %v245 = vpop.xlane.xlu0 %244
  %v246 = vrcp.pop 32.0
  %v247 = vmul.f32 %v238, %v246
  %v248 = vmul.f32 %v241, %v246
  %v249 = vmul.f32 %v245, %v246
  %v250 = vsub.f32 %v233, %v247
  %v251 = vsub.f32 %v234, %v248
  %v252 = vsub.f32 %v235, %v249
  %v253 = vmul.f32 %v250, %v250
  %v254 = vmul.f32 %v251, %v251
  %v255 = vmul.f32 %v252, %v252
  %v256 = vsel %vm55, %v253, 0.0
  %257 = vadd.xlane.f32.xlu0 %v256
  %v258 = vpop.xlane.xlu0 %257
  %v259 = vsel %vm55, %v254, 0.0
  %260 = vadd.xlane.f32.xlu0 %v259
  %v261 = vpop.xlane.xlu0 %260
  %v262 = vsel %vm242, %v255, 0.0
  %263 = vadd.xlane.f32.xlu0 %v262
  %v264 = vpop.xlane.xlu0 %263
  %v265 = vmul.f32 %v258, %v246
  %v266 = vmul.f32 %v261, %v246
  %v267 = vmul.f32 %v264, %v246
  %v268 = vadd.f32 %v265, 1e-12
  %v269 = vadd.f32 %v266, 1e-12
  %v270 = vadd.f32 %v267, 1e-12
  %v271 = vrsqrt.pop %v268
  %v272 = vrsqrt.pop %v269
  %v273 = vrsqrt.pop %v270
  %v274 = vmul.f32 %v250, %v271
  %v275 = vmul.f32 %v251, %v272
  %v276 = vmul.f32 %v252, %v273
  %v277 = vld [vmem:[%s5] sm:$0x1]
  %v279 = vlaneseq
  %v280 = vshrl.u32 %v279, 7
  %v281 = vsub.s32 0, %v280
  %v282 = vrot.slane %v277, %v281
  %v284 = vmul.f32 %v274, %v282
  %v285 = vmul.f32 %v275, %v282
  %v286 = vmul.f32 %v276, %v282
  %v287 = vld [vmem:[%s6] sm:$0x1]
  %v289 = vlaneseq
  %v290 = vshrl.u32 %v289, 7
  %v291 = vsub.s32 0, %v290
  %v292 = vrot.slane %v287, %v291
  %v294 = vadd.f32 %v284, %v292
  %v295 = vadd.f32 %v285, %v292
  %v296 = vadd.f32 %v286, %v292
  %297 = vst.msk [vmem:[%s7] sm:$0xff] %vm55, %v294
  %298 = vst.msk [vmem:[%s7 + $0x8] sm:$0xff] %vm55, %v295
  %299 = vst.msk [vmem:[%s7 + $0x10] sm:$0x3] %vm242, %v296
  // Predicated region
  $region30: #{model_forward.10} parent=0 // pred_check
    _
  $region31: #{model_forward.10} parent=0 // pred_check_branch
    %301 = sbr.rel (0) target = $region33
  $region32: #{model_forward.10} parent=0 // pred_region
    _
  $region33: #{model_forward.10} parent=0 // pred_fallthru
    _
  // Predicated region
  $region34: #{model_forward.10} parent=0 // pred_check
    _
  $region35: #{model_forward.10} parent=0 // pred_check_branch
    %303 = sbr.rel (0) target = $region37
  $region36: #{model_forward.10} parent=0 // pred_region
    _
  $region37: #{model_forward.10} parent=0 // pred_fallthru
    _

// kernel: model_forward.9
$region0: #{model_forward.9}
  #allocation0 [shape = 'u32[]', space=smem, size = 0x4, offset = 0x4, fixed_abs, tag = 'smem constant byte address 0x4 - core index']
  #allocation1 [shape = 'u32[144,128]{1,0:T(1,128)}', space=vmem, size = 0x12000, scoped, tag = 'internal scratch']
  %s0 = inlined_call_operand.vmem [shape: f32[2,9,32], index: 0, kind: input, shape index: {}]
  %s1 = inlined_call_operand.vmem [shape: f32[2,1,9], index: 1, kind: input, shape index: {}]
  %s2 = inlined_call_operand.vmem [shape: bf16[32,96], index: 2, kind: input, shape index: {}]
  %s3 = inlined_call_operand.vmem [shape: f32[1,96], index: 3, kind: input, shape index: {}]
  %s4 = inlined_call_operand.vmem [shape: bf16[32,32], index: 4, kind: input, shape index: {}]
  %s5 = inlined_call_operand.vmem [shape: f32[1,32], index: 5, kind: input, shape index: {}]
  %s6 = inlined_call_operand.vmem [shape: f32[1,32], index: 6, kind: input, shape index: {}]
  %s7 = inlined_call_operand.vmem [shape: f32[1,32], index: 7, kind: input, shape index: {}]
  %s8 = inlined_call_operand.vmem [shape: f32[2,9,32], index: 8, kind: output, shape index: {}]
  %s9 = sld [smem:[#allocation0]]
  $region65: #{model_forward.9} parent=0
    _
  %s11 = ssub.s32 1, %s9
  %s12 = scalar_select 0, %s11, %s9
  loop: start=0, step=1, limit=4
  $region2: #{model_forward.9} parent=0 // loop_pre_header
    _
  $region3: #{model_forward.9} parent=0 // loop_header
    %s14 = sphi 0, %s18
    %p15 = scmp.ge.s32.totalorder %s14, 4
    %s24 = sphi 0, %s26
    %s27 = sphi 0, %s24
    %s28 = sphi 0, %s27
    %s44 = sphi 0, %s28
    %s50 = sphi 0, %s52
    %s53 = sphi 0, %s50
    %s54 = sphi 0, %s53
    %s70 = sphi 0, %s54
    %s74 = sphi 0, %s74
    %s76 = sphi 0, %s74
    %s77 = sphi 0, %s76
    %s91 = sphi 0, %s77
    %s95 = sphi 0, %s95
    %s97 = sphi 0, %s95
    %s98 = sphi 0, %s97
    %s112 = sphi 0, %s98
    %s116 = sphi 0, %s116
    %s118 = sphi 0, %s116
    %s119 = sphi 0, %s118
    %s133 = sphi 0, %s119
    %s137 = sphi 0, %s137
    %s139 = sphi 0, %s137
    %s140 = sphi 0, %s139
    %s154 = sphi 0, %s140
    %s158 = sphi 0, %s158
    %s160 = sphi 0, %s158
    %s161 = sphi 0, %s160
    %s175 = sphi 0, %s161
    %s179 = sphi 0, %s179
    %s181 = sphi 0, %s179
    %s182 = sphi 0, %s181
    %s196 = sphi 0, %s182
    %s202 = sphi 0, %s204
    %s205 = sphi 0, %s202
    %s206 = sphi 0, %s205
    %s222 = sphi 0, %s206
  $region4: #{model_forward.9} parent=0 // loop_header_branch
    %17 = sbr.rel (%p15) target = $region8
  $region5: #{model_forward.9} parent=0 // loop_body
    %s19 = ssub.s32 %s14, 1
    %s20 = ssub.s32 %s14, 2
    %s21 = sadd.s32 %s14, 1
    %s22 = ssub.s32 %s14, %s21
    %p23 = scmp.eq.s32.totalorder %s22, 0
    %s25 = sadd.s32 %s24, 1
    %s26 = scalar_select %p23, %s24, %s25
    %p29 = pneg %p23
    %p30 = scmp.eq.s32.totalorder %s14, 1
    %p31 = por %p29, %p30
    %p32 = scmp.ne.s32.totalorder %s24, %s27
    %p33 = scmp.eq.s32.totalorder %s14, 0
    %p34 = por %p32, %p33
    %p35 = scmp.ne.s32.totalorder %s24, %s27
    %p36 = scmp.eq.s32.totalorder %s19, 1
    %p37 = por %p35, %p36
    %p38 = scmp.ne.s32.totalorder %s27, %s28
    %p39 = scmp.eq.s32.totalorder %s19, 0
    %p40 = por %p38, %p39
    %p41 = scmp.ne.s32.totalorder %s27, %s28
    %p42 = scmp.eq.s32.totalorder %s20, 1
    %p43 = por %p41, %p42
    %p45 = scmp.ne.s32.totalorder %s28, %s44
    %p46 = scmp.eq.s32.totalorder %s20, 0
    %p47 = por %p45, %p46
    %s48 = ssub.s32 %s14, %s21
    %p49 = scmp.eq.s32.totalorder %s48, 0
    %s51 = sadd.s32 %s50, 1
    %s52 = scalar_select %p49, %s50, %s51
    %p55 = pneg %p49
    %p56 = scmp.eq.s32.totalorder %s14, 1
    %p57 = por %p55, %p56
    %p58 = scmp.ne.s32.totalorder %s50, %s53
    %p59 = scmp.eq.s32.totalorder %s14, 0
    %p60 = por %p58, %p59
    %p61 = scmp.ne.s32.totalorder %s50, %s53
    %p62 = scmp.eq.s32.totalorder %s19, 1
    %p63 = por %p61, %p62
    %p64 = scmp.ne.s32.totalorder %s53, %s54
    %p65 = scmp.eq.s32.totalorder %s19, 0
    %p66 = por %p64, %p65
    %p67 = scmp.ne.s32.totalorder %s53, %s54
    %p68 = scmp.eq.s32.totalorder %s20, 1
    %p69 = por %p67, %p68
    %p71 = scmp.ne.s32.totalorder %s54, %s70
    %p72 = scmp.eq.s32.totalorder %s20, 0
    %p73 = por %p71, %p72
    %s75 = sadd.s32 %s74, 1
    %p78 = scmp.eq.s32.totalorder %s14, 1
    %p79 = scmp.ne.s32.totalorder %s74, %s76
    %p80 = scmp.eq.s32.totalorder %s14, 0
    %p81 = por %p79, %p80
    %p82 = scmp.ne.s32.totalorder %s74, %s76
    %p83 = scmp.eq.s32.totalorder %s19, 1
    %p84 = por %p82, %p83
    %p85 = scmp.ne.s32.totalorder %s76, %s77
    %p86 = scmp.eq.s32.totalorder %s19, 0
    %p87 = por %p85, %p86
    %p88 = scmp.ne.s32.totalorder %s76, %s77
    %p89 = scmp.eq.s32.totalorder %s20, 1
    %p90 = por %p88, %p89
    %p92 = scmp.ne.s32.totalorder %s77, %s91
    %p93 = scmp.eq.s32.totalorder %s20, 0
    %p94 = por %p92, %p93
    %s96 = sadd.s32 %s95, 1
    %p99 = scmp.eq.s32.totalorder %s14, 1
    %p100 = scmp.ne.s32.totalorder %s95, %s97
    %p101 = scmp.eq.s32.totalorder %s14, 0
    %p102 = por %p100, %p101
    %p103 = scmp.ne.s32.totalorder %s95, %s97
    %p104 = scmp.eq.s32.totalorder %s19, 1
    %p105 = por %p103, %p104
    %p106 = scmp.ne.s32.totalorder %s97, %s98
    %p107 = scmp.eq.s32.totalorder %s19, 0
    %p108 = por %p106, %p107
    %p109 = scmp.ne.s32.totalorder %s97, %s98
    %p110 = scmp.eq.s32.totalorder %s20, 1
    %p111 = por %p109, %p110
    %p113 = scmp.ne.s32.totalorder %s98, %s112
    %p114 = scmp.eq.s32.totalorder %s20, 0
    %p115 = por %p113, %p114
    %s117 = sadd.s32 %s116, 1
    %p120 = scmp.eq.s32.totalorder %s14, 1
    %p121 = scmp.ne.s32.totalorder %s116, %s118
    %p122 = scmp.eq.s32.totalorder %s14, 0
    %p123 = por %p121, %p122
    %p124 = scmp.ne.s32.totalorder %s116, %s118
    %p125 = scmp.eq.s32.totalorder %s19, 1
    %p126 = por %p124, %p125
    %p127 = scmp.ne.s32.totalorder %s118, %s119
    %p128 = scmp.eq.s32.totalorder %s19, 0
    %p129 = por %p127, %p128
    %p130 = scmp.ne.s32.totalorder %s118, %s119
    %p131 = scmp.eq.s32.totalorder %s20, 1
    %p132 = por %p130, %p131
    %p134 = scmp.ne.s32.totalorder %s119, %s133
    %p135 = scmp.eq.s32.totalorder %s20, 0
    %p136 = por %p134, %p135
    %s138 = sadd.s32 %s137, 1
    %p141 = scmp.eq.s32.totalorder %s14, 1
    %p142 = scmp.ne.s32.totalorder %s137, %s139
    %p143 = scmp.eq.s32.totalorder %s14, 0
    %p144 = por %p142, %p143
    %p145 = scmp.ne.s32.totalorder %s137, %s139
    %p146 = scmp.eq.s32.totalorder %s19, 1
    %p147 = por %p145, %p146
    %p148 = scmp.ne.s32.totalorder %s139, %s140
    %p149 = scmp.eq.s32.totalorder %s19, 0
    %p150 = por %p148, %p149
    %p151 = scmp.ne.s32.totalorder %s139, %s140
    %p152 = scmp.eq.s32.totalorder %s20, 1
    %p153 = por %p151, %p152
    %p155 = scmp.ne.s32.totalorder %s140, %s154
    %p156 = scmp.eq.s32.totalorder %s20, 0
    %p157 = por %p155, %p156
    %s159 = sadd.s32 %s158, 1
    %p162 = scmp.eq.s32.totalorder %s14, 1
    %p163 = scmp.ne.s32.totalorder %s158, %s160
    %p164 = scmp.eq.s32.totalorder %s14, 0
    %p165 = por %p163, %p164
    %p166 = scmp.ne.s32.totalorder %s158, %s160
    %p167 = scmp.eq.s32.totalorder %s19, 1
    %p168 = por %p166, %p167
    %p169 = scmp.ne.s32.totalorder %s160, %s161
    %p170 = scmp.eq.s32.totalorder %s19, 0
    %p171 = por %p169, %p170
    %p172 = scmp.ne.s32.totalorder %s160, %s161
    %p173 = scmp.eq.s32.totalorder %s20, 1
    %p174 = por %p172, %p173
    %p176 = scmp.ne.s32.totalorder %s161, %s175
    %p177 = scmp.eq.s32.totalorder %s20, 0
    %p178 = por %p176, %p177
    %s180 = sadd.s32 %s179, 1
    %p183 = scmp.eq.s32.totalorder %s14, 1
    %p184 = scmp.ne.s32.totalorder %s179, %s181
    %p185 = scmp.eq.s32.totalorder %s14, 0
    %p186 = por %p184, %p185
    %p187 = scmp.ne.s32.totalorder %s179, %s181
    %p188 = scmp.eq.s32.totalorder %s19, 1
    %p189 = por %p187, %p188
    %p190 = scmp.ne.s32.totalorder %s181, %s182
    %p191 = scmp.eq.s32.totalorder %s19, 0
    %p192 = por %p190, %p191
    %p193 = scmp.ne.s32.totalorder %s181, %s182
    %p194 = scmp.eq.s32.totalorder %s20, 1
    %p195 = por %p193, %p194
    %p197 = scmp.ne.s32.totalorder %s182, %s196
    %p198 = scmp.eq.s32.totalorder %s20, 0
    %p199 = por %p197, %p198
    %s200 = ssub.s32 %s14, %s21
    %p201 = scmp.eq.s32.totalorder %s200, 0
    %s203 = sadd.s32 %s202, 1
    %s204 = scalar_select %p201, %s202, %s203
    %p207 = pneg %p201
    %p208 = scmp.eq.s32.totalorder %s14, 1
    %p209 = por %p207, %p208
    %p210 = scmp.ne.s32.totalorder %s202, %s205
    %p211 = scmp.eq.s32.totalorder %s14, 0
    %p212 = por %p210, %p211
    %p213 = scmp.ne.s32.totalorder %s202, %s205
    %p214 = scmp.eq.s32.totalorder %s19, 1
    %p215 = por %p213, %p214
    %p216 = scmp.ne.s32.totalorder %s205, %s206
    %p217 = scmp.eq.s32.totalorder %s19, 0
    %p218 = por %p216, %p217
    %p219 = scmp.ne.s32.totalorder %s205, %s206
    %p220 = scmp.eq.s32.totalorder %s20, 1
    %p221 = por %p219, %p220
    %p223 = scmp.ne.s32.totalorder %s206, %s222
    %p224 = scmp.eq.s32.totalorder %s20, 0
    %p225 = por %p223, %p224
    %p226 = scmp.le.s32.totalorder 1, %s14
    %p227 = scmp.lt.s32.totalorder %s14, 3
    %p228 = pnand %p226, %p227
    %p229 = pneg %p228
    // Predicated region
    $region9: #{model_forward.9} parent=5 // pred_check
      _
    $region10: #{model_forward.9} parent=5 // pred_check_branch
      %231 = sbr.rel (%p228) target = $region12
    $region11: #{model_forward.9} parent=5 // pred_region
      %s232 = ssub.s32 %s14, 1
      // Predicated region
      $region13: #{model_forward.9} parent=11 // pred_check
        %p233 = pneg %p87
      $region14: #{model_forward.9} parent=11 // pred_check_branch
        %235 = sbr.rel (%p233) target = $region16
      $region15: #{model_forward.9} parent=11 // pred_region
        _
      $region16: #{model_forward.9} parent=11 // pred_fallthru
        _
      // Predicated region
      $region17: #{model_forward.9} parent=11 // pred_check
        %p236 = pneg %p108
      $region18: #{model_forward.9} parent=11 // pred_check_branch
        %238 = sbr.rel (%p236) target = $region20
      $region19: #{model_forward.9} parent=11 // pred_region
        _
      $region20: #{model_forward.9} parent=11 // pred_fallthru
        _
      // Predicated region
      $region21: #{model_forward.9} parent=11 // pred_check
        %p239 = pneg %p129
      $region22: #{model_forward.9} parent=11 // pred_check_branch
        %241 = sbr.rel (%p239) target = $region24
      $region23: #{model_forward.9} parent=11 // pred_region
        _
      $region24: #{model_forward.9} parent=11 // pred_fallthru
        _
      // Predicated region
      $region25: #{model_forward.9} parent=11 // pred_check
        %p242 = pneg %p150
      $region26: #{model_forward.9} parent=11 // pred_check_branch
        %244 = sbr.rel (%p242) target = $region28
      $region27: #{model_forward.9} parent=11 // pred_region
        _
      $region28: #{model_forward.9} parent=11 // pred_fallthru
        _
      // Predicated region
      $region29: #{model_forward.9} parent=11 // pred_check
        %p245 = pneg %p171
      $region30: #{model_forward.9} parent=11 // pred_check_branch
        %247 = sbr.rel (%p245) target = $region32
      $region31: #{model_forward.9} parent=11 // pred_region
        _
      $region32: #{model_forward.9} parent=11 // pred_fallthru
        _
      // Predicated region
      $region33: #{model_forward.9} parent=11 // pred_check
        %p248 = pneg %p192
      $region34: #{model_forward.9} parent=11 // pred_check_branch
        %250 = sbr.rel (%p248) target = $region36
      $region35: #{model_forward.9} parent=11 // pred_region
        _
      $region36: #{model_forward.9} parent=11 // pred_fallthru
        _
    $region12: #{model_forward.9} parent=5 // pred_fallthru
      _
    %p251 = scmp.lt.s32.totalorder %s14, 2
    // Predicated region
    $region37: #{model_forward.9} parent=5 // pred_check
      %p252 = pneg %p251
    $region38: #{model_forward.9} parent=5 // pred_check_branch
      %254 = sbr.rel (%p252) target = $region40
    $region39: #{model_forward.9} parent=5 // pred_region
      // Predicated region
      $region41: #{model_forward.9} parent=39 // pred_check
        %p255 = pneg %p34
      $region42: #{model_forward.9} parent=39 // pred_check_branch
        %257 = sbr.rel (%p255) target = $region44
      $region43: #{model_forward.9} parent=39 // pred_region
        %p258 = scmp.lt.s32.totalorder %s14, 1
        %s259 = scalar_select %p258, %s14, 1
        %s260 = smul.addr %s259, 2
        %s261 = smul.addr %s260, 8
        %s262 = scalar_lea.vmem %s0, %s261
      $region44: #{model_forward.9} parent=39 // pred_fallthru
        _
      // Predicated region
      $region45: #{model_forward.9} parent=39 // pred_check
        %p263 = pneg %p60
      $region46: #{model_forward.9} parent=39 // pred_check_branch
        %265 = sbr.rel (%p263) target = $region48
      $region47: #{model_forward.9} parent=39 // pred_region
        %p266 = scmp.lt.s32.totalorder %s14, 1
        %s267 = scalar_select %p266, %s14, 1
        %s268 = scalar_lea.vmem %s1, %s267
      $region48: #{model_forward.9} parent=39 // pred_fallthru
        _
    $region40: #{model_forward.9} parent=5 // pred_fallthru
      _
    %p269 = scmp.le.s32.totalorder 1, %s14
    %p270 = scmp.lt.s32.totalorder %s14, 3
    %p271 = pnand %p269, %p270
    %p272 = pneg %p271
    // Predicated region
    $region49: #{model_forward.9} parent=5 // pred_check
      _
    $region50: #{model_forward.9} parent=5 // pred_check_branch
      %274 = sbr.rel (%p271) target = $region52
    $region51: #{model_forward.9} parent=5 // pred_region
      %s275 = ssub.s32 %s14, 1
      %p276 = scmp.lt.s32.totalorder %s19, 1
      %s277 = scalar_select %p276, %s19, 1
      %s278 = smul.addr %s277, 2
      %s279 = smul.addr %s278, 8
      %s280 = scalar_lea.vmem %s0, %s279
      %p281 = pneg %p40
      %p282 = pneg %p37
      %p283 = scmp.lt.s32.totalorder %s19, 1
      %s284 = scalar_select %p283, %s19, 1
      %s285 = scalar_lea.vmem %s1, %s284
      %p286 = pneg %p66
      %p287 = pneg %p63
      %p288 = pneg %p87
      %p289 = pneg %p84
      %p290 = pneg %p108
      %p291 = pneg %p105
      %p292 = pneg %p129
      %p293 = pneg %p126
      %p294 = pneg %p150
      %p295 = pneg %p147
      %p296 = pneg %p171
      %p297 = pneg %p168
      %p298 = pneg %p192
      %p299 = pneg %p189
      %p300 = pneg %p218
      %p301 = pneg %p215
      %p302 = scmp.lt.s32.totalorder %s19, 1
      %s303 = scalar_select %p302, %s19, 1
      %s304 = smul.addr %s303, 2
      %s305 = smul.addr %s304, 8
      %s306 = scalar_lea.vmem %s8, %s305
      %p307 = scmp.lt.s32.totalorder %s19, 1
      %s308 = scalar_select %p307, %s19, 1
      %s309 = smul.addr %s308, 2
      %s310 = smul.addr %s309, 8
      %s311 = scalar_lea.vmem %s0, %s310
      %p312 = scmp.lt.s32.totalorder %s19, 1
      %s313 = scalar_select %p312, %s19, 1
      %s314 = scalar_lea.vmem %s1, %s313
      %p315 = scmp.lt.s32.totalorder %s19, 1
      %s316 = scalar_select %p315, %s19, 1
      %s317 = smul.addr %s316, 2
      %s318 = smul.addr %s317, 8
      %s319 = scalar_lea.vmem %s8, %s318
      %v321 = vld [vmem:[%s311] sm:$0xff]
      %v322 = vld [vmem:[%s311 + $0x8] sm:$0x1]
      %v323 = vld [vmem:[%s314] sm:$0x1]
      %v324 = vpack.c.bf16 %v322, %v321
      %v325 = vld [vmem:[%s2] sm:$0xf]
      %v326 = vld [vmem:[%s2 + $0x4] sm:$0xf]
      %v327 = vld [vmem:[%s2 + $0x8] sm:$0xf]
      %v328 = vld [vmem:[%s2 + $0xc] sm:$0xf]
      %v329 = vld [vmem:[%s3] sm:$0x1]
      %v331 = vlaneseq
      %v332 = vshrl.u32 %v331, 7
      %v333 = vsub.s32 0, %v332
      %v334 = vrot.slane %v329, %v333
      %v340 = vunpack.c.l.b16 %v325
      %v341 = vunpack.c.l.b16 %v326
      %v342 = vunpack.c.l.b16 %v327
      %v343 = vunpack.c.l.b16 %v328
      %v344 = vpack.c.b16 %v341, %v340
      %v345 = vpack.c.b16 %v343, %v342
      %vm348 = vcmask 261120
      %v350 = vsel %vm348, %v324, 0
      %352 = vmatprep.subr.bf16.mxu0 0
      %353 = vmatpush1.bf16.msra.mxu0 0
      %354 = vmatprep.subr.bf16.mxu0 0
      %355 = vmatpush1.bf16.msra.mxu0 0
      %356 = vmatprep.subr.bf16.mxu0 0
      %357 = vmatpush1.bf16.msra.mxu0 0
      %358 = vmatprep.subr.bf16.mxu0 0
      %359 = vmatpush1.bf16.msra.mxu0 0
      %360 = vmatprep.subr.bf16.mxu0 0
      %361 = vmatpush1.bf16.msra.mxu0 0
      %362 = vmatprep.subr.bf16.mxu0 0
      %363 = vmatpush1.bf16.msra.mxu0 0
      %364 = vmatprep.subr.bf16.mxu0 0
      %365 = vmatpush1.bf16.msra.mxu0 %v345
      %366 = vmatprep.subr.bf16.mxu0 0
      %367 = vmatpush1.bf16.msra.mxu0 %v344
      %368 = vmatprep.subr.bf16.mxu0 0
      %369 = vmatpush2.bf16.msra.mxu0 0
      %370 = vmatprep.subr.bf16.mxu0 0
      %371 = vmatpush2.bf16.msra.mxu0 0
      %372 = vmatprep.subr.bf16.mxu0 0
      %373 = vmatpush2.bf16.msra.mxu0 0
      %374 = vmatprep.subr.bf16.mxu0 0
      %375 = vmatpush2.bf16.msra.mxu0 0
      %376 = vmatprep.subr.bf16.mxu0 0
      %377 = vmatpush2.bf16.msra.mxu0 0
      %378 = vmatprep.subr.bf16.mxu0 0
      %379 = vmatpush2.bf16.msra.mxu0 0
      %380 = vmatprep.subr.bf16.mxu0 0
      %381 = vmatpush2.bf16.msra.mxu0 0
      %382 = vmatprep.subr.bf16.mxu0 0
      %383 = vmatpush2.bf16.msra.mxu0 0
      %384 = vmatprep.mubr.bf16.mxu0 0
      %385 = vmatmul.mubr.bf16.gmra.mxu0 %v350
      %v386 = vpop.f32.mrf.mxu0
      %v387 = vadd.f32 %v334, %v386
      %v388 = vpop.f32.mrf.mxu0
      %v389 = vpop.f32.mrf.mxu0
      %v390 = vadd.f32 %v334, %v389
      %v391 = vpop.f32.mrf.mxu0
      %392 = vdwg.mxu0
      %v393 = vpack.c.bf16 %v390, %v387
      %v395 = vlaneseq
      %v396 = vshrl.u32 %v395, 7
      %v397 = vsub.s32 0, %v396
      %v398 = vrot.slane %v323, %v397
      %401 = vrot.lane.b32.xlu0 %v393, 96
      %v402 = vpop.permute.xlu0 %401
      %vm403 = vcmask 64512
      %v405 = vsel %vm403, %v393, 0
      %v408 = vsel %vm403, %v402, 0
      %410 = vmatprep.subr.bf16.mxu0 0
      %411 = vmatpush1.bf16.xpose.msra.mxu0 0
      %412 = vmatprep.subr.bf16.mxu0 0
      %413 = vmatpush1.bf16.xpose.msra.mxu0 0
      %414 = vmatprep.subr.bf16.mxu0 0
      %415 = vmatpush1.bf16.xpose.msra.mxu0 0
      %416 = vmatprep.subr.bf16.mxu0 0
      %417 = vmatpush1.bf16.xpose.msra.mxu0 0
      %418 = vmatprep.subr.bf16.mxu0 0
      %419 = vmatpush1.bf16.xpose.msra.mxu0 0
      %420 = vmatprep.subr.bf16.mxu0 0
      %421 = vmatpush1.bf16.xpose.msra.mxu0 0
      %422 = vmatprep.subr.bf16.mxu0 0
      %423 = vmatpush1.bf16.xpose.msra.mxu0 0
      %424 = vmatprep.subr.bf16.mxu0 0
      %425 = vmatpush1.bf16.xpose.msra.mxu0 %v408
      %426 = vmatprep.subr.bf16.mxu0 0
      %427 = vmatpush2.bf16.xpose.msra.mxu0 0
      %428 = vmatprep.subr.bf16.mxu0 0
      %429 = vmatpush2.bf16.xpose.msra.mxu0 0
      %430 = vmatprep.subr.bf16.mxu0 0
      %431 = vmatpush2.bf16.xpose.msra.mxu0 0
      %432 = vmatprep.subr.bf16.mxu0 0
      %433 = vmatpush2.bf16.xpose.msra.mxu0 0
      %434 = vmatprep.subr.bf16.mxu0 0
      %435 = vmatpush2.bf16.xpose.msra.mxu0 0
      %436 = vmatprep.subr.bf16.mxu0 0
      %437 = vmatpush2.bf16.xpose.msra.mxu0 0
      %438 = vmatprep.subr.bf16.mxu0 0
      %439 = vmatpush2.bf16.xpose.msra.mxu0 0
      %440 = vmatprep.subr.bf16.mxu0 0
      %441 = vmatpush2.bf16.xpose.msra.mxu0 0
      %442 = vmatprep.mubr.bf16.mxu0 0
      %443 = vmatmul.mubr.bf16.gmra.mxu0 %v405
      %v444 = vpop.f32.mrf.mxu0
      %v445 = vadd.f32 %v398, %v444
      %v446 = vpop.f32.mrf.mxu0
      %v447 = vpop.f32.mrf.mxu0
      %v448 = vadd.f32 %v398, %v447
      %v449 = vpop.f32.mrf.mxu0
      %450 = vdwg.mxu0
      %vm451 = vcmask 72704
      %v452 = vsel %vm451, %v445, -inf
      %453 = vmax.xlane.f32.xlu0 %v452
      %v454 = vpop.xlane.xlu0 %453
      %vm455 = vcmask 65536
      %v456 = vsel %vm455, %v448, -inf
      %457 = vmax.xlane.f32.xlu0 %v456
      %v458 = vpop.xlane.xlu0 %457
      %v459 = vsub.f32 %v445, %v454
      %v460 = vsub.f32 %v448, %v458
      %v461 = vmul.f32 %v459, 1.442695
      %v462 = vpow.pop %v461
      %v463 = vmul.f32 %v460, 1.442695
      %v464 = vpow.pop %v463
      %v465 = vsel %vm451, %v462, 0.0
      %466 = vadd.xlane.f32.xlu0 %v465
      %v467 = vpop.xlane.xlu0 %466
      %v468 = vsel %vm455, %v464, 0.0
      %469 = vadd.xlane.f32.xlu0 %v468
      %v470 = vpop.xlane.xlu0 %469
      %v471 = vrcp.pop %v467
      %v472 = vrcp.pop %v470
      %v473 = vmul.f32 %v462, %v471
      %v474 = vmul.f32 %v464, %v472
      %v475 = vpack.c.bf16 %v474, %v473
      %476 = vrot.lane.b32.xlu0 %v393, 64
      %v477 = vpop.permute.xlu0 %476
      %v479 = vsel %vm451, %v475, 0
      %vm481 = vcmask 1043456
      %vm482 = vcmask 1044480
      %v483 = vsel %vm481, 4294967295, 65535
      %v484 = vsel %vm482, %v483, 0
      %v486 = vand.u32 %v477, %v484
      %488 = vmatprep.subr.bf16.mxu0 0
      %489 = vmatpush1.bf16.msra.mxu0 0
      %490 = vmatprep.subr.bf16.mxu0 0
      %491 = vmatpush1.bf16.msra.mxu0 0
      %492 = vmatprep.subr.bf16.mxu0 0
      %493 = vmatpush1.bf16.msra.mxu0 0
      %494 = vmatprep.subr.bf16.mxu0 0
      %495 = vmatpush1.bf16.msra.mxu0 0
      %496 = vmatprep.subr.bf16.mxu0 0
      %497 = vmatpush1.bf16.msra.mxu0 0
      %498 = vmatprep.subr.bf16.mxu0 0
      %499 = vmatpush1.bf16.msra.mxu0 0
      %500 = vmatprep.subr.bf16.mxu0 0
      %501 = vmatpush1.bf16.msra.mxu0 0
      %502 = vmatprep.subr.bf16.mxu0 0
      %503 = vmatpush1.bf16.msra.mxu0 %v486
      %504 = vmatprep.subr.bf16.mxu0 0
      %505 = vmatpush2.bf16.msra.mxu0 0
      %506 = vmatprep.subr.bf16.mxu0 0
      %507 = vmatpush2.bf16.msra.mxu0 0
      %508 = vmatprep.subr.bf16.mxu0 0
      %509 = vmatpush2.bf16.msra.mxu0 0
      %510 = vmatprep.subr.bf16.mxu0 0
      %511 = vmatpush2.bf16.msra.mxu0 0
      %512 = vmatprep.subr.bf16.mxu0 0
      %513 = vmatpush2.bf16.msra.mxu0 0
      %514 = vmatprep.subr.bf16.mxu0 0
      %515 = vmatpush2.bf16.msra.mxu0 0
      %516 = vmatprep.subr.bf16.mxu0 0
      %517 = vmatpush2.bf16.msra.mxu0 0
      %518 = vmatprep.subr.bf16.mxu0 0
      %519 = vmatpush2.bf16.msra.mxu0 0
      %520 = vmatprep.mubr.bf16.mxu0 0
      %521 = vmatmul.mubr.bf16.gmra.mxu0 %v479
      %v522 = vpop.f32.mrf.mxu0
      %v523 = vadd.f32 0.0, %v522
      %v524 = vpop.f32.mrf.mxu0
      %v525 = vpop.f32.mrf.mxu0
      %v526 = vadd.f32 0.0, %v525
      %v527 = vpop.f32.mrf.mxu0
      %528 = vdwg.mxu0
      %529 = vrot.lane.b32.xlu0 %v393, 120
      %v530 = vpop.permute.xlu0 %529
      %531 = vrot.lane.b32.xlu0 %v393, 88
      %v532 = vpop.permute.xlu0 %531
      %v534 = vsel %vm403, %v530, 0
      %v537 = vsel %vm403, %v532, 0
      %539 = vmatprep.subr.bf16.mxu0 0
      %540 = vmatpush1.bf16.xpose.msra.mxu0 0
      %541 = vmatprep.subr.bf16.mxu0 0
      %542 = vmatpush1.bf16.xpose.msra.mxu0 0
      %543 = vmatprep.subr.bf16.mxu0 0
      %544 = vmatpush1.bf16.xpose.msra.mxu0 0
      %545 = vmatprep.subr.bf16.mxu0 0
      %546 = vmatpush1.bf16.xpose.msra.mxu0 0
      %547 = vmatprep.subr.bf16.mxu0 0
      %548 = vmatpush1.bf16.xpose.msra.mxu0 0
      %549 = vmatprep.subr.bf16.mxu0 0
      %550 = vmatpush1.bf16.xpose.msra.mxu0 0
      %551 = vmatprep.subr.bf16.mxu0 0
      %552 = vmatpush1.bf16.xpose.msra.mxu0 0
      %553 = vmatprep.subr.bf16.mxu0 0
      %554 = vmatpush1.bf16.xpose.msra.mxu0 %v537
      %555 = vmatprep.subr.bf16.mxu0 0
      %556 = vmatpush2.bf16.xpose.msra.mxu0 0
      %557 = vmatprep.subr.bf16.mxu0 0
      %558 = vmatpush2.bf16.xpose.msra.mxu0 0
      %559 = vmatprep.subr.bf16.mxu0 0
      %560 = vmatpush2.bf16.xpose.msra.mxu0 0
      %561 = vmatprep.subr.bf16.mxu0 0
      %562 = vmatpush2.bf16.xpose.msra.mxu0 0
      %563 = vmatprep.subr.bf16.mxu0 0
      %564 = vmatpush2.bf16.xpose.msra.mxu0 0
      %565 = vmatprep.subr.bf16.mxu0 0
      %566 = vmatpush2.bf16.xpose.msra.mxu0 0
      %567 = vmatprep.subr.bf16.mxu0 0
      %568 = vmatpush2.bf16.xpose.msra.mxu0 0
      %569 = vmatprep.subr.bf16.mxu0 0
      %570 = vmatpush2.bf16.xpose.msra.mxu0 0
      %571 = vmatprep.mubr.bf16.mxu0 0
      %572 = vmatmul.mubr.bf16.gmra.mxu0 %v534
      %v573 = vpop.f32.mrf.mxu0
      %v574 = vadd.f32 %v398, %v573
      %v575 = vpop.f32.mrf.mxu0
      %v576 = vpop.f32.mrf.mxu0
      %v577 = vadd.f32 %v398, %v576
      %v578 = vpop.f32.mrf.mxu0
      %579 = vdwg.mxu0
      %v580 = vsel %vm451, %v574, -inf
      %581 = vmax.xlane.f32.xlu0 %v580
      %v582 = vpop.xlane.xlu0 %581
      %v583 = vsel %vm455, %v577, -inf
      %584 = vmax.xlane.f32.xlu0 %v583
      %v585 = vpop.xlane.xlu0 %584
      %v586 = vsub.f32 %v574, %v582
      %v587 = vsub.f32 %v577, %v585
      %v588 = vmul.f32 %v586, 1.442695
      %v589 = vpow.pop %v588
      %v590 = vmul.f32 %v587, 1.442695
      %v591 = vpow.pop %v590
      %v592 = vsel %vm451, %v589, 0.0
      %593 = vadd.xlane.f32.xlu0 %v592
      %v594 = vpop.xlane.xlu0 %593
      %v595 = vsel %vm455, %v591, 0.0
      %596 = vadd.xlane.f32.xlu0 %v595
      %v597 = vpop.xlane.xlu0 %596
      %v598 = vrcp.pop %v594
      %v599 = vrcp.pop %v597
      %v600 = vmul.f32 %v589, %v598
      %v601 = vmul.f32 %v591, %v599
      %v602 = vpack.c.bf16 %v601, %v600
      %603 = vrot.lane.b32.xlu0 %v393, 56
      %v604 = vpop.permute.xlu0 %603
      %v606 = vsel %vm451, %v602, 0
      %v609 = vand.u32 %v604, %v484
      %611 = vmatprep.subr.bf16.mxu0 0
      %612 = vmatpush1.bf16.msra.mxu0 0
      %613 = vmatprep.subr.bf16.mxu0 0
      %614 = vmatpush1.bf16.msra.mxu0 0
      %615 = vmatprep.subr.bf16.mxu0 0
      %616 = vmatpush1.bf16.msra.mxu0 0
      %617 = vmatprep.subr.bf16.mxu0 0
      %618 = vmatpush1.bf16.msra.mxu0 0
      %619 = vmatprep.subr.bf16.mxu0 0
      %620 = vmatpush1.bf16.msra.mxu0 0
      %621 = vmatprep.subr.bf16.mxu0 0
      %622 = vmatpush1.bf16.msra.mxu0 0
      %623 = vmatprep.subr.bf16.mxu0 0
      %624 = vmatpush1.bf16.msra.mxu0 0
      %625 = vmatprep.subr.bf16.mxu0 0
      %626 = vmatpush1.bf16.msra.mxu0 %v609
      %627 = vmatprep.subr.bf16.mxu0 0
      %628 = vmatpush2.bf16.msra.mxu0 0
      %629 = vmatprep.subr.bf16.mxu0 0
      %630 = vmatpush2.bf16.msra.mxu0 0
      %631 = vmatprep.subr.bf16.mxu0 0
      %632 = vmatpush2.bf16.msra.mxu0 0
      %633 = vmatprep.subr.bf16.mxu0 0
      %634 = vmatpush2.bf16.msra.mxu0 0
      %635 = vmatprep.subr.bf16.mxu0 0
      %636 = vmatpush2.bf16.msra.mxu0 0
      %637 = vmatprep.subr.bf16.mxu0 0
      %638 = vmatpush2.bf16.msra.mxu0 0
      %639 = vmatprep.subr.bf16.mxu0 0
      %640 = vmatpush2.bf16.msra.mxu0 0
      %641 = vmatprep.subr.bf16.mxu0 0
      %642 = vmatpush2.bf16.msra.mxu0 0
      %643 = vmatprep.mubr.bf16.mxu0 0
      %644 = vmatmul.mubr.bf16.gmra.mxu0 %v606
      %v645 = vpop.f32.mrf.mxu0
      %v646 = vadd.f32 0.0, %v645
      %v647 = vpop.f32.mrf.mxu0
      %v648 = vpop.f32.mrf.mxu0
      %v649 = vadd.f32 0.0, %v648
      %v650 = vpop.f32.mrf.mxu0
      %651 = vdwg.mxu0
      %652 = vrot.lane.b32.xlu0 %v393, 112
      %v653 = vpop.permute.xlu0 %652
      %654 = vrot.lane.b32.xlu0 %v393, 80
      %v655 = vpop.permute.xlu0 %654
      %v657 = vsel %vm403, %v653, 0
      %v660 = vsel %vm403, %v655, 0
      %662 = vmatprep.subr.bf16.mxu0 0
      %663 = vmatpush1.bf16.xpose.msra.mxu0 0
      %664 = vmatprep.subr.bf16.mxu0 0
      %665 = vmatpush1.bf16.xpose.msra.mxu0 0
      %666 = vmatprep.subr.bf16.mxu0 0
      %667 = vmatpush1.bf16.xpose.msra.mxu0 0
      %668 = vmatprep.subr.bf16.mxu0 0
      %669 = vmatpush1.bf16.xpose.msra.mxu0 0
      %670 = vmatprep.subr.bf16.mxu0 0
      %671 = vmatpush1.bf16.xpose.msra.mxu0 0
      %672 = vmatprep.subr.bf16.mxu0 0
      %673 = vmatpush1.bf16.xpose.msra.mxu0 0
      %674 = vmatprep.subr.bf16.mxu0 0
      %675 = vmatpush1.bf16.xpose.msra.mxu0 0
      %676 = vmatprep.subr.bf16.mxu0 0
      %677 = vmatpush1.bf16.xpose.msra.mxu0 %v660
      %678 = vmatprep.subr.bf16.mxu0 0
      %679 = vmatpush2.bf16.xpose.msra.mxu0 0
      %680 = vmatprep.subr.bf16.mxu0 0
      %681 = vmatpush2.bf16.xpose.msra.mxu0 0
      %682 = vmatprep.subr.bf16.mxu0 0
      %683 = vmatpush2.bf16.xpose.msra.mxu0 0
      %684 = vmatprep.subr.bf16.mxu0 0
      %685 = vmatpush2.bf16.xpose.msra.mxu0 0
      %686 = vmatprep.subr.bf16.mxu0 0
      %687 = vmatpush2.bf16.xpose.msra.mxu0 0
      %688 = vmatprep.subr.bf16.mxu0 0
      %689 = vmatpush2.bf16.xpose.msra.mxu0 0
      %690 = vmatprep.subr.bf16.mxu0 0
      %691 = vmatpush2.bf16.xpose.msra.mxu0 0
      %692 = vmatprep.subr.bf16.mxu0 0
      %693 = vmatpush2.bf16.xpose.msra.mxu0 0
      %694 = vmatprep.mubr.bf16.mxu0 0
      %695 = vmatmul.mubr.bf16.gmra.mxu0 %v657
      %v696 = vpop.f32.mrf.mxu0
      %v697 = vadd.f32 %v398, %v696
      %v698 = vpop.f32.mrf.mxu0
      %v699 = vpop.f32.mrf.mxu0
      %v700 = vadd.f32 %v398, %v699
      %v701 = vpop.f32.mrf.mxu0
      %702 = vdwg.mxu0
      %v703 = vsel %vm451, %v697, -inf
      %704 = vmax.xlane.f32.xlu0 %v703
      %v705 = vpop.xlane.xlu0 %704
      %v706 = vsel %vm455, %v700, -inf
      %707 = vmax.xlane.f32.xlu0 %v706
      %v708 = vpop.xlane.xlu0 %707
      %v709 = vsub.f32 %v697, %v705
      %v710 = vsub.f32 %v700, %v708
      %v711 = vmul.f32 %v709, 1.442695
      %v712 = vpow.pop %v711
      %v713 = vmul.f32 %v710, 1.442695
      %v714 = vpow.pop %v713
      %v715 = vsel %vm451, %v712, 0.0
      %716 = vadd.xlane.f32.xlu0 %v715
      %v717 = vpop.xlane.xlu0 %716
      %v718 = vsel %vm455, %v714, 0.0
      %719 = vadd.xlane.f32.xlu0 %v718
      %v720 = vpop.xlane.xlu0 %719
      %v721 = vrcp.pop %v717
      %v722 = vrcp.pop %v720
      %v723 = vmul.f32 %v712, %v721
      %v724 = vmul.f32 %v714, %v722
      %v725 = vpack.c.bf16 %v724, %v723
      %726 = vrot.lane.b32.xlu0 %v393, 48
      %v727 = vpop.permute.xlu0 %726
      %v729 = vsel %vm451, %v725, 0
      %v732 = vand.u32 %v727, %v484
      %734 = vmatprep.subr.bf16.mxu0 0
      %735 = vmatpush1.bf16.msra.mxu0 0
      %736 = vmatprep.subr.bf16.mxu0 0
      %737 = vmatpush1.bf16.msra.mxu0 0
      %738 = vmatprep.subr.bf16.mxu0 0
      %739 = vmatpush1.bf16.msra.mxu0 0
      %740 = vmatprep.subr.bf16.mxu0 0
      %741 = vmatpush1.bf16.msra.mxu0 0
      %742 = vmatprep.subr.bf16.mxu0 0
      %743 = vmatpush1.bf16.msra.mxu0 0
      %744 = vmatprep.subr.bf16.mxu0 0
      %745 = vmatpush1.bf16.msra.mxu0 0
      %746 = vmatprep.subr.bf16.mxu0 0
      %747 = vmatpush1.bf16.msra.mxu0 0
      %748 = vmatprep.subr.bf16.mxu0 0
      %749 = vmatpush1.bf16.msra.mxu0 %v732
      %750 = vmatprep.subr.bf16.mxu0 0
      %751 = vmatpush2.bf16.msra.mxu0 0
      %752 = vmatprep.subr.bf16.mxu0 0
      %753 = vmatpush2.bf16.msra.mxu0 0
      %754 = vmatprep.subr.bf16.mxu0 0
      %755 = vmatpush2.bf16.msra.mxu0 0
      %756 = vmatprep.subr.bf16.mxu0 0
      %757 = vmatpush2.bf16.msra.mxu0 0
      %758 = vmatprep.subr.bf16.mxu0 0
      %759 = vmatpush2.bf16.msra.mxu0 0
      %760 = vmatprep.subr.bf16.mxu0 0
      %761 = vmatpush2.bf16.msra.mxu0 0
      %762 = vmatprep.subr.bf16.mxu0 0
      %763 = vmatpush2.bf16.msra.mxu0 0
      %764 = vmatprep.subr.bf16.mxu0 0
      %765 = vmatpush2.bf16.msra.mxu0 0
      %766 = vmatprep.mubr.bf16.mxu0 0
      %767 = vmatmul.mubr.bf16.gmra.mxu0 %v729
      %v768 = vpop.f32.mrf.mxu0
      %v769 = vadd.f32 0.0, %v768
      %v770 = vpop.f32.mrf.mxu0
      %v771 = vpop.f32.mrf.mxu0
      %v772 = vadd.f32 0.0, %v771
      %v773 = vpop.f32.mrf.mxu0
      %774 = vdwg.mxu0
      %775 = vrot.lane.b32.xlu0 %v393, 104
      %v776 = vpop.permute.xlu0 %775
      %777 = vrot.lane.b32.xlu0 %v393, 72
      %v778 = vpop.permute.xlu0 %777
      %v780 = vsel %vm403, %v776, 0
      %v783 = vsel %vm403, %v778, 0
      %785 = vmatprep.subr.bf16.mxu0 0
      %786 = vmatpush1.bf16.xpose.msra.mxu0 0
      %787 = vmatprep.subr.bf16.mxu0 0
      %788 = vmatpush1.bf16.xpose.msra.mxu0 0
      %789 = vmatprep.subr.bf16.mxu0 0
      %790 = vmatpush1.bf16.xpose.msra.mxu0 0
      %791 = vmatprep.subr.bf16.mxu0 0
      %792 = vmatpush1.bf16.xpose.msra.mxu0 0
      %793 = vmatprep.subr.bf16.mxu0 0
      %794 = vmatpush1.bf16.xpose.msra.mxu0 0
      %795 = vmatprep.subr.bf16.mxu0 0
      %796 = vmatpush1.bf16.xpose.msra.mxu0 0
      %797 = vmatprep.subr.bf16.mxu0 0
      %798 = vmatpush1.bf16.xpose.msra.mxu0 0
      %799 = vmatprep.subr.bf16.mxu0 0
      %800 = vmatpush1.bf16.xpose.msra.mxu0 %v783
      %801 = vmatprep.subr.bf16.mxu0 0
      %802 = vmatpush2.bf16.xpose.msra.mxu0 0
      %803 = vmatprep.subr.bf16.mxu0 0
      %804 = vmatpush2.bf16.xpose.msra.mxu0 0
      %805 = vmatprep.subr.bf16.mxu0 0
      %806 = vmatpush2.bf16.xpose.msra.mxu0 0
      %807 = vmatprep.subr.bf16.mxu0 0
      %808 = vmatpush2.bf16.xpose.msra.mxu0 0
      %809 = vmatprep.subr.bf16.mxu0 0
      %810 = vmatpush2.bf16.xpose.msra.mxu0 0
      %811 = vmatprep.subr.bf16.mxu0 0
      %812 = vmatpush2.bf16.xpose.msra.mxu0 0
      %813 = vmatprep.subr.bf16.mxu0 0
      %814 = vmatpush2.bf16.xpose.msra.mxu0 0
      %815 = vmatprep.subr.bf16.mxu0 0
      %816 = vmatpush2.bf16.xpose.msra.mxu0 0
      %817 = vmatprep.mubr.bf16.mxu0 0
      %818 = vmatmul.mubr.bf16.gmra.mxu0 %v780
      %v819 = vpop.f32.mrf.mxu0
      %v820 = vadd.f32 %v398, %v819
      %v821 = vpop.f32.mrf.mxu0
      %v822 = vpop.f32.mrf.mxu0
      %v823 = vadd.f32 %v398, %v822
      %v824 = vpop.f32.mrf.mxu0
      %825 = vdwg.mxu0
      %v826 = vsel %vm451, %v820, -inf
      %827 = vmax.xlane.f32.xlu0 %v826
      %v828 = vpop.xlane.xlu0 %827
      %v829 = vsel %vm455, %v823, -inf
      %830 = vmax.xlane.f32.xlu0 %v829
      %v831 = vpop.xlane.xlu0 %830
      %v832 = vsub.f32 %v820, %v828
      %v833 = vsub.f32 %v823, %v831
      %v834 = vmul.f32 %v832, 1.442695
      %v835 = vpow.pop %v834
      %v836 = vmul.f32 %v833, 1.442695
      %v837 = vpow.pop %v836
      %v838 = vsel %vm451, %v835, 0.0
      %839 = vadd.xlane.f32.xlu0 %v838
      %v840 = vpop.xlane.xlu0 %839
      %v841 = vsel %vm455, %v837, 0.0
      %842 = vadd.xlane.f32.xlu0 %v841
      %v843 = vpop.xlane.xlu0 %842
      %v844 = vrcp.pop %v840
      %v845 = vrcp.pop %v843
      %v846 = vmul.f32 %v835, %v844
      %v847 = vmul.f32 %v837, %v845
      %v848 = vpack.c.bf16 %v847, %v846
      %849 = vrot.lane.b32.xlu0 %v393, 40
      %v850 = vpop.permute.xlu0 %849
      %v852 = vsel %vm451, %v848, 0
      %v855 = vand.u32 %v850, %v484
      %857 = vmatprep.subr.bf16.mxu0 0
      %858 = vmatpush1.bf16.msra.mxu0 0
      %859 = vmatprep.subr.bf16.mxu0 0
      %860 = vmatpush1.bf16.msra.mxu0 0
      %861 = vmatprep.subr.bf16.mxu0 0
      %862 = vmatpush1.bf16.msra.mxu0 0
      %863 = vmatprep.subr.bf16.mxu0 0
      %864 = vmatpush1.bf16.msra.mxu0 0
      %865 = vmatprep.subr.bf16.mxu0 0
      %866 = vmatpush1.bf16.msra.mxu0 0
      %867 = vmatprep.subr.bf16.mxu0 0
      %868 = vmatpush1.bf16.msra.mxu0 0
      %869 = vmatprep.subr.bf16.mxu0 0
      %870 = vmatpush1.bf16.msra.mxu0 0
      %871 = vmatprep.subr.bf16.mxu0 0
      %872 = vmatpush1.bf16.msra.mxu0 %v855
      %873 = vmatprep.subr.bf16.mxu0 0
      %874 = vmatpush2.bf16.msra.mxu0 0
      %875 = vmatprep.subr.bf16.mxu0 0
      %876 = vmatpush2.bf16.msra.mxu0 0
      %877 = vmatprep.subr.bf16.mxu0 0
      %878 = vmatpush2.bf16.msra.mxu0 0
      %879 = vmatprep.subr.bf16.mxu0 0
      %880 = vmatpush2.bf16.msra.mxu0 0
      %881 = vmatprep.subr.bf16.mxu0 0
      %882 = vmatpush2.bf16.msra.mxu0 0
      %883 = vmatprep.subr.bf16.mxu0 0
      %884 = vmatpush2.bf16.msra.mxu0 0
      %885 = vmatprep.subr.bf16.mxu0 0
      %886 = vmatpush2.bf16.msra.mxu0 0
      %887 = vmatprep.subr.bf16.mxu0 0
      %888 = vmatpush2.bf16.msra.mxu0 0
      %889 = vmatprep.mubr.bf16.mxu0 0
      %890 = vmatmul.mubr.bf16.gmra.mxu0 %v852
      %v891 = vpop.f32.mrf.mxu0
      %v892 = vadd.f32 0.0, %v891
      %v893 = vpop.f32.mrf.mxu0
      %v894 = vpop.f32.mrf.mxu0
      %v895 = vadd.f32 0.0, %v894
      %v896 = vpop.f32.mrf.mxu0
      %897 = vdwg.mxu0
      %900 = vrot.lane.b32.xlu0 %v646, 8
      %v901 = vpop.permute.xlu0 %900
      %902 = vrot.lane.b32.xlu0 %v649, 8
      %v903 = vpop.permute.xlu0 %902
      %908 = vrot.lane.b32.xlu0 %v769, 16
      %v909 = vpop.permute.xlu0 %908
      %910 = vrot.lane.b32.xlu0 %v772, 16
      %v911 = vpop.permute.xlu0 %910
      %916 = vrot.lane.b32.xlu0 %v892, 24
      %v917 = vpop.permute.xlu0 %916
      %918 = vrot.lane.b32.xlu0 %v895, 24
      %v919 = vpop.permute.xlu0 %918
      %v922 = vsel %vm403, %v523, %v901
      %v923 = vsel %vm403, %v526, %v903
      %vm924 = vcmask 130048
      %v925 = vsel %vm924, %v922, %v909
      %v926 = vsel %vm924, %v923, %v911
      %vm927 = vcmask 195584
      %v928 = vsel %vm927, %v925, %v917
      %v929 = vsel %vm927, %v926, %v919
      %v930 = vpack.c.bf16 %v929, %v928
      %v931 = vld [vmem:[%s4] sm:$0xf]
      %v932 = vld [vmem:[%s4 + $0x4] sm:$0xf]
      %v933 = vld [vmem:[%s4 + $0x8] sm:$0xf]
      %v934 = vld [vmem:[%s4 + $0xc] sm:$0xf]
      %v935 = vld [vmem:[%s5] sm:$0x1]
      %v937 = vlaneseq
      %v938 = vshrl.u32 %v937, 7
      %v939 = vsub.s32 0, %v938
      %v940 = vrot.slane %v935, %v939
      %v946 = vunpack.c.l.b16 %v931
      %v947 = vunpack.c.l.b16 %v932
      %v948 = vunpack.c.l.b16 %v933
      %v949 = vunpack.c.l.b16 %v934
      %v950 = vpack.c.b16 %v947, %v946
      %v951 = vpack.c.b16 %v949, %v948
      %v955 = vsel %vm348, %v930, 0
      %957 = vmatprep.subr.bf16.mxu0 0
      %958 = vmatpush1.bf16.msra.mxu0 0
      %959 = vmatprep.subr.bf16.mxu0 0
      %960 = vmatpush1.bf16.msra.mxu0 0
      %961 = vmatprep.subr.bf16.mxu0 0
      %962 = vmatpush1.bf16.msra.mxu0 0
      %963 = vmatprep.subr.bf16.mxu0 0
      %964 = vmatpush1.bf16.msra.mxu0 0
      %965 = vmatprep.subr.bf16.mxu0 0
      %966 = vmatpush1.bf16.msra.mxu0 0
      %967 = vmatprep.subr.bf16.mxu0 0
      %968 = vmatpush1.bf16.msra.mxu0 0
      %969 = vmatprep.subr.bf16.mxu0 0
      %970 = vmatpush1.bf16.msra.mxu0 %v951
      %971 = vmatprep.subr.bf16.mxu0 0
      %972 = vmatpush1.bf16.msra.mxu0 %v950
      %973 = vmatprep.subr.bf16.mxu0 0
      %974 = vmatpush2.bf16.msra.mxu0 0
      %975 = vmatprep.subr.bf16.mxu0 0
      %976 = vmatpush2.bf16.msra.mxu0 0
      %977 = vmatprep.subr.bf16.mxu0 0
      %978 = vmatpush2.bf16.msra.mxu0 0
      %979 = vmatprep.subr.bf16.mxu0 0
      %980 = vmatpush2.bf16.msra.mxu0 0
      %981 = vmatprep.subr.bf16.mxu0 0
      %982 = vmatpush2.bf16.msra.mxu0 0
      %983 = vmatprep.subr.bf16.mxu0 0
      %984 = vmatpush2.bf16.msra.mxu0 0
      %985 = vmatprep.subr.bf16.mxu0 0
      %986 = vmatpush2.bf16.msra.mxu0 0
      %987 = vmatprep.subr.bf16.mxu0 0
      %988 = vmatpush2.bf16.msra.mxu0 0
      %989 = vmatprep.mubr.bf16.mxu0 0
      %990 = vmatmul.mubr.bf16.gmra.mxu0 %v955
      %v991 = vpop.f32.mrf.mxu0
      %v992 = vadd.f32 %v940, %v991
      %v993 = vpop.f32.mrf.mxu0
      %v994 = vpop.f32.mrf.mxu0
      %v995 = vadd.f32 %v940, %v994
      %v996 = vpop.f32.mrf.mxu0
      %997 = vdwg.mxu0
      %v998 = vadd.f32 %v992, %v321
      %v999 = vadd.f32 %v995, %v322
      %v1000 = vsel %vm348, %v998, 0.0
      %1001 = vadd.xlane.f32.xlu0 %v1000
      %v1002 = vpop.xlane.xlu0 %1001
      %vm1003 = vcmask 253952
      %v1004 = vsel %vm1003, %v999, 0.0
      %1005 = vadd.xlane.f32.xlu0 %v1004
      %v1006 = vpop.xlane.xlu0 %1005
      %v1007 = vrcp.pop 32.0
      %v1008 = vmul.f32 %v1002, %v1007
      %v1009 = vmul.f32 %v1006, %v1007
      %v1010 = vsub.f32 %v998, %v1008
      %v1011 = vsub.f32 %v999, %v1009
      %v1012 = vmul.f32 %v1010, %v1010
      %v1013 = vmul.f32 %v1011, %v1011
      %v1014 = vsel %vm348, %v1012, 0.0
      %1015 = vadd.xlane.f32.xlu0 %v1014
      %v1016 = vpop.xlane.xlu0 %1015
      %v1017 = vsel %vm1003, %v1013, 0.0
      %1018 = vadd.xlane.f32.xlu0 %v1017
      %v1019 = vpop.xlane.xlu0 %1018
      %v1020 = vmul.f32 %v1016, %v1007
      %v1021 = vmul.f32 %v1019, %v1007
      %v1022 = vadd.f32 %v1020, 1e-12
      %v1023 = vadd.f32 %v1021, 1e-12
      %v1024 = vrsqrt.pop %v1022
      %v1025 = vrsqrt.pop %v1023
      %v1026 = vmul.f32 %v1010, %v1024
      %v1027 = vmul.f32 %v1011, %v1025
      %v1028 = vld [vmem:[%s6] sm:$0x1]
      %v1030 = vlaneseq
      %v1031 = vshrl.u32 %v1030, 7
      %v1032 = vsub.s32 0, %v1031
      %v1033 = vrot.slane %v1028, %v1032
      %v1035 = vmul.f32 %v1026, %v1033
      %v1036 = vmul.f32 %v1027, %v1033
      %v1037 = vld [vmem:[%s7] sm:$0x1]
      %v1039 = vlaneseq
      %v1040 = vshrl.u32 %v1039, 7
      %v1041 = vsub.s32 0, %v1040
      %v1042 = vrot.slane %v1037, %v1041
      %v1044 = vadd.f32 %v1035, %v1042
      %v1045 = vadd.f32 %v1036, %v1042
      %1046 = vst.msk [vmem:[%s319] sm:$0xff] %vm348, %v1044
      %1047 = vst.msk [vmem:[%s319 + $0x8] sm:$0x1] %vm1003, %v1045
      %p1048 = scmp.lt.s32.totalorder %s19, 1
      %s1049 = scalar_select %p1048, %s19, 1
      %s1050 = smul.addr %s1049, 2
      %s1051 = smul.addr %s1050, 8
      %s1052 = scalar_lea.vmem %s8, %s1051
      // Predicated region
      $region53: #{model_forward.9} parent=51 // pred_check
        %p1053 = pneg %p215
      $region54: #{model_forward.9} parent=51 // pred_check_branch
        %1055 = sbr.rel (%p1053) target = $region56
      $region55: #{model_forward.9} parent=51 // pred_region
        _
      $region56: #{model_forward.9} parent=51 // pred_fallthru
        _
    $region52: #{model_forward.9} parent=5 // pred_fallthru
      _
    %p1056 = scmp.le.s32.totalorder 2, %s14
    // Predicated region
    $region57: #{model_forward.9} parent=5 // pred_check
      %p1057 = pneg %p1056
    $region58: #{model_forward.9} parent=5 // pred_check_branch
      %1059 = sbr.rel (%p1057) target = $region60
    $region59: #{model_forward.9} parent=5 // pred_region
      %s1060 = ssub.s32 %s14, 2
      // Predicated region
      $region61: #{model_forward.9} parent=59 // pred_check
        %p1061 = pneg %p221
      $region62: #{model_forward.9} parent=59 // pred_check_branch
        %1063 = sbr.rel (%p1061) target = $region64
      $region63: #{model_forward.9} parent=59 // pred_region
        %p1064 = scmp.lt.s32.totalorder %s20, 1
        %s1065 = scalar_select %p1064, %s20, 1
        %s1066 = smul.addr %s1065, 2
        %s1067 = smul.addr %s1066, 8
        %s1068 = scalar_lea.vmem %s8, %s1067
      $region64: #{model_forward.9} parent=59 // pred_fallthru
        _
    $region60: #{model_forward.9} parent=5 // pred_fallthru
      _
  $region6: #{model_forward.9} parent=0 // loop_footer
    %s18 = sadd.s32 1, %s14
  $region7: #{model_forward.9} parent=0 // loop_footer_branch
    %13 = sbr.rel target = $region3
  $region8: #{model_forward.9} parent=0 // loop_exit
    _

// kernel: model_forward.13
$region0: #{model_forward.13}
  #allocation0 [shape = 'u32[]', space=smem, size = 0x4, offset = 0x4, fixed_abs, tag = 'smem constant byte address 0x4 - core index']
  #allocation1 [shape = 'u32[144,128]{1,0:T(1,128)}', space=vmem, size = 0x12000, scoped, tag = 'internal scratch']
  %s0 = inlined_call_operand.vmem [shape: f32[2,32], index: 0, kind: input, shape index: {}]
  %s1 = inlined_call_operand.vmem [shape: bf16[32,32], index: 1, kind: input, shape index: {}]
  %s2 = inlined_call_operand.vmem [shape: f32[1,32], index: 2, kind: input, shape index: {}]
  %s3 = inlined_call_operand.vmem [shape: bf16[32,512], index: 3, kind: input, shape index: {}]
  %s4 = inlined_call_operand.vmem [shape: f32[1,512], index: 4, kind: input, shape index: {}]
  %s5 = inlined_call_operand.vmem [shape: bf16[512,256], index: 5, kind: input, shape index: {}]
  %s6 = inlined_call_operand.vmem [shape: f32[1,256], index: 6, kind: input, shape index: {}]
  %s7 = inlined_call_operand.vmem [shape: bf16[256,128], index: 7, kind: input, shape index: {}]
  %s8 = inlined_call_operand.vmem [shape: f32[1,128], index: 8, kind: input, shape index: {}]
  %s9 = inlined_call_operand.hbm [shape: f32[2,128], index: 9, kind: output, shape index: {}]
  %s10 = sld [smem:[#allocation0]]
  $region46: #{model_forward.13} parent=0
    _
  %s12 = ssub.s32 1, %s10
  %s13 = scalar_select 0, %s12, %s10
  $region1: #{model_forward.13} parent=0
    #allocation2 [shape = 'u8[1024]{0}', space=vmem, size = 0x400, scoped, tag = 'output window, operand 0, single buffered']
    #allocation3 [shape = 's32[1]{0}', space=sflag, size = 0x4, scoped, tag = 'scoped memory for model_forward.13']
    %14 = vsyncpa [#allocation3], 0
    // Predicated region
    $region2: #{model_forward.13} parent=1 // pred_check
      _
    $region3: #{model_forward.13} parent=1 // pred_check_branch
      %16 = sbr.rel (0) target = $region5
    $region4: #{model_forward.13} parent=1 // pred_region
      _
    $region5: #{model_forward.13} parent=1 // pred_fallthru
      _
    // Predicated region
    $region6: #{model_forward.13} parent=1 // pred_check
      _
    $region7: #{model_forward.13} parent=1 // pred_check_branch
      %18 = sbr.rel (0) target = $region9
    $region8: #{model_forward.13} parent=1 // pred_region
      _
    $region9: #{model_forward.13} parent=1 // pred_fallthru
      _
    // Predicated region
    $region10: #{model_forward.13} parent=1 // pred_check
      _
    $region11: #{model_forward.13} parent=1 // pred_check_branch
      %20 = sbr.rel (0) target = $region13
    $region12: #{model_forward.13} parent=1 // pred_region
      _
    $region13: #{model_forward.13} parent=1 // pred_fallthru
      _
    // Predicated region
    $region14: #{model_forward.13} parent=1 // pred_check
      _
    $region15: #{model_forward.13} parent=1 // pred_check_branch
      %22 = sbr.rel (0) target = $region17
    $region16: #{model_forward.13} parent=1 // pred_region
      _
    $region17: #{model_forward.13} parent=1 // pred_fallthru
      _
    // Predicated region
    $region18: #{model_forward.13} parent=1 // pred_check
      _
    $region19: #{model_forward.13} parent=1 // pred_check_branch
      %24 = sbr.rel (0) target = $region21
    $region20: #{model_forward.13} parent=1 // pred_region
      _
    $region21: #{model_forward.13} parent=1 // pred_fallthru
      _
    // Predicated region
    $region22: #{model_forward.13} parent=1 // pred_check
      _
    $region23: #{model_forward.13} parent=1 // pred_check_branch
      %26 = sbr.rel (0) target = $region25
    $region24: #{model_forward.13} parent=1 // pred_region
      _
    $region25: #{model_forward.13} parent=1 // pred_fallthru
      _
    // Predicated region
    $region26: #{model_forward.13} parent=1 // pred_check
      _
    $region27: #{model_forward.13} parent=1 // pred_check_branch
      %28 = sbr.rel (0) target = $region29
    $region28: #{model_forward.13} parent=1 // pred_region
      _
    $region29: #{model_forward.13} parent=1 // pred_fallthru
      _
    // Predicated region
    $region30: #{model_forward.13} parent=1 // pred_check
      _
    $region31: #{model_forward.13} parent=1 // pred_check_branch
      %30 = sbr.rel (0) target = $region33
    $region32: #{model_forward.13} parent=1 // pred_region
      _
    $region33: #{model_forward.13} parent=1 // pred_fallthru
      _
    // Predicated region
    $region34: #{model_forward.13} parent=1 // pred_check
      _
    $region35: #{model_forward.13} parent=1 // pred_check_branch
      %32 = sbr.rel (0) target = $region37
    $region36: #{model_forward.13} parent=1 // pred_region
      _
    $region37: #{model_forward.13} parent=1 // pred_fallthru
      _
    %v34 = vld [vmem:[%s0] sm:$0x3]
    %v35 = vpack.c.bf16 %v34, %v34
    %v36 = vld [vmem:[%s1] sm:$0xf]
    %v37 = vld [vmem:[%s1 + $0x4] sm:$0xf]
    %v38 = vld [vmem:[%s1 + $0x8] sm:$0xf]
    %v39 = vld [vmem:[%s1 + $0xc] sm:$0xf]
    %v40 = vld [vmem:[%s2] sm:$0x1]
    %v42 = vlaneseq
    %v43 = vshrl.u32 %v42, 7
    %v44 = vsub.s32 0, %v43
    %v45 = vrot.slane %v40, %v44
    %v51 = vunpack.c.l.b16 %v36
    %v52 = vunpack.c.l.b16 %v37
    %v53 = vunpack.c.l.b16 %v38
    %v54 = vunpack.c.l.b16 %v39
    %v55 = vpack.c.b16 %v52, %v51
    %v56 = vpack.c.b16 %v54, %v53
    %vm59 = vcmask 261120
    %v61 = vsel %vm59, %v35, 0
    %63 = vmatprep.subr.bf16.mxu0 0
    %64 = vmatpush1.bf16.msra.mxu0 0
    %65 = vmatprep.subr.bf16.mxu0 0
    %66 = vmatpush1.bf16.msra.mxu0 0
    %67 = vmatprep.subr.bf16.mxu0 0
    %68 = vmatpush1.bf16.msra.mxu0 0
    %69 = vmatprep.subr.bf16.mxu0 0
    %70 = vmatpush1.bf16.msra.mxu0 0
    %71 = vmatprep.subr.bf16.mxu0 0
    %72 = vmatpush1.bf16.msra.mxu0 0
    %73 = vmatprep.subr.bf16.mxu0 0
    %74 = vmatpush1.bf16.msra.mxu0 0
    %75 = vmatprep.subr.bf16.mxu0 0
    %76 = vmatpush1.bf16.msra.mxu0 %v56
    %77 = vmatprep.subr.bf16.mxu0 0
    %78 = vmatpush1.bf16.msra.mxu0 %v55
    %79 = vmatprep.subr.bf16.mxu0 0
    %80 = vmatpush2.bf16.msra.mxu0 0
    %81 = vmatprep.subr.bf16.mxu0 0
    %82 = vmatpush2.bf16.msra.mxu0 0
    %83 = vmatprep.subr.bf16.mxu0 0
    %84 = vmatpush2.bf16.msra.mxu0 0
    %85 = vmatprep.subr.bf16.mxu0 0
    %86 = vmatpush2.bf16.msra.mxu0 0
    %87 = vmatprep.subr.bf16.mxu0 0
    %88 = vmatpush2.bf16.msra.mxu0 0
    %89 = vmatprep.subr.bf16.mxu0 0
    %90 = vmatpush2.bf16.msra.mxu0 0
    %91 = vmatprep.subr.bf16.mxu0 0
    %92 = vmatpush2.bf16.msra.mxu0 0
    %93 = vmatprep.subr.bf16.mxu0 0
    %94 = vmatpush2.bf16.msra.mxu0 0
    %95 = vmatprep.mubr.bf16.mxu0 0
    %96 = vmatmul.mubr.bf16.gmra.mxu0 %v61
    %v97 = vpop.f32.mrf.mxu0
    %v98 = vadd.f32 %v45, %v97
    %v99 = vpop.f32.mrf.mxu0
    %v100 = vpop.f32.mrf.mxu0
    %v101 = vpop.f32.mrf.mxu0
    %102 = vdwg.mxu0
    %v103 = vtanh.pop %v98
    %v104 = vpack.c.bf16 %v103, %v103
    %v105 = vld [vmem:[%s3] sm:$0xff]
    %v106 = vld [vmem:[%s3 + $0x8] sm:$0xff]
    %v107 = vld [vmem:[%s3 + $0x10] sm:$0xff]
    %v108 = vld [vmem:[%s3 + $0x18] sm:$0xff]
    %v109 = vld [vmem:[%s3 + $0x20] sm:$0xff]
    %v110 = vld [vmem:[%s3 + $0x28] sm:$0xff]
    %v111 = vld [vmem:[%s3 + $0x30] sm:$0xff]
    %v112 = vld [vmem:[%s3 + $0x38] sm:$0xff]
    %v113 = vld [vmem:[%s4] sm:$0xf]
    %v115 = vlaneseq
    %v116 = vshrl.u32 %v115, 7
    %v117 = vsub.s32 0, %v116
    %v118 = vrot.slane %v113, %v117
    %v119 = vlaneseq
    %v120 = vshrl.u32 %v119, 7
    %v121 = vsub.s32 1, %v120
    %v122 = vrot.slane %v113, %v121
    %v123 = vlaneseq
    %v124 = vshrl.u32 %v123, 7
    %v125 = vsub.s32 2, %v124
    %v126 = vrot.slane %v113, %v125
    %v127 = vlaneseq
    %v128 = vshrl.u32 %v127, 7
    %v129 = vsub.s32 3, %v128
    %v130 = vrot.slane %v113, %v129
    %v143 = vunpack.c.l.b16 %v105
    %v144 = vunpack.c.h.b16 %v105
    %v145 = vunpack.c.l.b16 %v106
    %v146 = vunpack.c.h.b16 %v106
    %v147 = vunpack.c.l.b16 %v107
    %v148 = vunpack.c.h.b16 %v107
    %v149 = vunpack.c.l.b16 %v108
    %v150 = vunpack.c.h.b16 %v108
    %v151 = vunpack.c.l.b16 %v109
    %v152 = vunpack.c.h.b16 %v109
    %v153 = vunpack.c.l.b16 %v110
    %v154 = vunpack.c.h.b16 %v110
    %v155 = vunpack.c.l.b16 %v111
    %v156 = vunpack.c.h.b16 %v111
    %v157 = vunpack.c.l.b16 %v112
    %v158 = vunpack.c.h.b16 %v112
    %v159 = vpack.c.b16 %v147, %v143
    %v160 = vpack.c.b16 %v148, %v144
    %v161 = vpack.c.b16 %v149, %v145
    %v162 = vpack.c.b16 %v150, %v146
    %v163 = vpack.c.b16 %v155, %v151
    %v164 = vpack.c.b16 %v156, %v152
    %v165 = vpack.c.b16 %v157, %v153
    %v166 = vpack.c.b16 %v158, %v154
    %v176 = vsel %vm59, %v104, 0
    %178 = vmatprep.subr.bf16.mxu0 0
    %179 = vmatpush1.bf16.msra.mxu0 0
    %180 = vmatprep.subr.bf16.mxu0 0
    %181 = vmatpush1.bf16.msra.mxu0 0
    %182 = vmatprep.subr.bf16.mxu0 0
    %183 = vmatpush1.bf16.msra.mxu0 0
    %184 = vmatprep.subr.bf16.mxu0 0
    %185 = vmatpush1.bf16.msra.mxu0 0
    %186 = vmatprep.subr.bf16.mxu0 0
    %187 = vmatpush1.bf16.msra.mxu0 0
    %188 = vmatprep.subr.bf16.mxu0 0
    %189 = vmatpush1.bf16.msra.mxu0 0
    %190 = vmatprep.subr.bf16.mxu0 %v164
    %191 = vmatpush1.bf16.msra.mxu0 %v163
    %192 = vmatprep.subr.bf16.mxu0 %v160
    %193 = vmatpush1.bf16.msra.mxu0 %v159
    %194 = vmatprep.subr.bf16.mxu0 0
    %195 = vmatpush2.bf16.msra.mxu0 0
    %196 = vmatprep.subr.bf16.mxu0 0
    %197 = vmatpush2.bf16.msra.mxu0 0
    %198 = vmatprep.subr.bf16.mxu0 0
    %199 = vmatpush2.bf16.msra.mxu0 0
    %200 = vmatprep.subr.bf16.mxu0 0
    %201 = vmatpush2.bf16.msra.mxu0 0
    %202 = vmatprep.subr.bf16.mxu0 0
    %203 = vmatpush2.bf16.msra.mxu0 0
    %204 = vmatprep.subr.bf16.mxu0 0
    %205 = vmatpush2.bf16.msra.mxu0 0
    %206 = vmatprep.subr.bf16.mxu0 0
    %207 = vmatpush2.bf16.msra.mxu0 0
    %208 = vmatprep.subr.bf16.mxu0 0
    %209 = vmatpush2.bf16.msra.mxu0 0
    %210 = vmatprep.mubr.bf16.mxu0 0
    %211 = vmatmul.mubr.bf16.gmra.mxu0 %v176
    %v212 = vpop.f32.mrf.mxu0
    %v213 = vadd.f32 %v118, %v212
    %v214 = vpop.f32.mrf.mxu0
    %v215 = vadd.f32 %v122, %v214
    %v216 = vpop.f32.mrf.mxu0
    %v217 = vpop.f32.mrf.mxu0
    %218 = vdwg.mxu0
    %219 = vmatprep.subr.bf16.mxu0 0
    %220 = vmatpush1.bf16.msra.mxu0 0
    %221 = vmatprep.subr.bf16.mxu0 0
    %222 = vmatpush1.bf16.msra.mxu0 0
    %223 = vmatprep.subr.bf16.mxu0 0
    %224 = vmatpush1.bf16.msra.mxu0 0
    %225 = vmatprep.subr.bf16.mxu0 0
    %226 = vmatpush1.bf16.msra.mxu0 0
    %227 = vmatprep.subr.bf16.mxu0 0
    %228 = vmatpush1.bf16.msra.mxu0 0
    %229 = vmatprep.subr.bf16.mxu0 0
    %230 = vmatpush1.bf16.msra.mxu0 0
    %231 = vmatprep.subr.bf16.mxu0 %v166
    %232 = vmatpush1.bf16.msra.mxu0 %v165
    %233 = vmatprep.subr.bf16.mxu0 %v162
    %234 = vmatpush1.bf16.msra.mxu0 %v161
    %235 = vmatprep.subr.bf16.mxu0 0
    %236 = vmatpush2.bf16.msra.mxu0 0
    %237 = vmatprep.subr.bf16.mxu0 0
    %238 = vmatpush2.bf16.msra.mxu0 0
    %239 = vmatprep.subr.bf16.mxu0 0
    %240 = vmatpush2.bf16.msra.mxu0 0
    %241 = vmatprep.subr.bf16.mxu0 0
    %242 = vmatpush2.bf16.msra.mxu0 0
    %243 = vmatprep.subr.bf16.mxu0 0
    %244 = vmatpush2.bf16.msra.mxu0 0
    %245 = vmatprep.subr.bf16.mxu0 0
    %246 = vmatpush2.bf16.msra.mxu0 0
    %247 = vmatprep.subr.bf16.mxu0 0
    %248 = vmatpush2.bf16.msra.mxu0 0
    %249 = vmatprep.subr.bf16.mxu0 0
    %250 = vmatpush2.bf16.msra.mxu0 0
    %251 = vmatprep.mubr.bf16.mxu0 0
    %252 = vmatmul.mubr.bf16.gmra.mxu0 %v176
    %v253 = vpop.f32.mrf.mxu0
    %v254 = vadd.f32 %v126, %v253
    %v255 = vpop.f32.mrf.mxu0
    %v256 = vadd.f32 %v130, %v255
    %v257 = vpop.f32.mrf.mxu0
    %v258 = vpop.f32.mrf.mxu0
    %259 = vdwg.mxu0
    %v260 = vpack.c.bf16 %v213, %v213
    %v261 = vpack.c.bf16 %v215, %v215
    %v262 = vpack.c.bf16 %v254, %v254
    %v263 = vpack.c.bf16 %v256, %v256
    %v264 = vld [vmem:[%s5] sm:$0xff]
    %v265 = vld [vmem:[%s5 + $0x8] sm:$0xff]
    %v266 = vld [vmem:[%s5 + $0x10] sm:$0xff]
    %v267 = vld [vmem:[%s5 + $0x18] sm:$0xff]
    %v268 = vld [vmem:[%s5 + $0x20] sm:$0xff]
    %v269 = vld [vmem:[%s5 + $0x28] sm:$0xff]
    %v270 = vld [vmem:[%s5 + $0x30] sm:$0xff]
    %v271 = vld [vmem:[%s5 + $0x38] sm:$0xff]
    %v272 = vld [vmem:[%s5 + $0x40] sm:$0xff]
    %v273 = vld [vmem:[%s5 + $0x48] sm:$0xff]
    %v274 = vld [vmem:[%s5 + $0x50] sm:$0xff]
    %v275 = vld [vmem:[%s5 + $0x58] sm:$0xff]
    %v276 = vld [vmem:[%s5 + $0x60] sm:$0xff]
    %v277 = vld [vmem:[%s5 + $0x68] sm:$0xff]
    %v278 = vld [vmem:[%s5 + $0x70] sm:$0xff]
    %v279 = vld [vmem:[%s5 + $0x78] sm:$0xff]
    %v280 = vld [vmem:[%s5 + $0x80] sm:$0xff]
    %v281 = vld [vmem:[%s5 + $0x88] sm:$0xff]
    %v282 = vld [vmem:[%s5 + $0x90] sm:$0xff]
    %v283 = vld [vmem:[%s5 + $0x98] sm:$0xff]
    %v284 = vld [vmem:[%s5 + $0xa0] sm:$0xff]
    %v285 = vld [vmem:[%s5 + $0xa8] sm:$0xff]
    %v286 = vld [vmem:[%s5 + $0xb0] sm:$0xff]
    %v287 = vld [vmem:[%s5 + $0xb8] sm:$0xff]
    %v288 = vld [vmem:[%s5 + $0xc0] sm:$0xff]
    %v289 = vld [vmem:[%s5 + $0xc8] sm:$0xff]
    %v290 = vld [vmem:[%s5 + $0xd0] sm:$0xff]
    %v291 = vld [vmem:[%s5 + $0xd8] sm:$0xff]
    %v292 = vld [vmem:[%s5 + $0xe0] sm:$0xff]
    %v293 = vld [vmem:[%s5 + $0xe8] sm:$0xff]
    %v294 = vld [vmem:[%s5 + $0xf0] sm:$0xff]
    %v295 = vld [vmem:[%s5 + $0xf8] sm:$0xff]
    %v296 = vld [vmem:[%s5 + $0x100] sm:$0xff]
    %v297 = vld [vmem:[%s5 + $0x108] sm:$0xff]
    %v298 = vld [vmem:[%s5 + $0x110] sm:$0xff]
    %v299 = vld [vmem:[%s5 + $0x118] sm:$0xff]
    %v300 = vld [vmem:[%s5 + $0x120] sm:$0xff]
    %v301 = vld [vmem:[%s5 + $0x128] sm:$0xff]
    %v302 = vld [vmem:[%s5 + $0x130] sm:$0xff]
    %v303 = vld [vmem:[%s5 + $0x138] sm:$0xff]
    %v304 = vld [vmem:[%s5 + $0x140] sm:$0xff]
    %v305 = vld [vmem:[%s5 + $0x148] sm:$0xff]
    %v306 = vld [vmem:[%s5 + $0x150] sm:$0xff]
    %v307 = vld [vmem:[%s5 + $0x158] sm:$0xff]
    %v308 = vld [vmem:[%s5 + $0x160] sm:$0xff]
    %v309 = vld [vmem:[%s5 + $0x168] sm:$0xff]
    %v310 = vld [vmem:[%s5 + $0x170] sm:$0xff]
    %v311 = vld [vmem:[%s5 + $0x178] sm:$0xff]
    %v312 = vld [vmem:[%s5 + $0x180] sm:$0xff]
    %v313 = vld [vmem:[%s5 + $0x188] sm:$0xff]
    %v314 = vld [vmem:[%s5 + $0x190] sm:$0xff]
    %v315 = vld [vmem:[%s5 + $0x198] sm:$0xff]
    %v316 = vld [vmem:[%s5 + $0x1a0] sm:$0xff]
    %v317 = vld [vmem:[%s5 + $0x1a8] sm:$0xff]
    %v318 = vld [vmem:[%s5 + $0x1b0] sm:$0xff]
    %v319 = vld [vmem:[%s5 + $0x1b8] sm:$0xff]
    %v320 = vld [vmem:[%s5 + $0x1c0] sm:$0xff]
    %v321 = vld [vmem:[%s5 + $0x1c8] sm:$0xff]
    %v322 = vld [vmem:[%s5 + $0x1d0] sm:$0xff]
    %v323 = vld [vmem:[%s5 + $0x1d8] sm:$0xff]
    %v324 = vld [vmem:[%s5 + $0x1e0] sm:$0xff]
    %v325 = vld [vmem:[%s5 + $0x1e8] sm:$0xff]
    %v326 = vld [vmem:[%s5 + $0x1f0] sm:$0xff]
    %v327 = vld [vmem:[%s5 + $0x1f8] sm:$0xff]
    %v328 = vld [vmem:[%s6] sm:$0x3]
    %v330 = vlaneseq
    %v331 = vshrl.u32 %v330, 7
    %v332 = vsub.s32 0, %v331
    %v333 = vrot.slane %v328, %v332
    %v334 = vlaneseq
    %v335 = vshrl.u32 %v334, 7
    %v336 = vsub.s32 1, %v335
    %v337 = vrot.slane %v328, %v336
    %v404 = vunpack.c.l.b16 %v264
    %v405 = vunpack.c.h.b16 %v264
    %v406 = vunpack.c.l.b16 %v265
    %v407 = vunpack.c.h.b16 %v265
    %v408 = vunpack.c.l.b16 %v266
    %v409 = vunpack.c.h.b16 %v266
    %v410 = vunpack.c.l.b16 %v267
    %v411 = vunpack.c.h.b16 %v267
    %v412 = vunpack.c.l.b16 %v268
    %v413 = vunpack.c.h.b16 %v268
    %v414 = vunpack.c.l.b16 %v269
    %v415 = vunpack.c.h.b16 %v269
    %v416 = vunpack.c.l.b16 %v270
    %v417 = vunpack.c.h.b16 %v270
    %v418 = vunpack.c.l.b16 %v271
    %v419 = vunpack.c.h.b16 %v271
    %v420 = vunpack.c.l.b16 %v272
    %v421 = vunpack.c.h.b16 %v272
    %v422 = vunpack.c.l.b16 %v273
    %v423 = vunpack.c.h.b16 %v273
    %v424 = vunpack.c.l.b16 %v274
    %v425 = vunpack.c.h.b16 %v274
    %v426 = vunpack.c.l.b16 %v275
    %v427 = vunpack.c.h.b16 %v275
    %v428 = vunpack.c.l.b16 %v276
    %v429 = vunpack.c.h.b16 %v276
    %v430 = vunpack.c.l.b16 %v277
    %v431 = vunpack.c.h.b16 %v277
    %v432 = vunpack.c.l.b16 %v278
    %v433 = vunpack.c.h.b16 %v278
    %v434 = vunpack.c.l.b16 %v279
    %v435 = vunpack.c.h.b16 %v279
    %v436 = vunpack.c.l.b16 %v280
    %v437 = vunpack.c.h.b16 %v280
    %v438 = vunpack.c.l.b16 %v281
    %v439 = vunpack.c.h.b16 %v281
    %v440 = vunpack.c.l.b16 %v282
    %v441 = vunpack.c.h.b16 %v282
    %v442 = vunpack.c.l.b16 %v283
    %v443 = vunpack.c.h.b16 %v283
    %v444 = vunpack.c.l.b16 %v284
    %v445 = vunpack.c.h.b16 %v284
    %v446 = vunpack.c.l.b16 %v285
    %v447 = vunpack.c.h.b16 %v285
    %v448 = vunpack.c.l.b16 %v286
    %v449 = vunpack.c.h.b16 %v286
    %v450 = vunpack.c.l.b16 %v287
    %v451 = vunpack.c.h.b16 %v287
    %v452 = vunpack.c.l.b16 %v288
    %v453 = vunpack.c.h.b16 %v288
    %v454 = vunpack.c.l.b16 %v289
    %v455 = vunpack.c.h.b16 %v289
    %v456 = vunpack.c.l.b16 %v290
    %v457 = vunpack.c.h.b16 %v290
    %v458 = vunpack.c.l.b16 %v291
    %v459 = vunpack.c.h.b16 %v291
    %v460 = vunpack.c.l.b16 %v292
    %v461 = vunpack.c.h.b16 %v292
    %v462 = vunpack.c.l.b16 %v293
    %v463 = vunpack.c.h.b16 %v293
    %v464 = vunpack.c.l.b16 %v294
    %v465 = vunpack.c.h.b16 %v294
    %v466 = vunpack.c.l.b16 %v295
    %v467 = vunpack.c.h.b16 %v295
    %v468 = vunpack.c.l.b16 %v296
    %v469 = vunpack.c.h.b16 %v296
    %v470 = vunpack.c.l.b16 %v297
    %v471 = vunpack.c.h.b16 %v297
    %v472 = vunpack.c.l.b16 %v298
    %v473 = vunpack.c.h.b16 %v298
    %v474 = vunpack.c.l.b16 %v299
    %v475 = vunpack.c.h.b16 %v299
    %v476 = vunpack.c.l.b16 %v300
    %v477 = vunpack.c.h.b16 %v300
    %v478 = vunpack.c.l.b16 %v301
    %v479 = vunpack.c.h.b16 %v301
    %v480 = vunpack.c.l.b16 %v302
    %v481 = vunpack.c.h.b16 %v302
    %v482 = vunpack.c.l.b16 %v303
    %v483 = vunpack.c.h.b16 %v303
    %v484 = vunpack.c.l.b16 %v304
    %v485 = vunpack.c.h.b16 %v304
    %v486 = vunpack.c.l.b16 %v305
    %v487 = vunpack.c.h.b16 %v305
    %v488 = vunpack.c.l.b16 %v306
    %v489 = vunpack.c.h.b16 %v306
    %v490 = vunpack.c.l.b16 %v307
    %v491 = vunpack.c.h.b16 %v307
    %v492 = vunpack.c.l.b16 %v308
    %v493 = vunpack.c.h.b16 %v308
    %v494 = vunpack.c.l.b16 %v309
    %v495 = vunpack.c.h.b16 %v309
    %v496 = vunpack.c.l.b16 %v310
    %v497 = vunpack.c.h.b16 %v310
    %v498 = vunpack.c.l.b16 %v311
    %v499 = vunpack.c.h.b16 %v311
    %v500 = vunpack.c.l.b16 %v312
    %v501 = vunpack.c.h.b16 %v312
    %v502 = vunpack.c.l.b16 %v313
    %v503 = vunpack.c.h.b16 %v313
    %v504 = vunpack.c.l.b16 %v314
    %v505 = vunpack.c.h.b16 %v314
    %v506 = vunpack.c.l.b16 %v315
    %v507 = vunpack.c.h.b16 %v315
    %v508 = vunpack.c.l.b16 %v316
    %v509 = vunpack.c.h.b16 %v316
    %v510 = vunpack.c.l.b16 %v317
    %v511 = vunpack.c.h.b16 %v317
    %v512 = vunpack.c.l.b16 %v318
    %v513 = vunpack.c.h.b16 %v318
    %v514 = vunpack.c.l.b16 %v319
    %v515 = vunpack.c.h.b16 %v319
    %v516 = vunpack.c.l.b16 %v320
    %v517 = vunpack.c.h.b16 %v320
    %v518 = vunpack.c.l.b16 %v321
    %v519 = vunpack.c.h.b16 %v321
    %v520 = vunpack.c.l.b16 %v322
    %v521 = vunpack.c.h.b16 %v322
    %v522 = vunpack.c.l.b16 %v323
    %v523 = vunpack.c.h.b16 %v323
    %v524 = vunpack.c.l.b16 %v324
    %v525 = vunpack.c.h.b16 %v324
    %v526 = vunpack.c.l.b16 %v325
    %v527 = vunpack.c.h.b16 %v325
    %v528 = vunpack.c.l.b16 %v326
    %v529 = vunpack.c.h.b16 %v326
    %v530 = vunpack.c.l.b16 %v327
    %v531 = vunpack.c.h.b16 %v327
    %v532 = vpack.c.b16 %v406, %v404
    %v533 = vpack.c.b16 %v407, %v405
    %v534 = vpack.c.b16 %v410, %v408
    %v535 = vpack.c.b16 %v411, %v409
    %v536 = vpack.c.b16 %v414, %v412
    %v537 = vpack.c.b16 %v415, %v413
    %v538 = vpack.c.b16 %v418, %v416
    %v539 = vpack.c.b16 %v419, %v417
    %v540 = vpack.c.b16 %v422, %v420
    %v541 = vpack.c.b16 %v423, %v421
    %v542 = vpack.c.b16 %v426, %v424
    %v543 = vpack.c.b16 %v427, %v425
    %v544 = vpack.c.b16 %v430, %v428
    %v545 = vpack.c.b16 %v431, %v429
    %v546 = vpack.c.b16 %v434, %v432
    %v547 = vpack.c.b16 %v435, %v433
    %v548 = vpack.c.b16 %v438, %v436
    %v549 = vpack.c.b16 %v439, %v437
    %v550 = vpack.c.b16 %v442, %v440
    %v551 = vpack.c.b16 %v443, %v441
    %v552 = vpack.c.b16 %v446, %v444
    %v553 = vpack.c.b16 %v447, %v445
    %v554 = vpack.c.b16 %v450, %v448
    %v555 = vpack.c.b16 %v451, %v449
    %v556 = vpack.c.b16 %v454, %v452
    %v557 = vpack.c.b16 %v455, %v453
    %v558 = vpack.c.b16 %v458, %v456
    %v559 = vpack.c.b16 %v459, %v457
    %v560 = vpack.c.b16 %v462, %v460
    %v561 = vpack.c.b16 %v463, %v461
    %v562 = vpack.c.b16 %v466, %v464
    %v563 = vpack.c.b16 %v467, %v465
    %v564 = vpack.c.b16 %v470, %v468
    %v565 = vpack.c.b16 %v471, %v469
    %v566 = vpack.c.b16 %v474, %v472
    %v567 = vpack.c.b16 %v475, %v473
    %v568 = vpack.c.b16 %v478, %v476
    %v569 = vpack.c.b16 %v479, %v477
    %v570 = vpack.c.b16 %v482, %v480
    %v571 = vpack.c.b16 %v483, %v481
    %v572 = vpack.c.b16 %v486, %v484
    %v573 = vpack.c.b16 %v487, %v485
    %v574 = vpack.c.b16 %v490, %v488
    %v575 = vpack.c.b16 %v491, %v489
    %v576 = vpack.c.b16 %v494, %v492
    %v577 = vpack.c.b16 %v495, %v493
    %v578 = vpack.c.b16 %v498, %v496
    %v579 = vpack.c.b16 %v499, %v497
    %v580 = vpack.c.b16 %v502, %v500
    %v581 = vpack.c.b16 %v503, %v501
    %v582 = vpack.c.b16 %v506, %v504
    %v583 = vpack.c.b16 %v507, %v505
    %v584 = vpack.c.b16 %v510, %v508
    %v585 = vpack.c.b16 %v511, %v509
    %v586 = vpack.c.b16 %v514, %v512
    %v587 = vpack.c.b16 %v515, %v513
    %v588 = vpack.c.b16 %v518, %v516
    %v589 = vpack.c.b16 %v519, %v517
    %v590 = vpack.c.b16 %v522, %v520
    %v591 = vpack.c.b16 %v523, %v521
    %v592 = vpack.c.b16 %v526, %v524
    %v593 = vpack.c.b16 %v527, %v525
    %v594 = vpack.c.b16 %v530, %v528
    %v595 = vpack.c.b16 %v531, %v529
    %660 = vmatprep.subr.bf16.mxu0 %v547
    %661 = vmatpush1.bf16.msra.mxu0 %v546
    %662 = vmatprep.subr.bf16.mxu0 %v545
    %663 = vmatpush1.bf16.msra.mxu0 %v544
    %664 = vmatprep.subr.bf16.mxu0 %v543
    %665 = vmatpush1.bf16.msra.mxu0 %v542
    %666 = vmatprep.subr.bf16.mxu0 %v541
    %667 = vmatpush1.bf16.msra.mxu0 %v540
    %668 = vmatprep.subr.bf16.mxu0 %v539
    %669 = vmatpush1.bf16.msra.mxu0 %v538
    %670 = vmatprep.subr.bf16.mxu0 %v537
    %671 = vmatpush1.bf16.msra.mxu0 %v536
    %672 = vmatprep.subr.bf16.mxu0 %v535
    %673 = vmatpush1.bf16.msra.mxu0 %v534
    %674 = vmatprep.subr.bf16.mxu0 %v533
    %675 = vmatpush1.bf16.msra.mxu0 %v532
    %676 = vmatprep.subr.bf16.mxu0 %v563
    %677 = vmatpush2.bf16.msra.mxu0 %v562
    %678 = vmatprep.subr.bf16.mxu0 %v561
    %679 = vmatpush2.bf16.msra.mxu0 %v560
    %680 = vmatprep.subr.bf16.mxu0 %v559
    %681 = vmatpush2.bf16.msra.mxu0 %v558
    %682 = vmatprep.subr.bf16.mxu0 %v557
    %683 = vmatpush2.bf16.msra.mxu0 %v556
    %684 = vmatprep.subr.bf16.mxu0 %v555
    %685 = vmatpush2.bf16.msra.mxu0 %v554
    %686 = vmatprep.subr.bf16.mxu0 %v553
    %687 = vmatpush2.bf16.msra.mxu0 %v552
    %688 = vmatprep.subr.bf16.mxu0 %v551
    %689 = vmatpush2.bf16.msra.mxu0 %v550
    %690 = vmatprep.subr.bf16.mxu0 %v549
    %691 = vmatpush2.bf16.msra.mxu0 %v548
    %692 = vmatprep.mubr.bf16.mxu0 %v261
    %693 = vmatmul.mubr.bf16.gmra.mxu0 %v260
    %v694 = vpop.f32.mrf.mxu0
    %v695 = vadd.f32 %v333, %v694
    %v696 = vpop.f32.mrf.mxu0
    %v697 = vadd.f32 %v337, %v696
    %v698 = vpop.f32.mrf.mxu0
    %v699 = vpop.f32.mrf.mxu0
    %700 = vdwg.mxu0
    %701 = vmatprep.subr.bf16.mxu0 %v579
    %702 = vmatpush1.bf16.msra.mxu0 %v578
    %703 = vmatprep.subr.bf16.mxu0 %v577
    %704 = vmatpush1.bf16.msra.mxu0 %v576
    %705 = vmatprep.subr.bf16.mxu0 %v575
    %706 = vmatpush1.bf16.msra.mxu0 %v574
    %707 = vmatprep.subr.bf16.mxu0 %v573
    %708 = vmatpush1.bf16.msra.mxu0 %v572
    %709 = vmatprep.subr.bf16.mxu0 %v571
    %710 = vmatpush1.bf16.msra.mxu0 %v570
    %711 = vmatprep.subr.bf16.mxu0 %v569
    %712 = vmatpush1.bf16.msra.mxu0 %v568
    %713 = vmatprep.subr.bf16.mxu0 %v567
    %714 = vmatpush1.bf16.msra.mxu0 %v566
    %715 = vmatprep.subr.bf16.mxu0 %v565
    %716 = vmatpush1.bf16.msra.mxu0 %v564
    %717 = vmatprep.subr.bf16.mxu0 %v595
    %718 = vmatpush2.bf16.msra.mxu0 %v594
    %719 = vmatprep.subr.bf16.mxu0 %v593
    %720 = vmatpush2.bf16.msra.mxu0 %v592
    %721 = vmatprep.subr.bf16.mxu0 %v591
    %722 = vmatpush2.bf16.msra.mxu0 %v590
    %723 = vmatprep.subr.bf16.mxu0 %v589
    %724 = vmatpush2.bf16.msra.mxu0 %v588
    %725 = vmatprep.subr.bf16.mxu0 %v587
    %726 = vmatpush2.bf16.msra.mxu0 %v586
    %727 = vmatprep.subr.bf16.mxu0 %v585
    %728 = vmatpush2.bf16.msra.mxu0 %v584
    %729 = vmatprep.subr.bf16.mxu0 %v583
    %730 = vmatpush2.bf16.msra.mxu0 %v582
    %731 = vmatprep.subr.bf16.mxu0 %v581
    %732 = vmatpush2.bf16.msra.mxu0 %v580
    %733 = vmatprep.mubr.bf16.mxu0 %v263
    %734 = vmatmul.mubr.bf16.gmra.mxu0 %v262
    %v735 = vpop.f32.mrf.mxu0
    %v736 = vadd.f32 %v695, %v735
    %v737 = vpop.f32.mrf.mxu0
    %v738 = vadd.f32 %v697, %v737
    %v739 = vpop.f32.mrf.mxu0
    %v740 = vpop.f32.mrf.mxu0
    %741 = vdwg.mxu0
    %v742 = vpack.c.bf16 %v736, %v736
    %v743 = vpack.c.bf16 %v738, %v738
    %v744 = vld [vmem:[%s7] sm:$0xf]
    %v745 = vld [vmem:[%s7 + $0x4] sm:$0xf]
    %v746 = vld [vmem:[%s7 + $0x8] sm:$0xf]
    %v747 = vld [vmem:[%s7 + $0xc] sm:$0xf]
    %v748 = vld [vmem:[%s7 + $0x10] sm:$0xf]
    %v749 = vld [vmem:[%s7 + $0x14] sm:$0xf]
    %v750 = vld [vmem:[%s7 + $0x18] sm:$0xf]
    %v751 = vld [vmem:[%s7 + $0x1c] sm:$0xf]
    %v752 = vld [vmem:[%s7 + $0x20] sm:$0xf]
    %v753 = vld [vmem:[%s7 + $0x24] sm:$0xf]
    %v754 = vld [vmem:[%s7 + $0x28] sm:$0xf]
    %v755 = vld [vmem:[%s7 + $0x2c] sm:$0xf]
    %v756 = vld [vmem:[%s7 + $0x30] sm:$0xf]
    %v757 = vld [vmem:[%s7 + $0x34] sm:$0xf]
    %v758 = vld [vmem:[%s7 + $0x38] sm:$0xf]
    %v759 = vld [vmem:[%s7 + $0x3c] sm:$0xf]
    %v760 = vld [vmem:[%s7 + $0x40] sm:$0xf]
    %v761 = vld [vmem:[%s7 + $0x44] sm:$0xf]
    %v762 = vld [vmem:[%s7 + $0x48] sm:$0xf]
    %v763 = vld [vmem:[%s7 + $0x4c] sm:$0xf]
    %v764 = vld [vmem:[%s7 + $0x50] sm:$0xf]
    %v765 = vld [vmem:[%s7 + $0x54] sm:$0xf]
    %v766 = vld [vmem:[%s7 + $0x58] sm:$0xf]
    %v767 = vld [vmem:[%s7 + $0x5c] sm:$0xf]
    %v768 = vld [vmem:[%s7 + $0x60] sm:$0xf]
    %v769 = vld [vmem:[%s7 + $0x64] sm:$0xf]
    %v770 = vld [vmem:[%s7 + $0x68] sm:$0xf]
    %v771 = vld [vmem:[%s7 + $0x6c] sm:$0xf]
    %v772 = vld [vmem:[%s7 + $0x70] sm:$0xf]
    %v773 = vld [vmem:[%s7 + $0x74] sm:$0xf]
    %v774 = vld [vmem:[%s7 + $0x78] sm:$0xf]
    %v775 = vld [vmem:[%s7 + $0x7c] sm:$0xf]
    %v776 = vld [vmem:[%s8] sm:$0x1]
    %v778 = vlaneseq
    %v779 = vshrl.u32 %v778, 7
    %v780 = vsub.s32 0, %v779
    %v781 = vrot.slane %v776, %v780
    %v815 = vunpack.c.l.b16 %v744
    %v816 = vunpack.c.l.b16 %v745
    %v817 = vunpack.c.l.b16 %v746
    %v818 = vunpack.c.l.b16 %v747
    %v819 = vunpack.c.l.b16 %v748
    %v820 = vunpack.c.l.b16 %v749
    %v821 = vunpack.c.l.b16 %v750
    %v822 = vunpack.c.l.b16 %v751
    %v823 = vunpack.c.l.b16 %v752
    %v824 = vunpack.c.l.b16 %v753
    %v825 = vunpack.c.l.b16 %v754
    %v826 = vunpack.c.l.b16 %v755
    %v827 = vunpack.c.l.b16 %v756
    %v828 = vunpack.c.l.b16 %v757
    %v829 = vunpack.c.l.b16 %v758
    %v830 = vunpack.c.l.b16 %v759
    %v831 = vunpack.c.l.b16 %v760
    %v832 = vunpack.c.l.b16 %v761
    %v833 = vunpack.c.l.b16 %v762
    %v834 = vunpack.c.l.b16 %v763
    %v835 = vunpack.c.l.b16 %v764
    %v836 = vunpack.c.l.b16 %v765
    %v837 = vunpack.c.l.b16 %v766
    %v838 = vunpack.c.l.b16 %v767
    %v839 = vunpack.c.l.b16 %v768
    %v840 = vunpack.c.l.b16 %v769
    %v841 = vunpack.c.l.b16 %v770
    %v842 = vunpack.c.l.b16 %v771
    %v843 = vunpack.c.l.b16 %v772
    %v844 = vunpack.c.l.b16 %v773
    %v845 = vunpack.c.l.b16 %v774
    %v846 = vunpack.c.l.b16 %v775
    %v847 = vpack.c.b16 %v816, %v815
    %v848 = vpack.c.b16 %v818, %v817
    %v849 = vpack.c.b16 %v820, %v819
    %v850 = vpack.c.b16 %v822, %v821
    %v851 = vpack.c.b16 %v824, %v823
    %v852 = vpack.c.b16 %v826, %v825
    %v853 = vpack.c.b16 %v828, %v827
    %v854 = vpack.c.b16 %v830, %v829
    %v855 = vpack.c.b16 %v832, %v831
    %v856 = vpack.c.b16 %v834, %v833
    %v857 = vpack.c.b16 %v836, %v835
    %v858 = vpack.c.b16 %v838, %v837
    %v859 = vpack.c.b16 %v840, %v839
    %v860 = vpack.c.b16 %v842, %v841
    %v861 = vpack.c.b16 %v844, %v843
    %v862 = vpack.c.b16 %v846, %v845
    %879 = vmatprep.subr.bf16.mxu0 0
    %880 = vmatpush1.bf16.msra.mxu0 %v854
    %881 = vmatprep.subr.bf16.mxu0 0
    %882 = vmatpush1.bf16.msra.mxu0 %v853
    %883 = vmatprep.subr.bf16.mxu0 0
    %884 = vmatpush1.bf16.msra.mxu0 %v852
    %885 = vmatprep.subr.bf16.mxu0 0
    %886 = vmatpush1.bf16.msra.mxu0 %v851
    %887 = vmatprep.subr.bf16.mxu0 0
    %888 = vmatpush1.bf16.msra.mxu0 %v850
    %889 = vmatprep.subr.bf16.mxu0 0
    %890 = vmatpush1.bf16.msra.mxu0 %v849
    %891 = vmatprep.subr.bf16.mxu0 0
    %892 = vmatpush1.bf16.msra.mxu0 %v848
    %893 = vmatprep.subr.bf16.mxu0 0
    %894 = vmatpush1.bf16.msra.mxu0 %v847
    %895 = vmatprep.subr.bf16.mxu0 0
    %896 = vmatpush2.bf16.msra.mxu0 %v862
    %897 = vmatprep.subr.bf16.mxu0 0
    %898 = vmatpush2.bf16.msra.mxu0 %v861
    %899 = vmatprep.subr.bf16.mxu0 0
    %900 = vmatpush2.bf16.msra.mxu0 %v860
    %901 = vmatprep.subr.bf16.mxu0 0
    %902 = vmatpush2.bf16.msra.mxu0 %v859
    %903 = vmatprep.subr.bf16.mxu0 0
    %904 = vmatpush2.bf16.msra.mxu0 %v858
    %905 = vmatprep.subr.bf16.mxu0 0
    %906 = vmatpush2.bf16.msra.mxu0 %v857
    %907 = vmatprep.subr.bf16.mxu0 0
    %908 = vmatpush2.bf16.msra.mxu0 %v856
    %909 = vmatprep.subr.bf16.mxu0 0
    %910 = vmatpush2.bf16.msra.mxu0 %v855
    %911 = vmatprep.mubr.bf16.mxu0 %v743
    %912 = vmatmul.mubr.bf16.gmra.mxu0 %v742
    %v913 = vpop.f32.mrf.mxu0
    %v914 = vadd.f32 %v781, %v913
    %v915 = vpop.f32.mrf.mxu0
    %v916 = vpop.f32.mrf.mxu0
    %v917 = vpop.f32.mrf.mxu0
    %918 = vdwg.mxu0
    %919 = vst [vmem:[#allocation2] sm:$0x3] %v914
    // Predicated region
    $region38: #{model_forward.13} parent=1 // pred_check
      _
    $region39: #{model_forward.13} parent=1 // pred_check_branch
      %921 = sbr.rel (0) target = $region41
    $region40: #{model_forward.13} parent=1 // pred_region
      %s923 = ssub.s32 32, 32
      %924 = vsyncadd [#allocation3], %s923
      %s926 = sshll.u32 [#allocation2], 4
      %s927 = int_to_ptr.vmem [resolvable:$true] %s926
      %929 = dma.vmem_to_hbm [thread:$0]  %s927, 32, %s9, [#allocation3]
    $region41: #{model_forward.13} parent=1 // pred_fallthru
      _
    // Predicated region
    $region42: #{model_forward.13} parent=1 // pred_check
      _
    $region43: #{model_forward.13} parent=1 // pred_check_branch
      %931 = sbr.rel (0) target = $region45
    $region44: #{model_forward.13} parent=1 // pred_region
      %932 = dma.done [#allocation3], 32
    $region45: #{model_forward.13} parent=1 // pred_fallthru
      _
    %933 = vsyncpa [#allocation3], 1

</llo_original>
